<compile_context>
chip_gen: v5e
topology: v5e:2x2
jax: 0.10.0
libtpu: 0.0.40
codegen_flags: <defaults>
</compile_context>

<pallas_src>
import functools
import math

import jax
import jax.numpy as jnp
from jax.experimental import pallas as pl
from jax.experimental.pallas import tpu as pltpu


# ----------------------------------------------------------------------------
# Fused kernel: LN1 -> +PE -> MHSA -> +res -> LN2 -> +outer res -> conv-FFN.
# One grid step per batch element; activations live as (C, T) / (Hc, T) tiles.
# ----------------------------------------------------------------------------
def _global_attention_kernel(x_ref, pe_ref, ln1_w_ref, ln1_b_ref,
                             wqkv_ref, bqkv_ref, wo_ref, bo_ref,
                             ln2_w_ref, ln2_b_ref,
                             w1_ref, wd_ref, bd_ref, w2_ref,
                             o_ref, *, n_head, kernel_size, eps):
    x_ct = x_ref[0]                                   # (C, T) f32, channels on sublanes
    C, T = x_ct.shape
    H = n_head
    d = C // H

    # ---- LayerNorm 1 (over channels = sublane axis) --------------------------
    mu = jnp.mean(x_ct, axis=0, keepdims=True)
    var = jnp.mean((x_ct - mu) ** 2, axis=0, keepdims=True)
    xn = (x_ct - mu) * jax.lax.rsqrt(var + eps)
    xn = xn * ln1_w_ref[...] + ln1_b_ref[...]         # (C,1) params broadcast over T

    # ---- positional encoding --------------------------------------------------
    xp = xn + pe_ref[...]                             # (C, T)

    # ---- fused QKV projection: one canonical bf16 matmul ---------------------
    qkv = jnp.dot(wqkv_ref[...], xp.astype(jnp.bfloat16),
                  preferred_element_type=jnp.float32) + bqkv_ref[...]   # (3C, T)

    # ---- head split along sublanes (multiples of 8 -> free) ------------------
    def heads(base):
        return jnp.stack([qkv[base + h * d: base + (h + 1) * d] for h in range(H)])
    q = heads(0) * (1.0 / math.sqrt(d))               # (H, d, T)
    k = heads(C)                                      # (H, d, T)
    v = heads(2 * C)                                  # (H, d, T)

    # ---- batched attention over heads ----------------------------------------
    s = jnp.einsum('hdt,hds->hts', q, k,
                   preferred_element_type=jnp.float32)        # (H, T, T)
    s = s - jnp.max(s, axis=-1, keepdims=True)
    p = jnp.exp(s)
    p = p * pl.reciprocal(jnp.sum(p, axis=-1, keepdims=True), approx=True)
    o_hdt = jnp.einsum('hds,hts->hdt', v, p,
                       preferred_element_type=jnp.float32)    # (H, d, T)
    att = jnp.concatenate([o_hdt[h] for h in range(H)], axis=0)  # (C, T)

    # ---- output projection (hoisted: single full-contraction matmul) ---------
    out = jnp.dot(wo_ref[...], att.astype(jnp.bfloat16),
                  preferred_element_type=jnp.float32) + bo_ref[...]     # (C, T)
    x2 = out + xp                                     # dropout == identity (eval)

    # ---- LayerNorm 2 + outer residual -----------------------------------------
    mu2 = jnp.mean(x2, axis=0, keepdims=True)
    var2 = jnp.mean((x2 - mu2) ** 2, axis=0, keepdims=True)
    y = (x2 - mu2) * jax.lax.rsqrt(var2 + eps)
    y = y * ln2_w_ref[...] + ln2_b_ref[...]
    y = y + x_ct                                      # DropPath == identity (eval)

    # ---- FFN: 1x1 conv -> ReLU -> depthwise conv(k, same) -> ReLU -> 1x1 conv
    # TODO(synk): FeedForwardNetwork comes from a conv_layers registry that is
    #             not in the reference source; this is the standard RTFS/TDANet
    #             conv-FFN with eval-mode dropout.
    hid = jnp.maximum(jnp.dot(w1_ref[...], y.astype(jnp.bfloat16),
                              preferred_element_type=jnp.float32), 0.0)  # (Hc, T)

    # depthwise conv along T as tiny shift-matrix matmuls (no unaligned slices)
    pad = kernel_size // 2
    row = jax.lax.broadcasted_iota(jnp.int32, (T, T), 0)
    col = jax.lax.broadcasted_iota(jnp.int32, (T, T), 1)
    diff = row - col
    acc = jnp.zeros_like(hid)
    for kk in range(kernel_size):
        smat = (diff == (kk - pad)).astype(jnp.float32)      # (T, T) shift + zero-pad
        shifted = jnp.dot(hid, smat,
                          preferred_element_type=jnp.float32)  # hid[:, t + kk - pad]
        acc = acc + shifted * wd_ref[:, kk:kk + 1]
    dw = jnp.maximum(acc + bd_ref[...], 0.0)                  # (Hc, T)

    z = jnp.dot(w2_ref[...], dw.astype(jnp.bfloat16),
                preferred_element_type=jnp.float32)           # (C, T)
    o_ref[0] = z + y                                          # FFN residual


# ----------------------------------------------------------------------------
# Wrapper: one fused pallas_call, PyTorch layout (B, C, T) in and out.
# ----------------------------------------------------------------------------
def global_attention_forward(x_bct, params, pe, *, n_head, kernel_size):
    B, C, T = x_bct.shape
    Hc = params["w1"].shape[1]
    K = kernel_size
    bf = jnp.bfloat16

    # One-time parameter repacking (trace-time): pre-transpose the weights so
    # every in-kernel matmul is canonical, and ship them in bf16.
    wqkv_t = jnp.concatenate([params["wq"], params["wk"], params["wv"]],
                             axis=1).T.astype(bf)                     # (3C, C)
    bqkv = jnp.concatenate([params["bq"], params["bk"], params["bv"]],
                           axis=1).reshape(3 * C, 1)                  # (3C, 1)
    wo_t = params["wo"].T.astype(bf)                                  # (C, C)
    bo = params["bo"].reshape(C, 1)
    w1_t = params["w1"].T.astype(bf)                                  # (Hc, C)
    w2_t = params["w2"].T.astype(bf)                                  # (C, Hc)
    wd_t = params["wd"].T                                             # (Hc, K)
    bd = params["bd"].reshape(Hc, 1)
    ln1_w = params["ln1_w"].reshape(C, 1)
    ln1_b = params["ln1_b"].reshape(C, 1)
    ln2_w = params["ln2_w"].reshape(C, 1)
    ln2_b = params["ln2_b"].reshape(C, 1)
    pe_ct = pe.T                                                      # (C, T)

    kern = functools.partial(_global_attention_kernel, n_head=n_head,
                             kernel_size=kernel_size, eps=1e-5)
    const = lambda shape: pl.BlockSpec(shape, lambda b: (0,) * len(shape))
    in_specs = [
        pl.BlockSpec((1, C, T), lambda b: (b, 0, 0)),  # x  (NCT)
        const((C, T)),                                 # pe (channels-first)
        const((C, 1)), const((C, 1)),                  # ln1 w / b
        const((3 * C, C)), const((3 * C, 1)),          # wqkv^T, bqkv
        const((C, C)), const((C, 1)),                  # wo^T, bo
        const((C, 1)), const((C, 1)),                  # ln2 w / b
        const((Hc, C)),                                # w1^T
        const((Hc, K)), const((Hc, 1)),                # wd^T, bd
        const((C, Hc)),                                # w2^T
    ]
    return pl.pallas_call(
        kern,
        out_shape=jax.ShapeDtypeStruct((B, C, T), jnp.float32),
        grid=(B,),
        in_specs=in_specs,
        out_specs=pl.BlockSpec((1, C, T), lambda b: (b, 0, 0)),
        compiler_params=pltpu.CompilerParams(dimension_semantics=("parallel",)),
    )(x_bct, pe_ct, ln1_w, ln1_b, wqkv_t, bqkv, wo_t, bo,
      ln2_w, ln2_b, w1_t, wd_t, bd, w2_t)


# ----------------------------------------------------------------------------
# Helpers: positional encoding (matches the PyTorch buffer) and f32 reference.
# ----------------------------------------------------------------------------
def positional_encoding(T, C, max_len=10000):
    position = jnp.arange(T, dtype=jnp.float32)[:, None]
    div_term = jnp.exp(jnp.arange(0, C, 2, dtype=jnp.float32)
                       * (-(math.log(float(max_len)) / C)))
    pe = jnp.zeros((T, C), dtype=jnp.float32)
    pe = pe.at[:, 0::2].set(jnp.sin(position * div_term))
    pe = pe.at[:, 1::2].set(jnp.cos(position * div_term))
    return pe


def _ref_forward(x_bct, p, pe, n_head, ksize, eps=1e-5):
    hi = jax.lax.Precision.HIGHEST
    x = jnp.transpose(x_bct, (0, 2, 1))
    res = x
    mu = x.mean(-1, keepdims=True)
    var = ((x - mu) ** 2).mean(-1, keepdims=True)
    xn = (x - mu) / jnp.sqrt(var + eps) * p["ln1_w"] + p["ln1_b"]
    xp = xn + pe[None]
    residual = xp
    q = jnp.einsum("btc,cd->btd", xp, p["wq"], precision=hi) + p["bq"]
    k = jnp.einsum("btc,cd->btd", xp, p["wk"], precision=hi) + p["bk"]
    v = jnp.einsum("btc,cd->btd", xp, p["wv"], precision=hi) + p["bv"]
    B, T, C = xp.shape
    d = C // n_head
    qh = q.reshape(B, T, n_head, d).transpose(0, 2, 1, 3) / math.sqrt(d)
    kh = k.reshape(B, T, n_head, d).transpose(0, 2, 1, 3)
    vh = v.reshape(B, T, n_head, d).transpose(0, 2, 1, 3)
    s = jnp.einsum("bhqd,bhkd->bhqk", qh, kh, precision=hi)
    pa = jax.nn.softmax(s, axis=-1)
    oh = jnp.einsum("bhqk,bhkd->bhqd", pa, vh, precision=hi)
    att = oh.transpose(0, 2, 1, 3).reshape(B, T, C)
    out = jnp.einsum("btc,cd->btd", att, p["wo"], precision=hi) + p["bo"]
    x2 = out + residual
    mu2 = x2.mean(-1, keepdims=True)
    var2 = ((x2 - mu2) ** 2).mean(-1, keepdims=True)
    y = (x2 - mu2) / jnp.sqrt(var2 + eps) * p["ln2_w"] + p["ln2_b"]
    y = y + res
    h = jnp.maximum(jnp.einsum("btc,ch->bth", y, p["w1"], precision=hi), 0.0)
    pad = ksize // 2
    hp = jnp.pad(h, ((0, 0), (pad, pad), (0, 0)))
    acc = jnp.zeros_like(h)
    for t in range(ksize):
        acc = acc + hp[:, t:t + T, :] * p["wd"][t]
    acc = jnp.maximum(acc + p["bd"], 0.0)
    z = jnp.einsum("bth,hc->btc", acc, p["w2"], precision=hi) + y
    return jnp.transpose(z, (0, 2, 1))


# ----------------------------------------------------------------------------
if __name__ == "__main__":
    B, C, T = 2, 64, 16          # in_chan=64 (divisible by n_head=8), seq len 16
    n_head = 8
    Hc = 2 * C                   # hid_chan = 2 * in_chan (module default)
    K = 5                        # kernel_size

    key = jax.random.PRNGKey(0)
    ks = jax.random.split(key, 17)
    nrm = lambda k, s, sc: (sc * jax.random.normal(k, s)).astype(jnp.float32)

    params = {
        "ln1_w": (1.0 + 0.1 * jax.random.normal(ks[0], (1, C))).astype(jnp.float32),
        "ln1_b": nrm(ks[1], (1, C), 0.1),
        "wq": nrm(ks[2], (C, C), 0.1), "wk": nrm(ks[3], (C, C), 0.1),
        "wv": nrm(ks[4], (C, C), 0.1),
        "bq": nrm(ks[5], (1, C), 0.05), "bk": nrm(ks[6], (1, C), 0.05),
        "bv": nrm(ks[7], (1, C), 0.05),
        "wo": nrm(ks[8], (C, C), 0.1), "bo": nrm(ks[9], (1, C), 0.05),
        "ln2_w": (1.0 + 0.1 * jax.random.normal(ks[10], (1, C))).astype(jnp.float32),
        "ln2_b": nrm(ks[11], (1, C), 0.1),
        "w1": nrm(ks[12], (C, Hc), 0.1),
        "wd": nrm(ks[13], (K, Hc), 0.2),
        "bd": nrm(ks[14], (1, Hc), 0.05),
        "w2": nrm(ks[15], (Hc, C), 0.1),
    }

    x = nrm(ks[16], (B, C, T), 1.0)
    pe = positional_encoding(T, C)

    out = global_attention_forward(x, params, pe, n_head=n_head, kernel_size=K)
    out = jax.block_until_ready(out)

    ref = _ref_forward(x, params, pe, n_head, K)
    assert out.shape == (B, C, T)
    assert bool(jnp.all(jnp.isfinite(out)))
    max_err = float(jnp.max(jnp.abs(out - ref)))
    assert bool(jnp.allclose(out, ref, atol=2e-2, rtol=2e-2)), (
        f"mismatch vs reference (max abs err {max_err})")
    print("KERNEL_OK")
</pallas_src>

<mosaic_0001>
module attributes {stable_mosaic.version = 11 : i64} {
  func.func @_global_attention_kernel(%arg0: i32, %arg1: memref<1x64x16xf32, #tpu.memory_space<vmem>>, %arg2: memref<64x16xf32, #tpu.memory_space<vmem>>, %arg3: memref<64x1xf32, #tpu.memory_space<vmem>>, %arg4: memref<64x1xf32, #tpu.memory_space<vmem>>, %arg5: memref<192x64xbf16, #tpu.memory_space<vmem>>, %arg6: memref<192x1xf32, #tpu.memory_space<vmem>>, %arg7: memref<64x64xbf16, #tpu.memory_space<vmem>>, %arg8: memref<64x1xf32, #tpu.memory_space<vmem>>, %arg9: memref<64x1xf32, #tpu.memory_space<vmem>>, %arg10: memref<64x1xf32, #tpu.memory_space<vmem>>, %arg11: memref<128x64xbf16, #tpu.memory_space<vmem>>, %arg12: memref<128x5xf32, #tpu.memory_space<vmem>>, %arg13: memref<128x1xf32, #tpu.memory_space<vmem>>, %arg14: memref<64x128xbf16, #tpu.memory_space<vmem>>, %arg15: memref<1x64x16xf32, #tpu.memory_space<vmem>>) attributes {dimension_semantics = [#tpu.dimension_semantics<parallel>], iteration_bounds = array<i64: 2>, scalar_prefetch = 0 : i64, scratch_operands = 0 : i64, tpu.core_type = #tpu.core_type<tc>, window_params = [{transform_indices = @transform_0, window_bounds = array<i64: 1, 64, 16>}, {pipeline_mode = #tpu.pipeline_mode<synchronous>, transform_indices = @transform_1, window_bounds = array<i64: 64, 16>}, {pipeline_mode = #tpu.pipeline_mode<synchronous>, transform_indices = @transform_2, window_bounds = array<i64: 64, 1>}, {pipeline_mode = #tpu.pipeline_mode<synchronous>, transform_indices = @transform_3, window_bounds = array<i64: 64, 1>}, {pipeline_mode = #tpu.pipeline_mode<synchronous>, transform_indices = @transform_4, window_bounds = array<i64: 192, 64>}, {pipeline_mode = #tpu.pipeline_mode<synchronous>, transform_indices = @transform_5, window_bounds = array<i64: 192, 1>}, {pipeline_mode = #tpu.pipeline_mode<synchronous>, transform_indices = @transform_6, window_bounds = array<i64: 64, 64>}, {pipeline_mode = #tpu.pipeline_mode<synchronous>, transform_indices = @transform_7, window_bounds = array<i64: 64, 1>}, {pipeline_mode = #tpu.pipeline_mode<synchronous>, transform_indices = @transform_8, window_bounds = array<i64: 64, 1>}, {pipeline_mode = #tpu.pipeline_mode<synchronous>, transform_indices = @transform_9, window_bounds = array<i64: 64, 1>}, {pipeline_mode = #tpu.pipeline_mode<synchronous>, transform_indices = @transform_10, window_bounds = array<i64: 128, 64>}, {pipeline_mode = #tpu.pipeline_mode<synchronous>, transform_indices = @transform_11, window_bounds = array<i64: 128, 5>}, {pipeline_mode = #tpu.pipeline_mode<synchronous>, transform_indices = @transform_12, window_bounds = array<i64: 128, 1>}, {pipeline_mode = #tpu.pipeline_mode<synchronous>, transform_indices = @transform_13, window_bounds = array<i64: 64, 128>}, {transform_indices = @transform_14, window_bounds = array<i64: 1, 64, 16>}]} {
    %c0 = arith.constant 0 : index
    %c0_0 = arith.constant 0 : index
    %c0_1 = arith.constant 0 : index
    %0 = vector.load %arg1[%c0, %c0_0, %c0_1] : memref<1x64x16xf32, #tpu.memory_space<vmem>>, vector<1x64x16xf32>
    %1 = vector.shape_cast %0 : vector<1x64x16xf32> to vector<64x16xf32>
    %cst = arith.constant dense<0.000000e+00> : vector<16xf32>
    %2 = vector.multi_reduction <add>, %1, %cst [0] : vector<64x16xf32> to vector<16xf32>
    %3 = vector.shape_cast %2 : vector<16xf32> to vector<1x16xf32>
    %cst_2 = arith.constant 6.400000e+01 : f32
    %4 = vector.broadcast %cst_2 : f32 to vector<1x16xf32>
    %5 = arith.divf %3, %4 : vector<1x16xf32>
    %6 = vector.broadcast %5 : vector<1x16xf32> to vector<64x16xf32>
    %7 = arith.subf %1, %6 : vector<64x16xf32>
    %8 = arith.mulf %7, %7 : vector<64x16xf32>
    %cst_3 = arith.constant dense<0.000000e+00> : vector<16xf32>
    %9 = vector.multi_reduction <add>, %8, %cst_3 [0] : vector<64x16xf32> to vector<16xf32>
    %10 = vector.shape_cast %9 : vector<16xf32> to vector<1x16xf32>
    %cst_4 = arith.constant 6.400000e+01 : f32
    %11 = vector.broadcast %cst_4 : f32 to vector<1x16xf32>
    %12 = arith.divf %10, %11 : vector<1x16xf32>
    %13 = vector.broadcast %5 : vector<1x16xf32> to vector<64x16xf32>
    %14 = arith.subf %1, %13 : vector<64x16xf32>
    %cst_5 = arith.constant 9.99999974E-6 : f32
    %15 = vector.broadcast %cst_5 : f32 to vector<1x16xf32>
    %16 = arith.addf %12, %15 : vector<1x16xf32>
    %17 = math.rsqrt %16 : vector<1x16xf32>
    %18 = vector.broadcast %17 : vector<1x16xf32> to vector<64x16xf32>
    %19 = arith.mulf %14, %18 : vector<64x16xf32>
    %c0_6 = arith.constant 0 : index
    %c0_7 = arith.constant 0 : index
    %20 = vector.load %arg3[%c0_6, %c0_7] : memref<64x1xf32, #tpu.memory_space<vmem>>, vector<64x1xf32>
    %21 = vector.broadcast %20 : vector<64x1xf32> to vector<64x16xf32>
    %22 = arith.mulf %19, %21 : vector<64x16xf32>
    %c0_8 = arith.constant 0 : index
    %c0_9 = arith.constant 0 : index
    %23 = vector.load %arg4[%c0_8, %c0_9] : memref<64x1xf32, #tpu.memory_space<vmem>>, vector<64x1xf32>
    %24 = vector.broadcast %23 : vector<64x1xf32> to vector<64x16xf32>
    %25 = arith.addf %22, %24 : vector<64x16xf32>
    %c0_10 = arith.constant 0 : index
    %c0_11 = arith.constant 0 : index
    %26 = vector.load %arg2[%c0_10, %c0_11] : memref<64x16xf32, #tpu.memory_space<vmem>>, vector<64x16xf32>
    %27 = arith.addf %25, %26 : vector<64x16xf32>
    %c0_12 = arith.constant 0 : index
    %c0_13 = arith.constant 0 : index
    %28 = vector.load %arg5[%c0_12, %c0_13] : memref<192x64xbf16, #tpu.memory_space<vmem>>, vector<192x64xbf16>
    %29 = arith.truncf %27 : vector<64x16xf32> to vector<64x16xbf16>
    %cst_14 = arith.constant dense<0.000000e+00> : vector<192x16xf32>
    %30 = tpu.matmul %28, %29, %cst_14 {dimension_numbers = #tpu.dot_dimension_numbers<[1], [0], [0], [1], [0, 0, 1, 1], [], []>} : vector<192x64xbf16>, vector<64x16xbf16>, vector<192x16xf32> -> vector<192x16xf32>
    %c0_15 = arith.constant 0 : index
    %c0_16 = arith.constant 0 : index
    %31 = vector.load %arg6[%c0_15, %c0_16] : memref<192x1xf32, #tpu.memory_space<vmem>>, vector<192x1xf32>
    %32 = vector.broadcast %31 : vector<192x1xf32> to vector<192x16xf32>
    %33 = arith.addf %30, %32 : vector<192x16xf32>
    %34 = vector.extract_strided_slice %33 {offsets = [0, 0], sizes = [8, 16], strides = [1, 1]} : vector<192x16xf32> to vector<8x16xf32>
    %35 = vector.extract_strided_slice %33 {offsets = [8, 0], sizes = [8, 16], strides = [1, 1]} : vector<192x16xf32> to vector<8x16xf32>
    %36 = vector.extract_strided_slice %33 {offsets = [16, 0], sizes = [8, 16], strides = [1, 1]} : vector<192x16xf32> to vector<8x16xf32>
    %37 = vector.extract_strided_slice %33 {offsets = [24, 0], sizes = [8, 16], strides = [1, 1]} : vector<192x16xf32> to vector<8x16xf32>
    %38 = vector.extract_strided_slice %33 {offsets = [32, 0], sizes = [8, 16], strides = [1, 1]} : vector<192x16xf32> to vector<8x16xf32>
    %39 = vector.extract_strided_slice %33 {offsets = [40, 0], sizes = [8, 16], strides = [1, 1]} : vector<192x16xf32> to vector<8x16xf32>
    %40 = vector.extract_strided_slice %33 {offsets = [48, 0], sizes = [8, 16], strides = [1, 1]} : vector<192x16xf32> to vector<8x16xf32>
    %41 = vector.extract_strided_slice %33 {offsets = [56, 0], sizes = [8, 16], strides = [1, 1]} : vector<192x16xf32> to vector<8x16xf32>
    %42 = vector.shape_cast %34 : vector<8x16xf32> to vector<1x8x16xf32>
    %43 = vector.shape_cast %35 : vector<8x16xf32> to vector<1x8x16xf32>
    %44 = vector.shape_cast %36 : vector<8x16xf32> to vector<1x8x16xf32>
    %45 = vector.shape_cast %37 : vector<8x16xf32> to vector<1x8x16xf32>
    %46 = vector.shape_cast %38 : vector<8x16xf32> to vector<1x8x16xf32>
    %47 = vector.shape_cast %39 : vector<8x16xf32> to vector<1x8x16xf32>
    %48 = vector.shape_cast %40 : vector<8x16xf32> to vector<1x8x16xf32>
    %49 = vector.shape_cast %41 : vector<8x16xf32> to vector<1x8x16xf32>
    %50 = tpu.concatenate %42, %43, %44, %45, %46, %47, %48, %49 in 0 : vector<1x8x16xf32>, vector<1x8x16xf32>, vector<1x8x16xf32>, vector<1x8x16xf32>, vector<1x8x16xf32>, vector<1x8x16xf32>, vector<1x8x16xf32>, vector<1x8x16xf32> -> vector<8x8x16xf32>
    %cst_17 = arith.constant 0.353553385 : f32
    %51 = vector.broadcast %cst_17 : f32 to vector<8x8x16xf32>
    %52 = arith.mulf %50, %51 : vector<8x8x16xf32>
    %53 = vector.extract_strided_slice %33 {offsets = [64, 0], sizes = [8, 16], strides = [1, 1]} : vector<192x16xf32> to vector<8x16xf32>
    %54 = vector.extract_strided_slice %33 {offsets = [72, 0], sizes = [8, 16], strides = [1, 1]} : vector<192x16xf32> to vector<8x16xf32>
    %55 = vector.extract_strided_slice %33 {offsets = [80, 0], sizes = [8, 16], strides = [1, 1]} : vector<192x16xf32> to vector<8x16xf32>
    %56 = vector.extract_strided_slice %33 {offsets = [88, 0], sizes = [8, 16], strides = [1, 1]} : vector<192x16xf32> to vector<8x16xf32>
    %57 = vector.extract_strided_slice %33 {offsets = [96, 0], sizes = [8, 16], strides = [1, 1]} : vector<192x16xf32> to vector<8x16xf32>
    %58 = vector.extract_strided_slice %33 {offsets = [104, 0], sizes = [8, 16], strides = [1, 1]} : vector<192x16xf32> to vector<8x16xf32>
    %59 = vector.extract_strided_slice %33 {offsets = [112, 0], sizes = [8, 16], strides = [1, 1]} : vector<192x16xf32> to vector<8x16xf32>
    %60 = vector.extract_strided_slice %33 {offsets = [120, 0], sizes = [8, 16], strides = [1, 1]} : vector<192x16xf32> to vector<8x16xf32>
    %61 = vector.shape_cast %53 : vector<8x16xf32> to vector<1x8x16xf32>
    %62 = vector.shape_cast %54 : vector<8x16xf32> to vector<1x8x16xf32>
    %63 = vector.shape_cast %55 : vector<8x16xf32> to vector<1x8x16xf32>
    %64 = vector.shape_cast %56 : vector<8x16xf32> to vector<1x8x16xf32>
    %65 = vector.shape_cast %57 : vector<8x16xf32> to vector<1x8x16xf32>
    %66 = vector.shape_cast %58 : vector<8x16xf32> to vector<1x8x16xf32>
    %67 = vector.shape_cast %59 : vector<8x16xf32> to vector<1x8x16xf32>
    %68 = vector.shape_cast %60 : vector<8x16xf32> to vector<1x8x16xf32>
    %69 = tpu.concatenate %61, %62, %63, %64, %65, %66, %67, %68 in 0 : vector<1x8x16xf32>, vector<1x8x16xf32>, vector<1x8x16xf32>, vector<1x8x16xf32>, vector<1x8x16xf32>, vector<1x8x16xf32>, vector<1x8x16xf32>, vector<1x8x16xf32> -> vector<8x8x16xf32>
    %70 = vector.extract_strided_slice %33 {offsets = [128, 0], sizes = [8, 16], strides = [1, 1]} : vector<192x16xf32> to vector<8x16xf32>
    %71 = vector.extract_strided_slice %33 {offsets = [136, 0], sizes = [8, 16], strides = [1, 1]} : vector<192x16xf32> to vector<8x16xf32>
    %72 = vector.extract_strided_slice %33 {offsets = [144, 0], sizes = [8, 16], strides = [1, 1]} : vector<192x16xf32> to vector<8x16xf32>
    %73 = vector.extract_strided_slice %33 {offsets = [152, 0], sizes = [8, 16], strides = [1, 1]} : vector<192x16xf32> to vector<8x16xf32>
    %74 = vector.extract_strided_slice %33 {offsets = [160, 0], sizes = [8, 16], strides = [1, 1]} : vector<192x16xf32> to vector<8x16xf32>
    %75 = vector.extract_strided_slice %33 {offsets = [168, 0], sizes = [8, 16], strides = [1, 1]} : vector<192x16xf32> to vector<8x16xf32>
    %76 = vector.extract_strided_slice %33 {offsets = [176, 0], sizes = [8, 16], strides = [1, 1]} : vector<192x16xf32> to vector<8x16xf32>
    %77 = vector.extract_strided_slice %33 {offsets = [184, 0], sizes = [8, 16], strides = [1, 1]} : vector<192x16xf32> to vector<8x16xf32>
    %78 = vector.shape_cast %70 : vector<8x16xf32> to vector<1x8x16xf32>
    %79 = vector.shape_cast %71 : vector<8x16xf32> to vector<1x8x16xf32>
    %80 = vector.shape_cast %72 : vector<8x16xf32> to vector<1x8x16xf32>
    %81 = vector.shape_cast %73 : vector<8x16xf32> to vector<1x8x16xf32>
    %82 = vector.shape_cast %74 : vector<8x16xf32> to vector<1x8x16xf32>
    %83 = vector.shape_cast %75 : vector<8x16xf32> to vector<1x8x16xf32>
    %84 = vector.shape_cast %76 : vector<8x16xf32> to vector<1x8x16xf32>
    %85 = vector.shape_cast %77 : vector<8x16xf32> to vector<1x8x16xf32>
    %86 = tpu.concatenate %78, %79, %80, %81, %82, %83, %84, %85 in 0 : vector<1x8x16xf32>, vector<1x8x16xf32>, vector<1x8x16xf32>, vector<1x8x16xf32>, vector<1x8x16xf32>, vector<1x8x16xf32>, vector<1x8x16xf32>, vector<1x8x16xf32> -> vector<8x8x16xf32>
    "tpu.trace_start"() <{level = 10 : i32, message = "hdt,hds->hts"}> : () -> ()
    %cst_18 = arith.constant dense<0.000000e+00> : vector<8x16x16xf32>
    %87 = tpu.matmul %52, %69, %cst_18 {dimension_numbers = #tpu.dot_dimension_numbers<[1], [1], [2], [2], [0, 0, 0, 2, 1, 2], [0], [0]>} : vector<8x8x16xf32>, vector<8x8x16xf32>, vector<8x16x16xf32> -> vector<8x16x16xf32>
    "tpu.trace_stop"() : () -> ()
    %cst_19 = arith.constant dense<0xFF800000> : vector<8x16xf32>
    %88 = vector.multi_reduction <maximumf>, %87, %cst_19 [2] : vector<8x16x16xf32> to vector<8x16xf32>
    %89 = vector.shape_cast %88 : vector<8x16xf32> to vector<8x16x1xf32>
    %90 = vector.broadcast %89 : vector<8x16x1xf32> to vector<8x16x16xf32>
    %91 = arith.subf %87, %90 : vector<8x16x16xf32>
    %92 = math.exp %91 : vector<8x16x16xf32>
    %cst_20 = arith.constant dense<0.000000e+00> : vector<8x16xf32>
    %93 = vector.multi_reduction <add>, %92, %cst_20 [2] : vector<8x16x16xf32> to vector<8x16xf32>
    %94 = vector.shape_cast %93 : vector<8x16xf32> to vector<8x16x1xf32>
    %95 = tpu.reciprocal %94 {approx = true} : vector<8x16x1xf32> -> vector<8x16x1xf32>
    %96 = vector.broadcast %95 : vector<8x16x1xf32> to vector<8x16x16xf32>
    %97 = arith.mulf %92, %96 : vector<8x16x16xf32>
    "tpu.trace_start"() <{level = 10 : i32, message = "hds,hts->hdt"}> : () -> ()
    %cst_21 = arith.constant dense<0.000000e+00> : vector<8x8x16xf32>
    %98 = tpu.matmul %86, %97, %cst_21 {dimension_numbers = #tpu.dot_dimension_numbers<[2], [2], [1], [1], [0, 0, 0, 1, 1, 1], [0], [0]>} : vector<8x8x16xf32>, vector<8x16x16xf32>, vector<8x8x16xf32> -> vector<8x8x16xf32>
    "tpu.trace_stop"() : () -> ()
    %99 = vector.extract_strided_slice %98 {offsets = [0, 0, 0], sizes = [1, 8, 16], strides = [1, 1, 1]} : vector<8x8x16xf32> to vector<1x8x16xf32>
    %100 = vector.shape_cast %99 : vector<1x8x16xf32> to vector<8x16xf32>
    %101 = vector.extract_strided_slice %98 {offsets = [1, 0, 0], sizes = [1, 8, 16], strides = [1, 1, 1]} : vector<8x8x16xf32> to vector<1x8x16xf32>
    %102 = vector.shape_cast %101 : vector<1x8x16xf32> to vector<8x16xf32>
    %103 = vector.extract_strided_slice %98 {offsets = [2, 0, 0], sizes = [1, 8, 16], strides = [1, 1, 1]} : vector<8x8x16xf32> to vector<1x8x16xf32>
    %104 = vector.shape_cast %103 : vector<1x8x16xf32> to vector<8x16xf32>
    %105 = vector.extract_strided_slice %98 {offsets = [3, 0, 0], sizes = [1, 8, 16], strides = [1, 1, 1]} : vector<8x8x16xf32> to vector<1x8x16xf32>
    %106 = vector.shape_cast %105 : vector<1x8x16xf32> to vector<8x16xf32>
    %107 = vector.extract_strided_slice %98 {offsets = [4, 0, 0], sizes = [1, 8, 16], strides = [1, 1, 1]} : vector<8x8x16xf32> to vector<1x8x16xf32>
    %108 = vector.shape_cast %107 : vector<1x8x16xf32> to vector<8x16xf32>
    %109 = vector.extract_strided_slice %98 {offsets = [5, 0, 0], sizes = [1, 8, 16], strides = [1, 1, 1]} : vector<8x8x16xf32> to vector<1x8x16xf32>
    %110 = vector.shape_cast %109 : vector<1x8x16xf32> to vector<8x16xf32>
    %111 = vector.extract_strided_slice %98 {offsets = [6, 0, 0], sizes = [1, 8, 16], strides = [1, 1, 1]} : vector<8x8x16xf32> to vector<1x8x16xf32>
    %112 = vector.shape_cast %111 : vector<1x8x16xf32> to vector<8x16xf32>
    %113 = vector.extract_strided_slice %98 {offsets = [7, 0, 0], sizes = [1, 8, 16], strides = [1, 1, 1]} : vector<8x8x16xf32> to vector<1x8x16xf32>
    %114 = vector.shape_cast %113 : vector<1x8x16xf32> to vector<8x16xf32>
    %115 = tpu.concatenate %100, %102, %104, %106, %108, %110, %112, %114 in 0 : vector<8x16xf32>, vector<8x16xf32>, vector<8x16xf32>, vector<8x16xf32>, vector<8x16xf32>, vector<8x16xf32>, vector<8x16xf32>, vector<8x16xf32> -> vector<64x16xf32>
    %c0_22 = arith.constant 0 : index
    %c0_23 = arith.constant 0 : index
    %116 = vector.load %arg7[%c0_22, %c0_23] : memref<64x64xbf16, #tpu.memory_space<vmem>>, vector<64x64xbf16>
    %117 = arith.truncf %115 : vector<64x16xf32> to vector<64x16xbf16>
    %cst_24 = arith.constant dense<0.000000e+00> : vector<64x16xf32>
    %118 = tpu.matmul %116, %117, %cst_24 {dimension_numbers = #tpu.dot_dimension_numbers<[1], [0], [0], [1], [0, 0, 1, 1], [], []>} : vector<64x64xbf16>, vector<64x16xbf16>, vector<64x16xf32> -> vector<64x16xf32>
    %c0_25 = arith.constant 0 : index
    %c0_26 = arith.constant 0 : index
    %119 = vector.load %arg8[%c0_25, %c0_26] : memref<64x1xf32, #tpu.memory_space<vmem>>, vector<64x1xf32>
    %120 = vector.broadcast %119 : vector<64x1xf32> to vector<64x16xf32>
    %121 = arith.addf %118, %120 : vector<64x16xf32>
    %122 = arith.addf %121, %27 : vector<64x16xf32>
    %cst_27 = arith.constant dense<0.000000e+00> : vector<16xf32>
    %123 = vector.multi_reduction <add>, %122, %cst_27 [0] : vector<64x16xf32> to vector<16xf32>
    %124 = vector.shape_cast %123 : vector<16xf32> to vector<1x16xf32>
    %cst_28 = arith.constant 6.400000e+01 : f32
    %125 = vector.broadcast %cst_28 : f32 to vector<1x16xf32>
    %126 = arith.divf %124, %125 : vector<1x16xf32>
    %127 = vector.broadcast %126 : vector<1x16xf32> to vector<64x16xf32>
    %128 = arith.subf %122, %127 : vector<64x16xf32>
    %129 = arith.mulf %128, %128 : vector<64x16xf32>
    %cst_29 = arith.constant dense<0.000000e+00> : vector<16xf32>
    %130 = vector.multi_reduction <add>, %129, %cst_29 [0] : vector<64x16xf32> to vector<16xf32>
    %131 = vector.shape_cast %130 : vector<16xf32> to vector<1x16xf32>
    %cst_30 = arith.constant 6.400000e+01 : f32
    %132 = vector.broadcast %cst_30 : f32 to vector<1x16xf32>
    %133 = arith.divf %131, %132 : vector<1x16xf32>
    %134 = vector.broadcast %126 : vector<1x16xf32> to vector<64x16xf32>
    %135 = arith.subf %122, %134 : vector<64x16xf32>
    %cst_31 = arith.constant 9.99999974E-6 : f32
    %136 = vector.broadcast %cst_31 : f32 to vector<1x16xf32>
    %137 = arith.addf %133, %136 : vector<1x16xf32>
    %138 = math.rsqrt %137 : vector<1x16xf32>
    %139 = vector.broadcast %138 : vector<1x16xf32> to vector<64x16xf32>
    %140 = arith.mulf %135, %139 : vector<64x16xf32>
    %c0_32 = arith.constant 0 : index
    %c0_33 = arith.constant 0 : index
    %141 = vector.load %arg9[%c0_32, %c0_33] : memref<64x1xf32, #tpu.memory_space<vmem>>, vector<64x1xf32>
    %142 = vector.broadcast %141 : vector<64x1xf32> to vector<64x16xf32>
    %143 = arith.mulf %140, %142 : vector<64x16xf32>
    %c0_34 = arith.constant 0 : index
    %c0_35 = arith.constant 0 : index
    %144 = vector.load %arg10[%c0_34, %c0_35] : memref<64x1xf32, #tpu.memory_space<vmem>>, vector<64x1xf32>
    %145 = vector.broadcast %144 : vector<64x1xf32> to vector<64x16xf32>
    %146 = arith.addf %143, %145 : vector<64x16xf32>
    %147 = arith.addf %146, %1 : vector<64x16xf32>
    %c0_36 = arith.constant 0 : index
    %c0_37 = arith.constant 0 : index
    %148 = vector.load %arg11[%c0_36, %c0_37] : memref<128x64xbf16, #tpu.memory_space<vmem>>, vector<128x64xbf16>
    %149 = arith.truncf %147 : vector<64x16xf32> to vector<64x16xbf16>
    %cst_38 = arith.constant dense<0.000000e+00> : vector<128x16xf32>
    %150 = tpu.matmul %148, %149, %cst_38 {dimension_numbers = #tpu.dot_dimension_numbers<[1], [0], [0], [1], [0, 0, 1, 1], [], []>} : vector<128x64xbf16>, vector<64x16xbf16>, vector<128x16xf32> -> vector<128x16xf32>
    %cst_39 = arith.constant 0.000000e+00 : f32
    %151 = vector.broadcast %cst_39 : f32 to vector<128x16xf32>
    %152 = arith.maximumf %150, %151 : vector<128x16xf32>
    %153 = tpu.iota {dimensions = array<i32: 0>} : vector<16x16xi32>
    %154 = tpu.iota {dimensions = array<i32: 1>} : vector<16x16xi32>
    %155 = arith.subi %153, %154 : vector<16x16xi32>
    %cst_40 = arith.constant 0.000000e+00 : f32
    %156 = vector.broadcast %cst_40 : f32 to vector<128x16xf32>
    %c-2_i32 = arith.constant -2 : i32
    %157 = vector.broadcast %c-2_i32 : i32 to vector<16x16xi32>
    %158 = arith.cmpi eq, %155, %157 : vector<16x16xi32>
    %159 = arith.extui %158 : vector<16x16xi1> to vector<16x16xi32>
    %160 = arith.sitofp %159 : vector<16x16xi32> to vector<16x16xf32>
    %cst_41 = arith.constant dense<0.000000e+00> : vector<128x16xf32>
    %161 = tpu.matmul %152, %160, %cst_41 {dimension_numbers = #tpu.dot_dimension_numbers<[1], [0], [0], [1], [0, 0, 1, 1], [], []>} : vector<128x16xf32>, vector<16x16xf32>, vector<128x16xf32> -> vector<128x16xf32>
    %c0_42 = arith.constant 0 : index
    %c0_43 = arith.constant 0 : index
    %162 = vector.load %arg12[%c0_42, %c0_43] : memref<128x5xf32, #tpu.memory_space<vmem>>, vector<128x1xf32>
    %163 = vector.broadcast %162 : vector<128x1xf32> to vector<128x16xf32>
    %164 = arith.mulf %161, %163 : vector<128x16xf32>
    %165 = arith.addf %156, %164 : vector<128x16xf32>
    %c-1_i32 = arith.constant -1 : i32
    %166 = vector.broadcast %c-1_i32 : i32 to vector<16x16xi32>
    %167 = arith.cmpi eq, %155, %166 : vector<16x16xi32>
    %168 = arith.extui %167 : vector<16x16xi1> to vector<16x16xi32>
    %169 = arith.sitofp %168 : vector<16x16xi32> to vector<16x16xf32>
    %cst_44 = arith.constant dense<0.000000e+00> : vector<128x16xf32>
    %170 = tpu.matmul %152, %169, %cst_44 {dimension_numbers = #tpu.dot_dimension_numbers<[1], [0], [0], [1], [0, 0, 1, 1], [], []>} : vector<128x16xf32>, vector<16x16xf32>, vector<128x16xf32> -> vector<128x16xf32>
    %c0_45 = arith.constant 0 : index
    %c1 = arith.constant 1 : index
    %171 = vector.load %arg12[%c0_45, %c1] : memref<128x5xf32, #tpu.memory_space<vmem>>, vector<128x1xf32>
    %172 = vector.broadcast %171 : vector<128x1xf32> to vector<128x16xf32>
    %173 = arith.mulf %170, %172 : vector<128x16xf32>
    %174 = arith.addf %165, %173 : vector<128x16xf32>
    %c0_i32 = arith.constant 0 : i32
    %175 = vector.broadcast %c0_i32 : i32 to vector<16x16xi32>
    %176 = arith.cmpi eq, %155, %175 : vector<16x16xi32>
    %177 = arith.extui %176 : vector<16x16xi1> to vector<16x16xi32>
    %178 = arith.sitofp %177 : vector<16x16xi32> to vector<16x16xf32>
    %cst_46 = arith.constant dense<0.000000e+00> : vector<128x16xf32>
    %179 = tpu.matmul %152, %178, %cst_46 {dimension_numbers = #tpu.dot_dimension_numbers<[1], [0], [0], [1], [0, 0, 1, 1], [], []>} : vector<128x16xf32>, vector<16x16xf32>, vector<128x16xf32> -> vector<128x16xf32>
    %c0_47 = arith.constant 0 : index
    %c2 = arith.constant 2 : index
    %180 = vector.load %arg12[%c0_47, %c2] : memref<128x5xf32, #tpu.memory_space<vmem>>, vector<128x1xf32>
    %181 = vector.broadcast %180 : vector<128x1xf32> to vector<128x16xf32>
    %182 = arith.mulf %179, %181 : vector<128x16xf32>
    %183 = arith.addf %174, %182 : vector<128x16xf32>
    %c1_i32 = arith.constant 1 : i32
    %184 = vector.broadcast %c1_i32 : i32 to vector<16x16xi32>
    %185 = arith.cmpi eq, %155, %184 : vector<16x16xi32>
    %186 = arith.extui %185 : vector<16x16xi1> to vector<16x16xi32>
    %187 = arith.sitofp %186 : vector<16x16xi32> to vector<16x16xf32>
    %cst_48 = arith.constant dense<0.000000e+00> : vector<128x16xf32>
    %188 = tpu.matmul %152, %187, %cst_48 {dimension_numbers = #tpu.dot_dimension_numbers<[1], [0], [0], [1], [0, 0, 1, 1], [], []>} : vector<128x16xf32>, vector<16x16xf32>, vector<128x16xf32> -> vector<128x16xf32>
    %c0_49 = arith.constant 0 : index
    %c3 = arith.constant 3 : index
    %189 = vector.load %arg12[%c0_49, %c3] : memref<128x5xf32, #tpu.memory_space<vmem>>, vector<128x1xf32>
    %190 = vector.broadcast %189 : vector<128x1xf32> to vector<128x16xf32>
    %191 = arith.mulf %188, %190 : vector<128x16xf32>
    %192 = arith.addf %183, %191 : vector<128x16xf32>
    %c2_i32 = arith.constant 2 : i32
    %193 = vector.broadcast %c2_i32 : i32 to vector<16x16xi32>
    %194 = arith.cmpi eq, %155, %193 : vector<16x16xi32>
    %195 = arith.extui %194 : vector<16x16xi1> to vector<16x16xi32>
    %196 = arith.sitofp %195 : vector<16x16xi32> to vector<16x16xf32>
    %cst_50 = arith.constant dense<0.000000e+00> : vector<128x16xf32>
    %197 = tpu.matmul %152, %196, %cst_50 {dimension_numbers = #tpu.dot_dimension_numbers<[1], [0], [0], [1], [0, 0, 1, 1], [], []>} : vector<128x16xf32>, vector<16x16xf32>, vector<128x16xf32> -> vector<128x16xf32>
    %c0_51 = arith.constant 0 : index
    %c4 = arith.constant 4 : index
    %198 = vector.load %arg12[%c0_51, %c4] : memref<128x5xf32, #tpu.memory_space<vmem>>, vector<128x1xf32>
    %199 = vector.broadcast %198 : vector<128x1xf32> to vector<128x16xf32>
    %200 = arith.mulf %197, %199 : vector<128x16xf32>
    %201 = arith.addf %192, %200 : vector<128x16xf32>
    %c0_52 = arith.constant 0 : index
    %c0_53 = arith.constant 0 : index
    %202 = vector.load %arg13[%c0_52, %c0_53] : memref<128x1xf32, #tpu.memory_space<vmem>>, vector<128x1xf32>
    %203 = vector.broadcast %202 : vector<128x1xf32> to vector<128x16xf32>
    %204 = arith.addf %201, %203 : vector<128x16xf32>
    %cst_54 = arith.constant 0.000000e+00 : f32
    %205 = vector.broadcast %cst_54 : f32 to vector<128x16xf32>
    %206 = arith.maximumf %204, %205 : vector<128x16xf32>
    %c0_55 = arith.constant 0 : index
    %c0_56 = arith.constant 0 : index
    %207 = vector.load %arg14[%c0_55, %c0_56] : memref<64x128xbf16, #tpu.memory_space<vmem>>, vector<64x128xbf16>
    %208 = arith.truncf %206 : vector<128x16xf32> to vector<128x16xbf16>
    %cst_57 = arith.constant dense<0.000000e+00> : vector<64x16xf32>
    %209 = tpu.matmul %207, %208, %cst_57 {dimension_numbers = #tpu.dot_dimension_numbers<[1], [0], [0], [1], [0, 0, 1, 1], [], []>} : vector<64x128xbf16>, vector<128x16xbf16>, vector<64x16xf32> -> vector<64x16xf32>
    %210 = arith.addf %209, %147 : vector<64x16xf32>
    %c0_58 = arith.constant 0 : index
    %c0_59 = arith.constant 0 : index
    %c0_60 = arith.constant 0 : index
    %211 = vector.load %arg15[%c0_58, %c0_59, %c0_60] : memref<1x64x16xf32, #tpu.memory_space<vmem>>, vector<1x64x16xf32>
    %212 = vector.shape_cast %211 : vector<1x64x16xf32> to vector<64x16xf32>
    %213 = vector.shape_cast %210 : vector<64x16xf32> to vector<1x64x16xf32>
    tpu.vector_store %arg15[%c0_58, %c0_59, %c0_60], %213 {strides = array<i32>} : memref<1x64x16xf32, #tpu.memory_space<vmem>>, vector<1x64x16xf32>,
    return
  }
  func.func @transform_0(%arg0: i32) -> (i32, i32, i32) {
    %c0_i32 = arith.constant 0 : i32
    %c0_i32_0 = arith.constant 0 : i32
    %c0_i32_1 = arith.constant 0 : i32
    return %arg0, %c0_i32, %c0_i32_0 : i32, i32, i32
  }
  func.func @transform_1(%arg0: i32) -> (i32, i32) {
    %c0_i32 = arith.constant 0 : i32
    %c0_i32_0 = arith.constant 0 : i32
    %c0_i32_1 = arith.constant 0 : i32
    return %c0_i32, %c0_i32_0 : i32, i32
  }
  func.func @transform_2(%arg0: i32) -> (i32, i32) {
    %c0_i32 = arith.constant 0 : i32
    %c0_i32_0 = arith.constant 0 : i32
    %c0_i32_1 = arith.constant 0 : i32
    return %c0_i32, %c0_i32_0 : i32, i32
  }
  func.func @transform_3(%arg0: i32) -> (i32, i32) {
    %c0_i32 = arith.constant 0 : i32
    %c0_i32_0 = arith.constant 0 : i32
    %c0_i32_1 = arith.constant 0 : i32
    return %c0_i32, %c0_i32_0 : i32, i32
  }
  func.func @transform_4(%arg0: i32) -> (i32, i32) {
    %c0_i32 = arith.constant 0 : i32
    %c0_i32_0 = arith.constant 0 : i32
    %c0_i32_1 = arith.constant 0 : i32
    return %c0_i32, %c0_i32_0 : i32, i32
  }
  func.func @transform_5(%arg0: i32) -> (i32, i32) {
    %c0_i32 = arith.constant 0 : i32
    %c0_i32_0 = arith.constant 0 : i32
    %c0_i32_1 = arith.constant 0 : i32
    return %c0_i32, %c0_i32_0 : i32, i32
  }
  func.func @transform_6(%arg0: i32) -> (i32, i32) {
    %c0_i32 = arith.constant 0 : i32
    %c0_i32_0 = arith.constant 0 : i32
    %c0_i32_1 = arith.constant 0 : i32
    return %c0_i32, %c0_i32_0 : i32, i32
  }
  func.func @transform_7(%arg0: i32) -> (i32, i32) {
    %c0_i32 = arith.constant 0 : i32
    %c0_i32_0 = arith.constant 0 : i32
    %c0_i32_1 = arith.constant 0 : i32
    return %c0_i32, %c0_i32_0 : i32, i32
  }
  func.func @transform_8(%arg0: i32) -> (i32, i32) {
    %c0_i32 = arith.constant 0 : i32
    %c0_i32_0 = arith.constant 0 : i32
    %c0_i32_1 = arith.constant 0 : i32
    return %c0_i32, %c0_i32_0 : i32, i32
  }
  func.func @transform_9(%arg0: i32) -> (i32, i32) {
    %c0_i32 = arith.constant 0 : i32
    %c0_i32_0 = arith.constant 0 : i32
    %c0_i32_1 = arith.constant 0 : i32
    return %c0_i32, %c0_i32_0 : i32, i32
  }
  func.func @transform_10(%arg0: i32) -> (i32, i32) {
    %c0_i32 = arith.constant 0 : i32
    %c0_i32_0 = arith.constant 0 : i32
    %c0_i32_1 = arith.constant 0 : i32
    return %c0_i32, %c0_i32_0 : i32, i32
  }
  func.func @transform_11(%arg0: i32) -> (i32, i32) {
    %c0_i32 = arith.constant 0 : i32
    %c0_i32_0 = arith.constant 0 : i32
    %c0_i32_1 = arith.constant 0 : i32
    return %c0_i32, %c0_i32_0 : i32, i32
  }
  func.func @transform_12(%arg0: i32) -> (i32, i32) {
    %c0_i32 = arith.constant 0 : i32
    %c0_i32_0 = arith.constant 0 : i32
    %c0_i32_1 = arith.constant 0 : i32
    return %c0_i32, %c0_i32_0 : i32, i32
  }
  func.func @transform_13(%arg0: i32) -> (i32, i32) {
    %c0_i32 = arith.constant 0 : i32
    %c0_i32_0 = arith.constant 0 : i32
    %c0_i32_1 = arith.constant 0 : i32
    return %c0_i32, %c0_i32_0 : i32, i32
  }
  func.func @transform_14(%arg0: i32) -> (i32, i32, i32) {
    %c0_i32 = arith.constant 0 : i32
    %c0_i32_0 = arith.constant 0 : i32
    %c0_i32_1 = arith.constant 0 : i32
    return %arg0, %c0_i32, %c0_i32_0 : i32, i32, i32
  }
}

</mosaic_0001>

<llo_original>
// kernel: tpu_custom_call.1
$region0: #{tpu_custom_call.1}
  #allocation0 [shape = 'u32[]', space=smem, size = 0x4, offset = 0x4, fixed_abs, tag = 'smem constant byte address 0x4 - core index']
  #allocation1 [shape = 'u32[72,128]{1,0:T(1,128)}', space=vmem, size = 0x9000, scoped, tag = 'internal scratch']
  %s0 = inlined_call_operand.vmem [shape: f32[2,64,16], index: 0, kind: input, shape index: {}]
  %s1 = inlined_call_operand.vmem [shape: f32[64,16], index: 1, kind: input, shape index: {}]
  %s2 = inlined_call_operand.vmem [shape: f32[64,1], index: 2, kind: input, shape index: {}]
  %s3 = inlined_call_operand.vmem [shape: f32[64,1], index: 3, kind: input, shape index: {}]
  %s4 = inlined_call_operand.vmem [shape: bf16[192,64], index: 4, kind: input, shape index: {}]
  %s5 = inlined_call_operand.vmem [shape: f32[192,1], index: 5, kind: input, shape index: {}]
  %s6 = inlined_call_operand.vmem [shape: bf16[64,64], index: 6, kind: input, shape index: {}]
  %s7 = inlined_call_operand.vmem [shape: f32[64,1], index: 7, kind: input, shape index: {}]
  %s8 = inlined_call_operand.vmem [shape: f32[64,1], index: 8, kind: input, shape index: {}]
  %s9 = inlined_call_operand.vmem [shape: f32[64,1], index: 9, kind: input, shape index: {}]
  %s10 = inlined_call_operand.vmem [shape: bf16[128,64], index: 10, kind: input, shape index: {}]
  %s11 = inlined_call_operand.vmem [shape: f32[128,5], index: 11, kind: input, shape index: {}]
  %s12 = inlined_call_operand.vmem [shape: f32[128,1], index: 12, kind: input, shape index: {}]
  %s13 = inlined_call_operand.vmem [shape: bf16[64,128], index: 13, kind: input, shape index: {}]
  %s14 = inlined_call_operand.vmem [shape: f32[2,64,16], index: 14, kind: output, shape index: {}]
  %s15 = sld [smem:[#allocation0]]
  $region89: #{tpu_custom_call.1} parent=0
    _
  %s17 = ssub.s32 1, %s15
  %s18 = scalar_select 0, %s17, %s15
  loop: start=0, step=1, limit=4
  $region2: #{tpu_custom_call.1} parent=0 // loop_pre_header
    _
  $region3: #{tpu_custom_call.1} parent=0 // loop_header
    %s20 = sphi 0, %s24
    %p21 = scmp.ge.s32.totalorder %s20, 4
    %s30 = sphi 0, %s32
    %s33 = sphi 0, %s30
    %s34 = sphi 0, %s33
    %s50 = sphi 0, %s34
    %s54 = sphi 0, %s54
    %s56 = sphi 0, %s54
    %s57 = sphi 0, %s56
    %s71 = sphi 0, %s57
    %s75 = sphi 0, %s75
    %s77 = sphi 0, %s75
    %s78 = sphi 0, %s77
    %s92 = sphi 0, %s78
    %s96 = sphi 0, %s96
    %s98 = sphi 0, %s96
    %s99 = sphi 0, %s98
    %s113 = sphi 0, %s99
    %s117 = sphi 0, %s117
    %s119 = sphi 0, %s117
    %s120 = sphi 0, %s119
    %s134 = sphi 0, %s120
    %s138 = sphi 0, %s138
    %s140 = sphi 0, %s138
    %s141 = sphi 0, %s140
    %s155 = sphi 0, %s141
    %s159 = sphi 0, %s159
    %s161 = sphi 0, %s159
    %s162 = sphi 0, %s161
    %s176 = sphi 0, %s162
    %s180 = sphi 0, %s180
    %s182 = sphi 0, %s180
    %s183 = sphi 0, %s182
    %s197 = sphi 0, %s183
    %s201 = sphi 0, %s201
    %s203 = sphi 0, %s201
    %s204 = sphi 0, %s203
    %s218 = sphi 0, %s204
    %s222 = sphi 0, %s222
    %s224 = sphi 0, %s222
    %s225 = sphi 0, %s224
    %s239 = sphi 0, %s225
    %s243 = sphi 0, %s243
    %s245 = sphi 0, %s243
    %s246 = sphi 0, %s245
    %s260 = sphi 0, %s246
    %s264 = sphi 0, %s264
    %s266 = sphi 0, %s264
    %s267 = sphi 0, %s266
    %s281 = sphi 0, %s267
    %s285 = sphi 0, %s285
    %s287 = sphi 0, %s285
    %s288 = sphi 0, %s287
    %s302 = sphi 0, %s288
    %s306 = sphi 0, %s306
    %s308 = sphi 0, %s306
    %s309 = sphi 0, %s308
    %s323 = sphi 0, %s309
    %s329 = sphi 0, %s331
    %s332 = sphi 0, %s329
    %s333 = sphi 0, %s332
    %s349 = sphi 0, %s333
  $region4: #{tpu_custom_call.1} parent=0 // loop_header_branch
    %23 = sbr.rel (%p21) target = $region8
  $region5: #{tpu_custom_call.1} parent=0 // loop_body
    %s25 = ssub.s32 %s20, 1
    %s26 = ssub.s32 %s20, 2
    %s27 = sadd.s32 %s20, 1
    %s28 = ssub.s32 %s20, %s27
    %p29 = scmp.eq.s32.totalorder %s28, 0
    %s31 = sadd.s32 %s30, 1
    %s32 = scalar_select %p29, %s30, %s31
    %p35 = pneg %p29
    %p36 = scmp.eq.s32.totalorder %s20, 1
    %p37 = por %p35, %p36
    %p38 = scmp.ne.s32.totalorder %s30, %s33
    %p39 = scmp.eq.s32.totalorder %s20, 0
    %p40 = por %p38, %p39
    %p41 = scmp.ne.s32.totalorder %s30, %s33
    %p42 = scmp.eq.s32.totalorder %s25, 1
    %p43 = por %p41, %p42
    %p44 = scmp.ne.s32.totalorder %s33, %s34
    %p45 = scmp.eq.s32.totalorder %s25, 0
    %p46 = por %p44, %p45
    %p47 = scmp.ne.s32.totalorder %s33, %s34
    %p48 = scmp.eq.s32.totalorder %s26, 1
    %p49 = por %p47, %p48
    %p51 = scmp.ne.s32.totalorder %s34, %s50
    %p52 = scmp.eq.s32.totalorder %s26, 0
    %p53 = por %p51, %p52
    %s55 = sadd.s32 %s54, 1
    %p58 = scmp.eq.s32.totalorder %s20, 1
    %p59 = scmp.ne.s32.totalorder %s54, %s56
    %p60 = scmp.eq.s32.totalorder %s20, 0
    %p61 = por %p59, %p60
    %p62 = scmp.ne.s32.totalorder %s54, %s56
    %p63 = scmp.eq.s32.totalorder %s25, 1
    %p64 = por %p62, %p63
    %p65 = scmp.ne.s32.totalorder %s56, %s57
    %p66 = scmp.eq.s32.totalorder %s25, 0
    %p67 = por %p65, %p66
    %p68 = scmp.ne.s32.totalorder %s56, %s57
    %p69 = scmp.eq.s32.totalorder %s26, 1
    %p70 = por %p68, %p69
    %p72 = scmp.ne.s32.totalorder %s57, %s71
    %p73 = scmp.eq.s32.totalorder %s26, 0
    %p74 = por %p72, %p73
    %s76 = sadd.s32 %s75, 1
    %p79 = scmp.eq.s32.totalorder %s20, 1
    %p80 = scmp.ne.s32.totalorder %s75, %s77
    %p81 = scmp.eq.s32.totalorder %s20, 0
    %p82 = por %p80, %p81
    %p83 = scmp.ne.s32.totalorder %s75, %s77
    %p84 = scmp.eq.s32.totalorder %s25, 1
    %p85 = por %p83, %p84
    %p86 = scmp.ne.s32.totalorder %s77, %s78
    %p87 = scmp.eq.s32.totalorder %s25, 0
    %p88 = por %p86, %p87
    %p89 = scmp.ne.s32.totalorder %s77, %s78
    %p90 = scmp.eq.s32.totalorder %s26, 1
    %p91 = por %p89, %p90
    %p93 = scmp.ne.s32.totalorder %s78, %s92
    %p94 = scmp.eq.s32.totalorder %s26, 0
    %p95 = por %p93, %p94
    %s97 = sadd.s32 %s96, 1
    %p100 = scmp.eq.s32.totalorder %s20, 1
    %p101 = scmp.ne.s32.totalorder %s96, %s98
    %p102 = scmp.eq.s32.totalorder %s20, 0
    %p103 = por %p101, %p102
    %p104 = scmp.ne.s32.totalorder %s96, %s98
    %p105 = scmp.eq.s32.totalorder %s25, 1
    %p106 = por %p104, %p105
    %p107 = scmp.ne.s32.totalorder %s98, %s99
    %p108 = scmp.eq.s32.totalorder %s25, 0
    %p109 = por %p107, %p108
    %p110 = scmp.ne.s32.totalorder %s98, %s99
    %p111 = scmp.eq.s32.totalorder %s26, 1
    %p112 = por %p110, %p111
    %p114 = scmp.ne.s32.totalorder %s99, %s113
    %p115 = scmp.eq.s32.totalorder %s26, 0
    %p116 = por %p114, %p115
    %s118 = sadd.s32 %s117, 1
    %p121 = scmp.eq.s32.totalorder %s20, 1
    %p122 = scmp.ne.s32.totalorder %s117, %s119
    %p123 = scmp.eq.s32.totalorder %s20, 0
    %p124 = por %p122, %p123
    %p125 = scmp.ne.s32.totalorder %s117, %s119
    %p126 = scmp.eq.s32.totalorder %s25, 1
    %p127 = por %p125, %p126
    %p128 = scmp.ne.s32.totalorder %s119, %s120
    %p129 = scmp.eq.s32.totalorder %s25, 0
    %p130 = por %p128, %p129
    %p131 = scmp.ne.s32.totalorder %s119, %s120
    %p132 = scmp.eq.s32.totalorder %s26, 1
    %p133 = por %p131, %p132
    %p135 = scmp.ne.s32.totalorder %s120, %s134
    %p136 = scmp.eq.s32.totalorder %s26, 0
    %p137 = por %p135, %p136
    %s139 = sadd.s32 %s138, 1
    %p142 = scmp.eq.s32.totalorder %s20, 1
    %p143 = scmp.ne.s32.totalorder %s138, %s140
    %p144 = scmp.eq.s32.totalorder %s20, 0
    %p145 = por %p143, %p144
    %p146 = scmp.ne.s32.totalorder %s138, %s140
    %p147 = scmp.eq.s32.totalorder %s25, 1
    %p148 = por %p146, %p147
    %p149 = scmp.ne.s32.totalorder %s140, %s141
    %p150 = scmp.eq.s32.totalorder %s25, 0
    %p151 = por %p149, %p150
    %p152 = scmp.ne.s32.totalorder %s140, %s141
    %p153 = scmp.eq.s32.totalorder %s26, 1
    %p154 = por %p152, %p153
    %p156 = scmp.ne.s32.totalorder %s141, %s155
    %p157 = scmp.eq.s32.totalorder %s26, 0
    %p158 = por %p156, %p157
    %s160 = sadd.s32 %s159, 1
    %p163 = scmp.eq.s32.totalorder %s20, 1
    %p164 = scmp.ne.s32.totalorder %s159, %s161
    %p165 = scmp.eq.s32.totalorder %s20, 0
    %p166 = por %p164, %p165
    %p167 = scmp.ne.s32.totalorder %s159, %s161
    %p168 = scmp.eq.s32.totalorder %s25, 1
    %p169 = por %p167, %p168
    %p170 = scmp.ne.s32.totalorder %s161, %s162
    %p171 = scmp.eq.s32.totalorder %s25, 0
    %p172 = por %p170, %p171
    %p173 = scmp.ne.s32.totalorder %s161, %s162
    %p174 = scmp.eq.s32.totalorder %s26, 1
    %p175 = por %p173, %p174
    %p177 = scmp.ne.s32.totalorder %s162, %s176
    %p178 = scmp.eq.s32.totalorder %s26, 0
    %p179 = por %p177, %p178
    %s181 = sadd.s32 %s180, 1
    %p184 = scmp.eq.s32.totalorder %s20, 1
    %p185 = scmp.ne.s32.totalorder %s180, %s182
    %p186 = scmp.eq.s32.totalorder %s20, 0
    %p187 = por %p185, %p186
    %p188 = scmp.ne.s32.totalorder %s180, %s182
    %p189 = scmp.eq.s32.totalorder %s25, 1
    %p190 = por %p188, %p189
    %p191 = scmp.ne.s32.totalorder %s182, %s183
    %p192 = scmp.eq.s32.totalorder %s25, 0
    %p193 = por %p191, %p192
    %p194 = scmp.ne.s32.totalorder %s182, %s183
    %p195 = scmp.eq.s32.totalorder %s26, 1
    %p196 = por %p194, %p195
    %p198 = scmp.ne.s32.totalorder %s183, %s197
    %p199 = scmp.eq.s32.totalorder %s26, 0
    %p200 = por %p198, %p199
    %s202 = sadd.s32 %s201, 1
    %p205 = scmp.eq.s32.totalorder %s20, 1
    %p206 = scmp.ne.s32.totalorder %s201, %s203
    %p207 = scmp.eq.s32.totalorder %s20, 0
    %p208 = por %p206, %p207
    %p209 = scmp.ne.s32.totalorder %s201, %s203
    %p210 = scmp.eq.s32.totalorder %s25, 1
    %p211 = por %p209, %p210
    %p212 = scmp.ne.s32.totalorder %s203, %s204
    %p213 = scmp.eq.s32.totalorder %s25, 0
    %p214 = por %p212, %p213
    %p215 = scmp.ne.s32.totalorder %s203, %s204
    %p216 = scmp.eq.s32.totalorder %s26, 1
    %p217 = por %p215, %p216
    %p219 = scmp.ne.s32.totalorder %s204, %s218
    %p220 = scmp.eq.s32.totalorder %s26, 0
    %p221 = por %p219, %p220
    %s223 = sadd.s32 %s222, 1
    %p226 = scmp.eq.s32.totalorder %s20, 1
    %p227 = scmp.ne.s32.totalorder %s222, %s224
    %p228 = scmp.eq.s32.totalorder %s20, 0
    %p229 = por %p227, %p228
    %p230 = scmp.ne.s32.totalorder %s222, %s224
    %p231 = scmp.eq.s32.totalorder %s25, 1
    %p232 = por %p230, %p231
    %p233 = scmp.ne.s32.totalorder %s224, %s225
    %p234 = scmp.eq.s32.totalorder %s25, 0
    %p235 = por %p233, %p234
    %p236 = scmp.ne.s32.totalorder %s224, %s225
    %p237 = scmp.eq.s32.totalorder %s26, 1
    %p238 = por %p236, %p237
    %p240 = scmp.ne.s32.totalorder %s225, %s239
    %p241 = scmp.eq.s32.totalorder %s26, 0
    %p242 = por %p240, %p241
    %s244 = sadd.s32 %s243, 1
    %p247 = scmp.eq.s32.totalorder %s20, 1
    %p248 = scmp.ne.s32.totalorder %s243, %s245
    %p249 = scmp.eq.s32.totalorder %s20, 0
    %p250 = por %p248, %p249
    %p251 = scmp.ne.s32.totalorder %s243, %s245
    %p252 = scmp.eq.s32.totalorder %s25, 1
    %p253 = por %p251, %p252
    %p254 = scmp.ne.s32.totalorder %s245, %s246
    %p255 = scmp.eq.s32.totalorder %s25, 0
    %p256 = por %p254, %p255
    %p257 = scmp.ne.s32.totalorder %s245, %s246
    %p258 = scmp.eq.s32.totalorder %s26, 1
    %p259 = por %p257, %p258
    %p261 = scmp.ne.s32.totalorder %s246, %s260
    %p262 = scmp.eq.s32.totalorder %s26, 0
    %p263 = por %p261, %p262
    %s265 = sadd.s32 %s264, 1
    %p268 = scmp.eq.s32.totalorder %s20, 1
    %p269 = scmp.ne.s32.totalorder %s264, %s266
    %p270 = scmp.eq.s32.totalorder %s20, 0
    %p271 = por %p269, %p270
    %p272 = scmp.ne.s32.totalorder %s264, %s266
    %p273 = scmp.eq.s32.totalorder %s25, 1
    %p274 = por %p272, %p273
    %p275 = scmp.ne.s32.totalorder %s266, %s267
    %p276 = scmp.eq.s32.totalorder %s25, 0
    %p277 = por %p275, %p276
    %p278 = scmp.ne.s32.totalorder %s266, %s267
    %p279 = scmp.eq.s32.totalorder %s26, 1
    %p280 = por %p278, %p279
    %p282 = scmp.ne.s32.totalorder %s267, %s281
    %p283 = scmp.eq.s32.totalorder %s26, 0
    %p284 = por %p282, %p283
    %s286 = sadd.s32 %s285, 1
    %p289 = scmp.eq.s32.totalorder %s20, 1
    %p290 = scmp.ne.s32.totalorder %s285, %s287
    %p291 = scmp.eq.s32.totalorder %s20, 0
    %p292 = por %p290, %p291
    %p293 = scmp.ne.s32.totalorder %s285, %s287
    %p294 = scmp.eq.s32.totalorder %s25, 1
    %p295 = por %p293, %p294
    %p296 = scmp.ne.s32.totalorder %s287, %s288
    %p297 = scmp.eq.s32.totalorder %s25, 0
    %p298 = por %p296, %p297
    %p299 = scmp.ne.s32.totalorder %s287, %s288
    %p300 = scmp.eq.s32.totalorder %s26, 1
    %p301 = por %p299, %p300
    %p303 = scmp.ne.s32.totalorder %s288, %s302
    %p304 = scmp.eq.s32.totalorder %s26, 0
    %p305 = por %p303, %p304
    %s307 = sadd.s32 %s306, 1
    %p310 = scmp.eq.s32.totalorder %s20, 1
    %p311 = scmp.ne.s32.totalorder %s306, %s308
    %p312 = scmp.eq.s32.totalorder %s20, 0
    %p313 = por %p311, %p312
    %p314 = scmp.ne.s32.totalorder %s306, %s308
    %p315 = scmp.eq.s32.totalorder %s25, 1
    %p316 = por %p314, %p315
    %p317 = scmp.ne.s32.totalorder %s308, %s309
    %p318 = scmp.eq.s32.totalorder %s25, 0
    %p319 = por %p317, %p318
    %p320 = scmp.ne.s32.totalorder %s308, %s309
    %p321 = scmp.eq.s32.totalorder %s26, 1
    %p322 = por %p320, %p321
    %p324 = scmp.ne.s32.totalorder %s309, %s323
    %p325 = scmp.eq.s32.totalorder %s26, 0
    %p326 = por %p324, %p325
    %s327 = ssub.s32 %s20, %s27
    %p328 = scmp.eq.s32.totalorder %s327, 0
    %s330 = sadd.s32 %s329, 1
    %s331 = scalar_select %p328, %s329, %s330
    %p334 = pneg %p328
    %p335 = scmp.eq.s32.totalorder %s20, 1
    %p336 = por %p334, %p335
    %p337 = scmp.ne.s32.totalorder %s329, %s332
    %p338 = scmp.eq.s32.totalorder %s20, 0
    %p339 = por %p337, %p338
    %p340 = scmp.ne.s32.totalorder %s329, %s332
    %p341 = scmp.eq.s32.totalorder %s25, 1
    %p342 = por %p340, %p341
    %p343 = scmp.ne.s32.totalorder %s332, %s333
    %p344 = scmp.eq.s32.totalorder %s25, 0
    %p345 = por %p343, %p344
    %p346 = scmp.ne.s32.totalorder %s332, %s333
    %p347 = scmp.eq.s32.totalorder %s26, 1
    %p348 = por %p346, %p347
    %p350 = scmp.ne.s32.totalorder %s333, %s349
    %p351 = scmp.eq.s32.totalorder %s26, 0
    %p352 = por %p350, %p351
    %p353 = scmp.le.s32.totalorder 1, %s20
    %p354 = scmp.lt.s32.totalorder %s20, 3
    %p355 = pnand %p353, %p354
    %p356 = pneg %p355
    // Predicated region
    $region9: #{tpu_custom_call.1} parent=5 // pred_check
      _
    $region10: #{tpu_custom_call.1} parent=5 // pred_check_branch
      %358 = sbr.rel (%p355) target = $region12
    $region11: #{tpu_custom_call.1} parent=5 // pred_region
      %s359 = ssub.s32 %s20, 1
      // Predicated region
      $region13: #{tpu_custom_call.1} parent=11 // pred_check
        %p360 = pneg %p67
      $region14: #{tpu_custom_call.1} parent=11 // pred_check_branch
        %362 = sbr.rel (%p360) target = $region16
      $region15: #{tpu_custom_call.1} parent=11 // pred_region
        _
      $region16: #{tpu_custom_call.1} parent=11 // pred_fallthru
        _
      // Predicated region
      $region17: #{tpu_custom_call.1} parent=11 // pred_check
        %p363 = pneg %p88
      $region18: #{tpu_custom_call.1} parent=11 // pred_check_branch
        %365 = sbr.rel (%p363) target = $region20
      $region19: #{tpu_custom_call.1} parent=11 // pred_region
        _
      $region20: #{tpu_custom_call.1} parent=11 // pred_fallthru
        _
      // Predicated region
      $region21: #{tpu_custom_call.1} parent=11 // pred_check
        %p366 = pneg %p109
      $region22: #{tpu_custom_call.1} parent=11 // pred_check_branch
        %368 = sbr.rel (%p366) target = $region24
      $region23: #{tpu_custom_call.1} parent=11 // pred_region
        _
      $region24: #{tpu_custom_call.1} parent=11 // pred_fallthru
        _
      // Predicated region
      $region25: #{tpu_custom_call.1} parent=11 // pred_check
        %p369 = pneg %p130
      $region26: #{tpu_custom_call.1} parent=11 // pred_check_branch
        %371 = sbr.rel (%p369) target = $region28
      $region27: #{tpu_custom_call.1} parent=11 // pred_region
        _
      $region28: #{tpu_custom_call.1} parent=11 // pred_fallthru
        _
      // Predicated region
      $region29: #{tpu_custom_call.1} parent=11 // pred_check
        %p372 = pneg %p151
      $region30: #{tpu_custom_call.1} parent=11 // pred_check_branch
        %374 = sbr.rel (%p372) target = $region32
      $region31: #{tpu_custom_call.1} parent=11 // pred_region
        _
      $region32: #{tpu_custom_call.1} parent=11 // pred_fallthru
        _
      // Predicated region
      $region33: #{tpu_custom_call.1} parent=11 // pred_check
        %p375 = pneg %p172
      $region34: #{tpu_custom_call.1} parent=11 // pred_check_branch
        %377 = sbr.rel (%p375) target = $region36
      $region35: #{tpu_custom_call.1} parent=11 // pred_region
        _
      $region36: #{tpu_custom_call.1} parent=11 // pred_fallthru
        _
      // Predicated region
      $region37: #{tpu_custom_call.1} parent=11 // pred_check
        %p378 = pneg %p193
      $region38: #{tpu_custom_call.1} parent=11 // pred_check_branch
        %380 = sbr.rel (%p378) target = $region40
      $region39: #{tpu_custom_call.1} parent=11 // pred_region
        _
      $region40: #{tpu_custom_call.1} parent=11 // pred_fallthru
        _
      // Predicated region
      $region41: #{tpu_custom_call.1} parent=11 // pred_check
        %p381 = pneg %p214
      $region42: #{tpu_custom_call.1} parent=11 // pred_check_branch
        %383 = sbr.rel (%p381) target = $region44
      $region43: #{tpu_custom_call.1} parent=11 // pred_region
        _
      $region44: #{tpu_custom_call.1} parent=11 // pred_fallthru
        _
      // Predicated region
      $region45: #{tpu_custom_call.1} parent=11 // pred_check
        %p384 = pneg %p235
      $region46: #{tpu_custom_call.1} parent=11 // pred_check_branch
        %386 = sbr.rel (%p384) target = $region48
      $region47: #{tpu_custom_call.1} parent=11 // pred_region
        _
      $region48: #{tpu_custom_call.1} parent=11 // pred_fallthru
        _
      // Predicated region
      $region49: #{tpu_custom_call.1} parent=11 // pred_check
        %p387 = pneg %p256
      $region50: #{tpu_custom_call.1} parent=11 // pred_check_branch
        %389 = sbr.rel (%p387) target = $region52
      $region51: #{tpu_custom_call.1} parent=11 // pred_region
        _
      $region52: #{tpu_custom_call.1} parent=11 // pred_fallthru
        _
      // Predicated region
      $region53: #{tpu_custom_call.1} parent=11 // pred_check
        %p390 = pneg %p277
      $region54: #{tpu_custom_call.1} parent=11 // pred_check_branch
        %392 = sbr.rel (%p390) target = $region56
      $region55: #{tpu_custom_call.1} parent=11 // pred_region
        _
      $region56: #{tpu_custom_call.1} parent=11 // pred_fallthru
        _
      // Predicated region
      $region57: #{tpu_custom_call.1} parent=11 // pred_check
        %p393 = pneg %p298
      $region58: #{tpu_custom_call.1} parent=11 // pred_check_branch
        %395 = sbr.rel (%p393) target = $region60
      $region59: #{tpu_custom_call.1} parent=11 // pred_region
        _
      $region60: #{tpu_custom_call.1} parent=11 // pred_fallthru
        _
      // Predicated region
      $region61: #{tpu_custom_call.1} parent=11 // pred_check
        %p396 = pneg %p319
      $region62: #{tpu_custom_call.1} parent=11 // pred_check_branch
        %398 = sbr.rel (%p396) target = $region64
      $region63: #{tpu_custom_call.1} parent=11 // pred_region
        _
      $region64: #{tpu_custom_call.1} parent=11 // pred_fallthru
        _
    $region12: #{tpu_custom_call.1} parent=5 // pred_fallthru
      _
    %p399 = scmp.lt.s32.totalorder %s20, 2
    // Predicated region
    $region65: #{tpu_custom_call.1} parent=5 // pred_check
      %p400 = pneg %p399
    $region66: #{tpu_custom_call.1} parent=5 // pred_check_branch
      %402 = sbr.rel (%p400) target = $region68
    $region67: #{tpu_custom_call.1} parent=5 // pred_region
      // Predicated region
      $region69: #{tpu_custom_call.1} parent=67 // pred_check
        %p403 = pneg %p40
      $region70: #{tpu_custom_call.1} parent=67 // pred_check_branch
        %405 = sbr.rel (%p403) target = $region72
      $region71: #{tpu_custom_call.1} parent=67 // pred_region
        %p406 = scmp.lt.s32.totalorder %s20, 1
        %s407 = scalar_select %p406, %s20, 1
        %s408 = smul.addr %s407, 8
        %s409 = smul.addr %s408, 8
        %s410 = scalar_lea.vmem %s0, %s409
      $region72: #{tpu_custom_call.1} parent=67 // pred_fallthru
        _
    $region68: #{tpu_custom_call.1} parent=5 // pred_fallthru
      _
    %p411 = scmp.le.s32.totalorder 1, %s20
    %p412 = scmp.lt.s32.totalorder %s20, 3
    %p413 = pnand %p411, %p412
    %p414 = pneg %p413
    // Predicated region
    $region73: #{tpu_custom_call.1} parent=5 // pred_check
      _
    $region74: #{tpu_custom_call.1} parent=5 // pred_check_branch
      %416 = sbr.rel (%p413) target = $region76
    $region75: #{tpu_custom_call.1} parent=5 // pred_region
      %s417 = ssub.s32 %s20, 1
      %p418 = scmp.lt.s32.totalorder %s25, 1
      %s419 = scalar_select %p418, %s25, 1
      %s420 = smul.addr %s419, 8
      %s421 = smul.addr %s420, 8
      %s422 = scalar_lea.vmem %s0, %s421
      %p423 = pneg %p46
      %p424 = pneg %p43
      %p425 = pneg %p67
      %p426 = pneg %p64
      %p427 = pneg %p88
      %p428 = pneg %p85
      %p429 = pneg %p109
      %p430 = pneg %p106
      %p431 = pneg %p130
      %p432 = pneg %p127
      %p433 = pneg %p151
      %p434 = pneg %p148
      %p435 = pneg %p172
      %p436 = pneg %p169
      %p437 = pneg %p193
      %p438 = pneg %p190
      %p439 = pneg %p214
      %p440 = pneg %p211
      %p441 = pneg %p235
      %p442 = pneg %p232
      %p443 = pneg %p256
      %p444 = pneg %p253
      %p445 = pneg %p277
      %p446 = pneg %p274
      %p447 = pneg %p298
      %p448 = pneg %p295
      %p449 = pneg %p319
      %p450 = pneg %p316
      %p451 = pneg %p345
      %p452 = pneg %p342
      %p453 = scmp.lt.s32.totalorder %s25, 1
      %s454 = scalar_select %p453, %s25, 1
      %s455 = smul.addr %s454, 8
      %s456 = smul.addr %s455, 8
      %s457 = scalar_lea.vmem %s14, %s456
      %p458 = scmp.lt.s32.totalorder %s25, 1
      %s459 = scalar_select %p458, %s25, 1
      %s460 = smul.addr %s459, 8
      %s461 = smul.addr %s460, 8
      %s462 = scalar_lea.vmem %s0, %s461
      %p463 = scmp.lt.s32.totalorder %s25, 1
      %s464 = scalar_select %p463, %s25, 1
      %s465 = smul.addr %s464, 8
      %s466 = smul.addr %s465, 8
      %s467 = scalar_lea.vmem %s14, %s466
      %v469 = vld [vmem:[%s462] sm:$0xff]
      %v470 = vld [vmem:[%s462 + $0x8] sm:$0xff]
      %v471 = vld [vmem:[%s462 + $0x10] sm:$0xff]
      %v472 = vld [vmem:[%s462 + $0x18] sm:$0xff]
      %v473 = vld [vmem:[%s462 + $0x20] sm:$0xff]
      %v474 = vld [vmem:[%s462 + $0x28] sm:$0xff]
      %v475 = vld [vmem:[%s462 + $0x30] sm:$0xff]
      %v476 = vld [vmem:[%s462 + $0x38] sm:$0xff]
      %vm477 = vcmask 130048
      %v478 = vsel %vm477, %v469, 0.0
      %v479 = vsel %vm477, %v470, 0.0
      %v480 = vadd.f32 %v478, %v479
      %v481 = vsel %vm477, %v471, 0.0
      %v482 = vadd.f32 %v480, %v481
      %v483 = vsel %vm477, %v472, 0.0
      %v484 = vadd.f32 %v482, %v483
      %v485 = vsel %vm477, %v473, 0.0
      %v486 = vadd.f32 %v484, %v485
      %v487 = vsel %vm477, %v474, 0.0
      %v488 = vadd.f32 %v486, %v487
      %v489 = vsel %vm477, %v475, 0.0
      %v490 = vadd.f32 %v488, %v489
      %v491 = vsel %vm477, %v476, 0.0
      %v492 = vadd.f32 %v490, %v491
      %v493 = vrot.slane %v492, 4
      %v494 = vadd.f32 %v492, %v493
      %v495 = vrot.slane %v494, 2
      %v496 = vadd.f32 %v494, %v495
      %v497 = vrot.slane %v496, 1
      %v498 = vadd.f32 %v496, %v497
      %v499 = vrcp.pop 64.0
      %v500 = vmul.f32 64.0, %v499
      %v501 = vsub.f32 1.0, %v500
      %v502 = vmul.f32 %v499, %v501
      %v503 = vadd.f32 %v499, %v502
      %vm504 = vweird.f32 %v499
      %v505 = vsel %vm504, %v499, %v503
      %v506 = vmul.f32 %v498, %v505
      %v507 = vsub.f32 %v469, %v506
      %v508 = vsub.f32 %v470, %v506
      %v509 = vsub.f32 %v471, %v506
      %v510 = vsub.f32 %v472, %v506
      %v511 = vsub.f32 %v473, %v506
      %v512 = vsub.f32 %v474, %v506
      %v513 = vsub.f32 %v475, %v506
      %v514 = vsub.f32 %v476, %v506
      %v515 = vmul.f32 %v507, %v507
      %v516 = vmul.f32 %v508, %v508
      %v517 = vmul.f32 %v509, %v509
      %v518 = vmul.f32 %v510, %v510
      %v519 = vmul.f32 %v511, %v511
      %v520 = vmul.f32 %v512, %v512
      %v521 = vmul.f32 %v513, %v513
      %v522 = vmul.f32 %v514, %v514
      %v523 = vsel %vm477, %v515, 0.0
      %v524 = vsel %vm477, %v516, 0.0
      %v525 = vadd.f32 %v523, %v524
      %v526 = vsel %vm477, %v517, 0.0
      %v527 = vadd.f32 %v525, %v526
      %v528 = vsel %vm477, %v518, 0.0
      %v529 = vadd.f32 %v527, %v528
      %v530 = vsel %vm477, %v519, 0.0
      %v531 = vadd.f32 %v529, %v530
      %v532 = vsel %vm477, %v520, 0.0
      %v533 = vadd.f32 %v531, %v532
      %v534 = vsel %vm477, %v521, 0.0
      %v535 = vadd.f32 %v533, %v534
      %v536 = vsel %vm477, %v522, 0.0
      %v537 = vadd.f32 %v535, %v536
      %v538 = vrot.slane %v537, 4
      %v539 = vadd.f32 %v537, %v538
      %v540 = vrot.slane %v539, 2
      %v541 = vadd.f32 %v539, %v540
      %v542 = vrot.slane %v541, 1
      %v543 = vadd.f32 %v541, %v542
      %v544 = vmul.f32 %v543, %v505
      %v545 = vadd.f32 %v544, 1e-05
      %v546 = vrsqrt.pop %v545
      %v547 = vmul.f32 %v546, %v545
      %v548 = vmul.f32 %v547, %v546
      %v549 = vmul.f32 0.5, %v548
      %v550 = vsub.f32 1.5, %v549
      %v551 = vmul.f32 %v546, %v550
      %vm552 = vweird.f32 %v545
      %vm553 = vweird.f32 %v546
      %vm554 = vmor %vm552, %vm553
      %v555 = vsel %vm554, %v546, %v551
      %v556 = vmul.f32 %v507, %v555
      %v557 = vmul.f32 %v508, %v555
      %v558 = vmul.f32 %v509, %v555
      %v559 = vmul.f32 %v510, %v555
      %v560 = vmul.f32 %v511, %v555
      %v561 = vmul.f32 %v512, %v555
      %v562 = vmul.f32 %v513, %v555
      %v563 = vmul.f32 %v514, %v555
      %v564 = vld [vmem:[%s2] sm:$0xff]
      %v565 = vld [vmem:[%s2 + $0x8] sm:$0xff]
      %v566 = vld [vmem:[%s2 + $0x10] sm:$0xff]
      %v567 = vld [vmem:[%s2 + $0x18] sm:$0xff]
      %v568 = vld [vmem:[%s2 + $0x20] sm:$0xff]
      %v569 = vld [vmem:[%s2 + $0x28] sm:$0xff]
      %v570 = vld [vmem:[%s2 + $0x30] sm:$0xff]
      %v571 = vld [vmem:[%s2 + $0x38] sm:$0xff]
      %573 = vset.pattern.permute.xlu0 0
      %574 = vperm.xlu0 %573, %v564
      %v575 = vpop.permute.xlu0 %574
      %578 = vset.pattern.permute.xlu0 0
      %579 = vperm.xlu0 %578, %v565
      %v580 = vpop.permute.xlu0 %579
      %583 = vset.pattern.permute.xlu0 0
      %584 = vperm.xlu0 %583, %v566
      %v585 = vpop.permute.xlu0 %584
      %588 = vset.pattern.permute.xlu0 0
      %589 = vperm.xlu0 %588, %v567
      %v590 = vpop.permute.xlu0 %589
      %593 = vset.pattern.permute.xlu0 0
      %594 = vperm.xlu0 %593, %v568
      %v595 = vpop.permute.xlu0 %594
      %598 = vset.pattern.permute.xlu0 0
      %599 = vperm.xlu0 %598, %v569
      %v600 = vpop.permute.xlu0 %599
      %603 = vset.pattern.permute.xlu0 0
      %604 = vperm.xlu0 %603, %v570
      %v605 = vpop.permute.xlu0 %604
      %608 = vset.pattern.permute.xlu0 0
      %609 = vperm.xlu0 %608, %v571
      %v610 = vpop.permute.xlu0 %609
      %v612 = vmul.f32 %v556, %v575
      %v613 = vmul.f32 %v557, %v580
      %v614 = vmul.f32 %v558, %v585
      %v615 = vmul.f32 %v559, %v590
      %v616 = vmul.f32 %v560, %v595
      %v617 = vmul.f32 %v561, %v600
      %v618 = vmul.f32 %v562, %v605
      %v619 = vmul.f32 %v563, %v610
      %v620 = vld [vmem:[%s3] sm:$0xff]
      %v621 = vld [vmem:[%s3 + $0x8] sm:$0xff]
      %v622 = vld [vmem:[%s3 + $0x10] sm:$0xff]
      %v623 = vld [vmem:[%s3 + $0x18] sm:$0xff]
      %v624 = vld [vmem:[%s3 + $0x20] sm:$0xff]
      %v625 = vld [vmem:[%s3 + $0x28] sm:$0xff]
      %v626 = vld [vmem:[%s3 + $0x30] sm:$0xff]
      %v627 = vld [vmem:[%s3 + $0x38] sm:$0xff]
      %629 = vset.pattern.permute.xlu0 0
      %630 = vperm.xlu0 %629, %v620
      %v631 = vpop.permute.xlu0 %630
      %634 = vset.pattern.permute.xlu0 0
      %635 = vperm.xlu0 %634, %v621
      %v636 = vpop.permute.xlu0 %635
      %639 = vset.pattern.permute.xlu0 0
      %640 = vperm.xlu0 %639, %v622
      %v641 = vpop.permute.xlu0 %640
      %644 = vset.pattern.permute.xlu0 0
      %645 = vperm.xlu0 %644, %v623
      %v646 = vpop.permute.xlu0 %645
      %649 = vset.pattern.permute.xlu0 0
      %650 = vperm.xlu0 %649, %v624
      %v651 = vpop.permute.xlu0 %650
      %654 = vset.pattern.permute.xlu0 0
      %655 = vperm.xlu0 %654, %v625
      %v656 = vpop.permute.xlu0 %655
      %659 = vset.pattern.permute.xlu0 0
      %660 = vperm.xlu0 %659, %v626
      %v661 = vpop.permute.xlu0 %660
      %664 = vset.pattern.permute.xlu0 0
      %665 = vperm.xlu0 %664, %v627
      %v666 = vpop.permute.xlu0 %665
      %v668 = vadd.f32 %v612, %v631
      %v669 = vadd.f32 %v613, %v636
      %v670 = vadd.f32 %v614, %v641
      %v671 = vadd.f32 %v615, %v646
      %v672 = vadd.f32 %v616, %v651
      %v673 = vadd.f32 %v617, %v656
      %v674 = vadd.f32 %v618, %v661
      %v675 = vadd.f32 %v619, %v666
      %v676 = vld [vmem:[%s1] sm:$0xff]
      %v677 = vld [vmem:[%s1 + $0x8] sm:$0xff]
      %v678 = vld [vmem:[%s1 + $0x10] sm:$0xff]
      %v679 = vld [vmem:[%s1 + $0x18] sm:$0xff]
      %v680 = vld [vmem:[%s1 + $0x20] sm:$0xff]
      %v681 = vld [vmem:[%s1 + $0x28] sm:$0xff]
      %v682 = vld [vmem:[%s1 + $0x30] sm:$0xff]
      %v683 = vld [vmem:[%s1 + $0x38] sm:$0xff]
      %v684 = vadd.f32 %v668, %v676
      %v685 = vadd.f32 %v669, %v677
      %v686 = vadd.f32 %v670, %v678
      %v687 = vadd.f32 %v671, %v679
      %v688 = vadd.f32 %v672, %v680
      %v689 = vadd.f32 %v673, %v681
      %v690 = vadd.f32 %v674, %v682
      %v691 = vadd.f32 %v675, %v683
      %v692 = vld [vmem:[%s4] sm:$0xf]
      %v693 = vld [vmem:[%s4 + $0x4] sm:$0xf]
      %v694 = vld [vmem:[%s4 + $0x8] sm:$0xf]
      %v695 = vld [vmem:[%s4 + $0xc] sm:$0xf]
      %v696 = vld [vmem:[%s4 + $0x10] sm:$0xf]
      %v697 = vld [vmem:[%s4 + $0x14] sm:$0xf]
      %v698 = vld [vmem:[%s4 + $0x18] sm:$0xf]
      %v699 = vld [vmem:[%s4 + $0x1c] sm:$0xf]
      %v700 = vld [vmem:[%s4 + $0x20] sm:$0xf]
      %v701 = vld [vmem:[%s4 + $0x24] sm:$0xf]
      %v702 = vld [vmem:[%s4 + $0x28] sm:$0xf]
      %v703 = vld [vmem:[%s4 + $0x2c] sm:$0xf]
      %v704 = vld [vmem:[%s4 + $0x30] sm:$0xf]
      %v705 = vld [vmem:[%s4 + $0x34] sm:$0xf]
      %v706 = vld [vmem:[%s4 + $0x38] sm:$0xf]
      %v707 = vld [vmem:[%s4 + $0x3c] sm:$0xf]
      %v708 = vld [vmem:[%s4 + $0x40] sm:$0xf]
      %v709 = vld [vmem:[%s4 + $0x44] sm:$0xf]
      %v710 = vld [vmem:[%s4 + $0x48] sm:$0xf]
      %v711 = vld [vmem:[%s4 + $0x4c] sm:$0xf]
      %v712 = vld [vmem:[%s4 + $0x50] sm:$0xf]
      %v713 = vld [vmem:[%s4 + $0x54] sm:$0xf]
      %v714 = vld [vmem:[%s4 + $0x58] sm:$0xf]
      %v715 = vld [vmem:[%s4 + $0x5c] sm:$0xf]
      %v716 = vpack.c.bf16 %v685, %v684
      %v717 = vpack.c.bf16 %v687, %v686
      %v718 = vpack.c.bf16 %v689, %v688
      %v719 = vpack.c.bf16 %v691, %v690
      %v720 = vld [vmem:[%s5] sm:$0xff]
      %v721 = vld [vmem:[%s5 + $0x8] sm:$0xff]
      %v722 = vld [vmem:[%s5 + $0x10] sm:$0xff]
      %v723 = vld [vmem:[%s5 + $0x18] sm:$0xff]
      %v724 = vld [vmem:[%s5 + $0x20] sm:$0xff]
      %v725 = vld [vmem:[%s5 + $0x28] sm:$0xff]
      %v726 = vld [vmem:[%s5 + $0x30] sm:$0xff]
      %v727 = vld [vmem:[%s5 + $0x38] sm:$0xff]
      %v728 = vld [vmem:[%s5 + $0x40] sm:$0xff]
      %v729 = vld [vmem:[%s5 + $0x48] sm:$0xff]
      %v730 = vld [vmem:[%s5 + $0x50] sm:$0xff]
      %v731 = vld [vmem:[%s5 + $0x58] sm:$0xff]
      %v732 = vld [vmem:[%s5 + $0x60] sm:$0xff]
      %v733 = vld [vmem:[%s5 + $0x68] sm:$0xff]
      %v734 = vld [vmem:[%s5 + $0x70] sm:$0xff]
      %v735 = vld [vmem:[%s5 + $0x78] sm:$0xff]
      %v736 = vld [vmem:[%s5 + $0x80] sm:$0xff]
      %v737 = vld [vmem:[%s5 + $0x88] sm:$0xff]
      %v738 = vld [vmem:[%s5 + $0x90] sm:$0xff]
      %v739 = vld [vmem:[%s5 + $0x98] sm:$0xff]
      %v740 = vld [vmem:[%s5 + $0xa0] sm:$0xff]
      %v741 = vld [vmem:[%s5 + $0xa8] sm:$0xff]
      %v742 = vld [vmem:[%s5 + $0xb0] sm:$0xff]
      %v743 = vld [vmem:[%s5 + $0xb8] sm:$0xff]
      %745 = vset.pattern.permute.xlu0 0
      %746 = vperm.xlu0 %745, %v720
      %v747 = vpop.permute.xlu0 %746
      %750 = vset.pattern.permute.xlu0 0
      %751 = vperm.xlu0 %750, %v721
      %v752 = vpop.permute.xlu0 %751
      %755 = vset.pattern.permute.xlu0 0
      %756 = vperm.xlu0 %755, %v722
      %v757 = vpop.permute.xlu0 %756
      %760 = vset.pattern.permute.xlu0 0
      %761 = vperm.xlu0 %760, %v723
      %v762 = vpop.permute.xlu0 %761
      %765 = vset.pattern.permute.xlu0 0
      %766 = vperm.xlu0 %765, %v724
      %v767 = vpop.permute.xlu0 %766
      %770 = vset.pattern.permute.xlu0 0
      %771 = vperm.xlu0 %770, %v725
      %v772 = vpop.permute.xlu0 %771
      %775 = vset.pattern.permute.xlu0 0
      %776 = vperm.xlu0 %775, %v726
      %v777 = vpop.permute.xlu0 %776
      %780 = vset.pattern.permute.xlu0 0
      %781 = vperm.xlu0 %780, %v727
      %v782 = vpop.permute.xlu0 %781
      %785 = vset.pattern.permute.xlu0 0
      %786 = vperm.xlu0 %785, %v728
      %v787 = vpop.permute.xlu0 %786
      %790 = vset.pattern.permute.xlu0 0
      %791 = vperm.xlu0 %790, %v729
      %v792 = vpop.permute.xlu0 %791
      %795 = vset.pattern.permute.xlu0 0
      %796 = vperm.xlu0 %795, %v730
      %v797 = vpop.permute.xlu0 %796
      %800 = vset.pattern.permute.xlu0 0
      %801 = vperm.xlu0 %800, %v731
      %v802 = vpop.permute.xlu0 %801
      %805 = vset.pattern.permute.xlu0 0
      %806 = vperm.xlu0 %805, %v732
      %v807 = vpop.permute.xlu0 %806
      %810 = vset.pattern.permute.xlu0 0
      %811 = vperm.xlu0 %810, %v733
      %v812 = vpop.permute.xlu0 %811
      %815 = vset.pattern.permute.xlu0 0
      %816 = vperm.xlu0 %815, %v734
      %v817 = vpop.permute.xlu0 %816
      %820 = vset.pattern.permute.xlu0 0
      %821 = vperm.xlu0 %820, %v735
      %v822 = vpop.permute.xlu0 %821
      %825 = vset.pattern.permute.xlu0 0
      %826 = vperm.xlu0 %825, %v736
      %v827 = vpop.permute.xlu0 %826
      %830 = vset.pattern.permute.xlu0 0
      %831 = vperm.xlu0 %830, %v737
      %v832 = vpop.permute.xlu0 %831
      %835 = vset.pattern.permute.xlu0 0
      %836 = vperm.xlu0 %835, %v738
      %v837 = vpop.permute.xlu0 %836
      %840 = vset.pattern.permute.xlu0 0
      %841 = vperm.xlu0 %840, %v739
      %v842 = vpop.permute.xlu0 %841
      %845 = vset.pattern.permute.xlu0 0
      %846 = vperm.xlu0 %845, %v740
      %v847 = vpop.permute.xlu0 %846
      %850 = vset.pattern.permute.xlu0 0
      %851 = vperm.xlu0 %850, %v741
      %v852 = vpop.permute.xlu0 %851
      %855 = vset.pattern.permute.xlu0 0
      %856 = vperm.xlu0 %855, %v742
      %v857 = vpop.permute.xlu0 %856
      %860 = vset.pattern.permute.xlu0 0
      %861 = vperm.xlu0 %860, %v743
      %v862 = vpop.permute.xlu0 %861
      %v888 = vunpack.c.l.b16 %v692
      %v889 = vunpack.c.l.b16 %v693
      %v890 = vunpack.c.l.b16 %v694
      %v891 = vunpack.c.l.b16 %v695
      %v892 = vunpack.c.l.b16 %v696
      %v893 = vunpack.c.l.b16 %v697
      %v894 = vunpack.c.l.b16 %v698
      %v895 = vunpack.c.l.b16 %v699
      %v896 = vunpack.c.l.b16 %v700
      %v897 = vunpack.c.l.b16 %v701
      %v898 = vunpack.c.l.b16 %v702
      %v899 = vunpack.c.l.b16 %v703
      %v900 = vunpack.c.l.b16 %v704
      %v901 = vunpack.c.l.b16 %v705
      %v902 = vunpack.c.l.b16 %v706
      %v903 = vunpack.c.l.b16 %v707
      %v904 = vunpack.c.l.b16 %v708
      %v905 = vunpack.c.l.b16 %v709
      %v906 = vunpack.c.l.b16 %v710
      %v907 = vunpack.c.l.b16 %v711
      %v908 = vunpack.c.l.b16 %v712
      %v909 = vunpack.c.l.b16 %v713
      %v910 = vunpack.c.l.b16 %v714
      %v911 = vunpack.c.l.b16 %v715
      %v912 = vpack.c.b16 %v889, %v888
      %v913 = vpack.c.b16 %v891, %v890
      %v914 = vpack.c.b16 %v893, %v892
      %v915 = vpack.c.b16 %v895, %v894
      %v916 = vpack.c.b16 %v897, %v896
      %v917 = vpack.c.b16 %v899, %v898
      %v918 = vpack.c.b16 %v901, %v900
      %v919 = vpack.c.b16 %v903, %v902
      %v920 = vpack.c.b16 %v905, %v904
      %v921 = vpack.c.b16 %v907, %v906
      %v922 = vpack.c.b16 %v909, %v908
      %v923 = vpack.c.b16 %v911, %v910
      %vm924 = vcmask 523264
      %v926 = vsel %vm924, %v912, 0
      %v929 = vsel %vm924, %v913, 0
      %v932 = vsel %vm924, %v914, 0
      %v935 = vsel %vm924, %v915, 0
      %v938 = vsel %vm924, %v916, 0
      %v941 = vsel %vm924, %v917, 0
      %v944 = vsel %vm924, %v918, 0
      %v947 = vsel %vm924, %v919, 0
      %v950 = vsel %vm924, %v920, 0
      %v953 = vsel %vm924, %v921, 0
      %v956 = vsel %vm924, %v922, 0
      %v959 = vsel %vm924, %v923, 0
      %961 = vmatpush.bf16.msra.mxu0 0
      %962 = vmatpush.bf16.msra.mxu0 0
      %963 = vmatpush.bf16.msra.mxu0 0
      %964 = vmatpush.bf16.msra.mxu0 0
      %965 = vmatpush.bf16.msra.mxu0 %v719
      %966 = vmatpush.bf16.msra.mxu0 %v718
      %967 = vmatpush.bf16.msra.mxu0 %v717
      %968 = vmatpush.bf16.msra.mxu0 %v716
      %969 = vmatmul.bf16.gmra.mxu0 %v926
      %v970 = vpop.f32.mrf.mxu0
      %v971 = vadd.f32 %v747, %v970
      %v972 = vpop.f32.mrf.mxu0
      %v973 = vadd.f32 %v752, %v972
      %974 = vmatmul.bf16.gmra.mxu0 %v929
      %v975 = vpop.f32.mrf.mxu0
      %v976 = vadd.f32 %v757, %v975
      %v977 = vpop.f32.mrf.mxu0
      %v978 = vadd.f32 %v762, %v977
      %979 = vmatmul.bf16.gmra.mxu0 %v932
      %v980 = vpop.f32.mrf.mxu0
      %v981 = vadd.f32 %v767, %v980
      %v982 = vpop.f32.mrf.mxu0
      %v983 = vadd.f32 %v772, %v982
      %984 = vmatmul.bf16.gmra.mxu0 %v935
      %v985 = vpop.f32.mrf.mxu0
      %v986 = vadd.f32 %v777, %v985
      %v987 = vpop.f32.mrf.mxu0
      %v988 = vadd.f32 %v782, %v987
      %989 = vmatmul.bf16.gmra.mxu0 %v938
      %v990 = vpop.f32.mrf.mxu0
      %v991 = vadd.f32 %v787, %v990
      %v992 = vpop.f32.mrf.mxu0
      %v993 = vadd.f32 %v792, %v992
      %994 = vmatmul.bf16.gmra.mxu0 %v941
      %v995 = vpop.f32.mrf.mxu0
      %v996 = vadd.f32 %v797, %v995
      %v997 = vpop.f32.mrf.mxu0
      %v998 = vadd.f32 %v802, %v997
      %999 = vmatmul.bf16.gmra.mxu0 %v944
      %v1000 = vpop.f32.mrf.mxu0
      %v1001 = vadd.f32 %v807, %v1000
      %v1002 = vpop.f32.mrf.mxu0
      %v1003 = vadd.f32 %v812, %v1002
      %1004 = vmatmul.bf16.gmra.mxu0 %v947
      %v1005 = vpop.f32.mrf.mxu0
      %v1006 = vadd.f32 %v817, %v1005
      %v1007 = vpop.f32.mrf.mxu0
      %v1008 = vadd.f32 %v822, %v1007
      %1009 = vmatmul.bf16.gmra.mxu0 %v950
      %v1010 = vpop.f32.mrf.mxu0
      %v1011 = vadd.f32 %v827, %v1010
      %v1012 = vpop.f32.mrf.mxu0
      %v1013 = vadd.f32 %v832, %v1012
      %1014 = vmatmul.bf16.gmra.mxu0 %v953
      %v1015 = vpop.f32.mrf.mxu0
      %v1016 = vadd.f32 %v837, %v1015
      %v1017 = vpop.f32.mrf.mxu0
      %v1018 = vadd.f32 %v842, %v1017
      %1019 = vmatmul.bf16.gmra.mxu0 %v956
      %v1020 = vpop.f32.mrf.mxu0
      %v1021 = vadd.f32 %v847, %v1020
      %v1022 = vpop.f32.mrf.mxu0
      %v1023 = vadd.f32 %v852, %v1022
      %1024 = vmatmul.bf16.gmra.mxu0 %v959
      %v1025 = vpop.f32.mrf.mxu0
      %v1026 = vadd.f32 %v857, %v1025
      %v1027 = vpop.f32.mrf.mxu0
      %v1028 = vadd.f32 %v862, %v1027
      %1029 = vdwg.mxu0
      %v1030 = vmul.f32 %v971, 0.35355338
      %v1031 = vmul.f32 %v973, 0.35355338
      %v1032 = vmul.f32 %v976, 0.35355338
      %v1033 = vmul.f32 %v978, 0.35355338
      %v1034 = vmul.f32 %v981, 0.35355338
      %v1035 = vmul.f32 %v983, 0.35355338
      %v1036 = vmul.f32 %v986, 0.35355338
      %v1037 = vmul.f32 %v988, 0.35355338
      %1038 = vxpose.xlu0.b32.start [1/16] %v1030, 128
      %1039 = vxpose.xlu0.b32.cont [2/16] 0.0, 128
      %1040 = vxpose.xlu0.b32.cont [3/16] 0.0, 128
      %1041 = vxpose.xlu0.b32.cont [4/16] 0.0, 128
      %1042 = vxpose.xlu0.b32.cont [5/16] 0.0, 128
      %1043 = vxpose.xlu0.b32.cont [6/16] 0.0, 128
      %1044 = vxpose.xlu0.b32.cont [7/16] 0.0, 128
      %1045 = vxpose.xlu0.b32.cont [8/16] 0.0, 128
      %1046 = vxpose.xlu0.b32.cont [9/16] 0.0, 128
      %1047 = vxpose.xlu0.b32.cont [10/16] 0.0, 128
      %1048 = vxpose.xlu0.b32.cont [11/16] 0.0, 128
      %1049 = vxpose.xlu0.b32.cont [12/16] 0.0, 128
      %1050 = vxpose.xlu0.b32.cont [13/16] 0.0, 128
      %1051 = vxpose.xlu0.b32.cont [14/16] 0.0, 128
      %1052 = vxpose.xlu0.b32.cont [15/16] 0.0, 128
      %1053 = vxpose.xlu0.b32.end [16/16] 0.0, 128
      %v1054 = vpop.trf.xlu0
      %v1055 = vpop.trf.xlu0
      %v1056 = vpop.trf.xlu0
      %v1057 = vpop.trf.xlu0
      %v1058 = vpop.trf.xlu0
      %v1059 = vpop.trf.xlu0
      %v1060 = vpop.trf.xlu0
      %v1061 = vpop.trf.xlu0
      %v1062 = vpop.trf.xlu0
      %v1063 = vpop.trf.xlu0
      %v1064 = vpop.trf.xlu0
      %v1065 = vpop.trf.xlu0
      %v1066 = vpop.trf.xlu0
      %v1067 = vpop.trf.xlu0
      %v1068 = vpop.trf.xlu0
      %v1069 = vpop.trf.xlu0
      %vm1070 = vcmask 64512
      %v1072 = vsel %vm1070, %v1054, 0
      %v1075 = vsel %vm1070, %v1055, 0
      %1077 = vmatpush.msra.mxu0 0.0
      %1078 = vmatpush.msra.mxu0 0.0
      %1079 = vmatpush.msra.mxu0 0.0
      %1080 = vmatpush.msra.mxu0 0.0
      %1081 = vmatpush.msra.mxu0 0.0
      %1082 = vmatpush.msra.mxu0 0.0
      %1083 = vmatpush.msra.mxu0 0.0
      %1084 = vmatpush.msra.mxu0 0.0
      %1085 = vmatpush.msra.mxu0 0.0
      %1086 = vmatpush.msra.mxu0 0.0
      %1087 = vmatpush.msra.mxu0 0.0
      %1088 = vmatpush.msra.mxu0 0.0
      %1089 = vmatpush.msra.mxu0 0.0
      %1090 = vmatpush.msra.mxu0 0.0
      %1091 = vmatpush.msra.mxu0 0.0
      %1092 = vmatpush.msra.mxu0 %v991
      %1093 = vmatmul.f32.gmra.mxu0 %v1072
      %v1094 = vpop.f32.mrf.mxu0
      %v1095 = vadd.f32 0.0, %v1094
      %1096 = vmatmul.f32.gmra.mxu0 %v1075
      %v1097 = vpop.f32.mrf.mxu0
      %v1098 = vadd.f32 0.0, %v1097
      %1099 = vdwg.mxu0
      %1100 = vxpose.xlu0.b32.start [1/16] %v1031, 128
      %1101 = vxpose.xlu0.b32.cont [2/16] 0.0, 128
      %1102 = vxpose.xlu0.b32.cont [3/16] 0.0, 128
      %1103 = vxpose.xlu0.b32.cont [4/16] 0.0, 128
      %1104 = vxpose.xlu0.b32.cont [5/16] 0.0, 128
      %1105 = vxpose.xlu0.b32.cont [6/16] 0.0, 128
      %1106 = vxpose.xlu0.b32.cont [7/16] 0.0, 128
      %1107 = vxpose.xlu0.b32.cont [8/16] 0.0, 128
      %1108 = vxpose.xlu0.b32.cont [9/16] 0.0, 128
      %1109 = vxpose.xlu0.b32.cont [10/16] 0.0, 128
      %1110 = vxpose.xlu0.b32.cont [11/16] 0.0, 128
      %1111 = vxpose.xlu0.b32.cont [12/16] 0.0, 128
      %1112 = vxpose.xlu0.b32.cont [13/16] 0.0, 128
      %1113 = vxpose.xlu0.b32.cont [14/16] 0.0, 128
      %1114 = vxpose.xlu0.b32.cont [15/16] 0.0, 128
      %1115 = vxpose.xlu0.b32.end [16/16] 0.0, 128
      %v1116 = vpop.trf.xlu0
      %v1117 = vpop.trf.xlu0
      %v1118 = vpop.trf.xlu0
      %v1119 = vpop.trf.xlu0
      %v1120 = vpop.trf.xlu0
      %v1121 = vpop.trf.xlu0
      %v1122 = vpop.trf.xlu0
      %v1123 = vpop.trf.xlu0
      %v1124 = vpop.trf.xlu0
      %v1125 = vpop.trf.xlu0
      %v1126 = vpop.trf.xlu0
      %v1127 = vpop.trf.xlu0
      %v1128 = vpop.trf.xlu0
      %v1129 = vpop.trf.xlu0
      %v1130 = vpop.trf.xlu0
      %v1131 = vpop.trf.xlu0
      %v1133 = vsel %vm1070, %v1116, 0
      %v1136 = vsel %vm1070, %v1117, 0
      %1138 = vmatpush.msra.mxu0 0.0
      %1139 = vmatpush.msra.mxu0 0.0
      %1140 = vmatpush.msra.mxu0 0.0
      %1141 = vmatpush.msra.mxu0 0.0
      %1142 = vmatpush.msra.mxu0 0.0
      %1143 = vmatpush.msra.mxu0 0.0
      %1144 = vmatpush.msra.mxu0 0.0
      %1145 = vmatpush.msra.mxu0 0.0
      %1146 = vmatpush.msra.mxu0 0.0
      %1147 = vmatpush.msra.mxu0 0.0
      %1148 = vmatpush.msra.mxu0 0.0
      %1149 = vmatpush.msra.mxu0 0.0
      %1150 = vmatpush.msra.mxu0 0.0
      %1151 = vmatpush.msra.mxu0 0.0
      %1152 = vmatpush.msra.mxu0 0.0
      %1153 = vmatpush.msra.mxu0 %v993
      %1154 = vmatmul.f32.gmra.mxu0 %v1133
      %v1155 = vpop.f32.mrf.mxu0
      %v1156 = vadd.f32 0.0, %v1155
      %1157 = vmatmul.f32.gmra.mxu0 %v1136
      %v1158 = vpop.f32.mrf.mxu0
      %v1159 = vadd.f32 0.0, %v1158
      %1160 = vdwg.mxu0
      %1161 = vxpose.xlu0.b32.start [1/16] %v1032, 128
      %1162 = vxpose.xlu0.b32.cont [2/16] 0.0, 128
      %1163 = vxpose.xlu0.b32.cont [3/16] 0.0, 128
      %1164 = vxpose.xlu0.b32.cont [4/16] 0.0, 128
      %1165 = vxpose.xlu0.b32.cont [5/16] 0.0, 128
      %1166 = vxpose.xlu0.b32.cont [6/16] 0.0, 128
      %1167 = vxpose.xlu0.b32.cont [7/16] 0.0, 128
      %1168 = vxpose.xlu0.b32.cont [8/16] 0.0, 128
      %1169 = vxpose.xlu0.b32.cont [9/16] 0.0, 128
      %1170 = vxpose.xlu0.b32.cont [10/16] 0.0, 128
      %1171 = vxpose.xlu0.b32.cont [11/16] 0.0, 128
      %1172 = vxpose.xlu0.b32.cont [12/16] 0.0, 128
      %1173 = vxpose.xlu0.b32.cont [13/16] 0.0, 128
      %1174 = vxpose.xlu0.b32.cont [14/16] 0.0, 128
      %1175 = vxpose.xlu0.b32.cont [15/16] 0.0, 128
      %1176 = vxpose.xlu0.b32.end [16/16] 0.0, 128
      %v1177 = vpop.trf.xlu0
      %v1178 = vpop.trf.xlu0
      %v1179 = vpop.trf.xlu0
      %v1180 = vpop.trf.xlu0
      %v1181 = vpop.trf.xlu0
      %v1182 = vpop.trf.xlu0
      %v1183 = vpop.trf.xlu0
      %v1184 = vpop.trf.xlu0
      %v1185 = vpop.trf.xlu0
      %v1186 = vpop.trf.xlu0
      %v1187 = vpop.trf.xlu0
      %v1188 = vpop.trf.xlu0
      %v1189 = vpop.trf.xlu0
      %v1190 = vpop.trf.xlu0
      %v1191 = vpop.trf.xlu0
      %v1192 = vpop.trf.xlu0
      %v1194 = vsel %vm1070, %v1177, 0
      %v1197 = vsel %vm1070, %v1178, 0
      %1199 = vmatpush.msra.mxu0 0.0
      %1200 = vmatpush.msra.mxu0 0.0
      %1201 = vmatpush.msra.mxu0 0.0
      %1202 = vmatpush.msra.mxu0 0.0
      %1203 = vmatpush.msra.mxu0 0.0
      %1204 = vmatpush.msra.mxu0 0.0
      %1205 = vmatpush.msra.mxu0 0.0
      %1206 = vmatpush.msra.mxu0 0.0
      %1207 = vmatpush.msra.mxu0 0.0
      %1208 = vmatpush.msra.mxu0 0.0
      %1209 = vmatpush.msra.mxu0 0.0
      %1210 = vmatpush.msra.mxu0 0.0
      %1211 = vmatpush.msra.mxu0 0.0
      %1212 = vmatpush.msra.mxu0 0.0
      %1213 = vmatpush.msra.mxu0 0.0
      %1214 = vmatpush.msra.mxu0 %v996
      %1215 = vmatmul.f32.gmra.mxu0 %v1194
      %v1216 = vpop.f32.mrf.mxu0
      %v1217 = vadd.f32 0.0, %v1216
      %1218 = vmatmul.f32.gmra.mxu0 %v1197
      %v1219 = vpop.f32.mrf.mxu0
      %v1220 = vadd.f32 0.0, %v1219
      %1221 = vdwg.mxu0
      %1222 = vxpose.xlu0.b32.start [1/16] %v1033, 128
      %1223 = vxpose.xlu0.b32.cont [2/16] 0.0, 128
      %1224 = vxpose.xlu0.b32.cont [3/16] 0.0, 128
      %1225 = vxpose.xlu0.b32.cont [4/16] 0.0, 128
      %1226 = vxpose.xlu0.b32.cont [5/16] 0.0, 128
      %1227 = vxpose.xlu0.b32.cont [6/16] 0.0, 128
      %1228 = vxpose.xlu0.b32.cont [7/16] 0.0, 128
      %1229 = vxpose.xlu0.b32.cont [8/16] 0.0, 128
      %1230 = vxpose.xlu0.b32.cont [9/16] 0.0, 128
      %1231 = vxpose.xlu0.b32.cont [10/16] 0.0, 128
      %1232 = vxpose.xlu0.b32.cont [11/16] 0.0, 128
      %1233 = vxpose.xlu0.b32.cont [12/16] 0.0, 128
      %1234 = vxpose.xlu0.b32.cont [13/16] 0.0, 128
      %1235 = vxpose.xlu0.b32.cont [14/16] 0.0, 128
      %1236 = vxpose.xlu0.b32.cont [15/16] 0.0, 128
      %1237 = vxpose.xlu0.b32.end [16/16] 0.0, 128
      %v1238 = vpop.trf.xlu0
      %v1239 = vpop.trf.xlu0
      %v1240 = vpop.trf.xlu0
      %v1241 = vpop.trf.xlu0
      %v1242 = vpop.trf.xlu0
      %v1243 = vpop.trf.xlu0
      %v1244 = vpop.trf.xlu0
      %v1245 = vpop.trf.xlu0
      %v1246 = vpop.trf.xlu0
      %v1247 = vpop.trf.xlu0
      %v1248 = vpop.trf.xlu0
      %v1249 = vpop.trf.xlu0
      %v1250 = vpop.trf.xlu0
      %v1251 = vpop.trf.xlu0
      %v1252 = vpop.trf.xlu0
      %v1253 = vpop.trf.xlu0
      %v1255 = vsel %vm1070, %v1238, 0
      %v1258 = vsel %vm1070, %v1239, 0
      %1260 = vmatpush.msra.mxu0 0.0
      %1261 = vmatpush.msra.mxu0 0.0
      %1262 = vmatpush.msra.mxu0 0.0
      %1263 = vmatpush.msra.mxu0 0.0
      %1264 = vmatpush.msra.mxu0 0.0
      %1265 = vmatpush.msra.mxu0 0.0
      %1266 = vmatpush.msra.mxu0 0.0
      %1267 = vmatpush.msra.mxu0 0.0
      %1268 = vmatpush.msra.mxu0 0.0
      %1269 = vmatpush.msra.mxu0 0.0
      %1270 = vmatpush.msra.mxu0 0.0
      %1271 = vmatpush.msra.mxu0 0.0
      %1272 = vmatpush.msra.mxu0 0.0
      %1273 = vmatpush.msra.mxu0 0.0
      %1274 = vmatpush.msra.mxu0 0.0
      %1275 = vmatpush.msra.mxu0 %v998
      %1276 = vmatmul.f32.gmra.mxu0 %v1255
      %v1277 = vpop.f32.mrf.mxu0
      %v1278 = vadd.f32 0.0, %v1277
      %1279 = vmatmul.f32.gmra.mxu0 %v1258
      %v1280 = vpop.f32.mrf.mxu0
      %v1281 = vadd.f32 0.0, %v1280
      %1282 = vdwg.mxu0
      %1283 = vxpose.xlu0.b32.start [1/16] %v1034, 128
      %1284 = vxpose.xlu0.b32.cont [2/16] 0.0, 128
      %1285 = vxpose.xlu0.b32.cont [3/16] 0.0, 128
      %1286 = vxpose.xlu0.b32.cont [4/16] 0.0, 128
      %1287 = vxpose.xlu0.b32.cont [5/16] 0.0, 128
      %1288 = vxpose.xlu0.b32.cont [6/16] 0.0, 128
      %1289 = vxpose.xlu0.b32.cont [7/16] 0.0, 128
      %1290 = vxpose.xlu0.b32.cont [8/16] 0.0, 128
      %1291 = vxpose.xlu0.b32.cont [9/16] 0.0, 128
      %1292 = vxpose.xlu0.b32.cont [10/16] 0.0, 128
      %1293 = vxpose.xlu0.b32.cont [11/16] 0.0, 128
      %1294 = vxpose.xlu0.b32.cont [12/16] 0.0, 128
      %1295 = vxpose.xlu0.b32.cont [13/16] 0.0, 128
      %1296 = vxpose.xlu0.b32.cont [14/16] 0.0, 128
      %1297 = vxpose.xlu0.b32.cont [15/16] 0.0, 128
      %1298 = vxpose.xlu0.b32.end [16/16] 0.0, 128
      %v1299 = vpop.trf.xlu0
      %v1300 = vpop.trf.xlu0
      %v1301 = vpop.trf.xlu0
      %v1302 = vpop.trf.xlu0
      %v1303 = vpop.trf.xlu0
      %v1304 = vpop.trf.xlu0
      %v1305 = vpop.trf.xlu0
      %v1306 = vpop.trf.xlu0
      %v1307 = vpop.trf.xlu0
      %v1308 = vpop.trf.xlu0
      %v1309 = vpop.trf.xlu0
      %v1310 = vpop.trf.xlu0
      %v1311 = vpop.trf.xlu0
      %v1312 = vpop.trf.xlu0
      %v1313 = vpop.trf.xlu0
      %v1314 = vpop.trf.xlu0
      %v1316 = vsel %vm1070, %v1299, 0
      %v1319 = vsel %vm1070, %v1300, 0
      %1321 = vmatpush.msra.mxu0 0.0
      %1322 = vmatpush.msra.mxu0 0.0
      %1323 = vmatpush.msra.mxu0 0.0
      %1324 = vmatpush.msra.mxu0 0.0
      %1325 = vmatpush.msra.mxu0 0.0
      %1326 = vmatpush.msra.mxu0 0.0
      %1327 = vmatpush.msra.mxu0 0.0
      %1328 = vmatpush.msra.mxu0 0.0
      %1329 = vmatpush.msra.mxu0 0.0
      %1330 = vmatpush.msra.mxu0 0.0
      %1331 = vmatpush.msra.mxu0 0.0
      %1332 = vmatpush.msra.mxu0 0.0
      %1333 = vmatpush.msra.mxu0 0.0
      %1334 = vmatpush.msra.mxu0 0.0
      %1335 = vmatpush.msra.mxu0 0.0
      %1336 = vmatpush.msra.mxu0 %v1001
      %1337 = vmatmul.f32.gmra.mxu0 %v1316
      %v1338 = vpop.f32.mrf.mxu0
      %v1339 = vadd.f32 0.0, %v1338
      %1340 = vmatmul.f32.gmra.mxu0 %v1319
      %v1341 = vpop.f32.mrf.mxu0
      %v1342 = vadd.f32 0.0, %v1341
      %1343 = vdwg.mxu0
      %1344 = vxpose.xlu0.b32.start [1/16] %v1035, 128
      %1345 = vxpose.xlu0.b32.cont [2/16] 0.0, 128
      %1346 = vxpose.xlu0.b32.cont [3/16] 0.0, 128
      %1347 = vxpose.xlu0.b32.cont [4/16] 0.0, 128
      %1348 = vxpose.xlu0.b32.cont [5/16] 0.0, 128
      %1349 = vxpose.xlu0.b32.cont [6/16] 0.0, 128
      %1350 = vxpose.xlu0.b32.cont [7/16] 0.0, 128
      %1351 = vxpose.xlu0.b32.cont [8/16] 0.0, 128
      %1352 = vxpose.xlu0.b32.cont [9/16] 0.0, 128
      %1353 = vxpose.xlu0.b32.cont [10/16] 0.0, 128
      %1354 = vxpose.xlu0.b32.cont [11/16] 0.0, 128
      %1355 = vxpose.xlu0.b32.cont [12/16] 0.0, 128
      %1356 = vxpose.xlu0.b32.cont [13/16] 0.0, 128
      %1357 = vxpose.xlu0.b32.cont [14/16] 0.0, 128
      %1358 = vxpose.xlu0.b32.cont [15/16] 0.0, 128
      %1359 = vxpose.xlu0.b32.end [16/16] 0.0, 128
      %v1360 = vpop.trf.xlu0
      %v1361 = vpop.trf.xlu0
      %v1362 = vpop.trf.xlu0
      %v1363 = vpop.trf.xlu0
      %v1364 = vpop.trf.xlu0
      %v1365 = vpop.trf.xlu0
      %v1366 = vpop.trf.xlu0
      %v1367 = vpop.trf.xlu0
      %v1368 = vpop.trf.xlu0
      %v1369 = vpop.trf.xlu0
      %v1370 = vpop.trf.xlu0
      %v1371 = vpop.trf.xlu0
      %v1372 = vpop.trf.xlu0
      %v1373 = vpop.trf.xlu0
      %v1374 = vpop.trf.xlu0
      %v1375 = vpop.trf.xlu0
      %v1377 = vsel %vm1070, %v1360, 0
      %v1380 = vsel %vm1070, %v1361, 0
      %1382 = vmatpush.msra.mxu0 0.0
      %1383 = vmatpush.msra.mxu0 0.0
      %1384 = vmatpush.msra.mxu0 0.0
      %1385 = vmatpush.msra.mxu0 0.0
      %1386 = vmatpush.msra.mxu0 0.0
      %1387 = vmatpush.msra.mxu0 0.0
      %1388 = vmatpush.msra.mxu0 0.0
      %1389 = vmatpush.msra.mxu0 0.0
      %1390 = vmatpush.msra.mxu0 0.0
      %1391 = vmatpush.msra.mxu0 0.0
      %1392 = vmatpush.msra.mxu0 0.0
      %1393 = vmatpush.msra.mxu0 0.0
      %1394 = vmatpush.msra.mxu0 0.0
      %1395 = vmatpush.msra.mxu0 0.0
      %1396 = vmatpush.msra.mxu0 0.0
      %1397 = vmatpush.msra.mxu0 %v1003
      %1398 = vmatmul.f32.gmra.mxu0 %v1377
      %v1399 = vpop.f32.mrf.mxu0
      %v1400 = vadd.f32 0.0, %v1399
      %1401 = vmatmul.f32.gmra.mxu0 %v1380
      %v1402 = vpop.f32.mrf.mxu0
      %v1403 = vadd.f32 0.0, %v1402
      %1404 = vdwg.mxu0
      %1405 = vxpose.xlu0.b32.start [1/16] %v1036, 128
      %1406 = vxpose.xlu0.b32.cont [2/16] 0.0, 128
      %1407 = vxpose.xlu0.b32.cont [3/16] 0.0, 128
      %1408 = vxpose.xlu0.b32.cont [4/16] 0.0, 128
      %1409 = vxpose.xlu0.b32.cont [5/16] 0.0, 128
      %1410 = vxpose.xlu0.b32.cont [6/16] 0.0, 128
      %1411 = vxpose.xlu0.b32.cont [7/16] 0.0, 128
      %1412 = vxpose.xlu0.b32.cont [8/16] 0.0, 128
      %1413 = vxpose.xlu0.b32.cont [9/16] 0.0, 128
      %1414 = vxpose.xlu0.b32.cont [10/16] 0.0, 128
      %1415 = vxpose.xlu0.b32.cont [11/16] 0.0, 128
      %1416 = vxpose.xlu0.b32.cont [12/16] 0.0, 128
      %1417 = vxpose.xlu0.b32.cont [13/16] 0.0, 128
      %1418 = vxpose.xlu0.b32.cont [14/16] 0.0, 128
      %1419 = vxpose.xlu0.b32.cont [15/16] 0.0, 128
      %1420 = vxpose.xlu0.b32.end [16/16] 0.0, 128
      %v1421 = vpop.trf.xlu0
      %v1422 = vpop.trf.xlu0
      %v1423 = vpop.trf.xlu0
      %v1424 = vpop.trf.xlu0
      %v1425 = vpop.trf.xlu0
      %v1426 = vpop.trf.xlu0
      %v1427 = vpop.trf.xlu0
      %v1428 = vpop.trf.xlu0
      %v1429 = vpop.trf.xlu0
      %v1430 = vpop.trf.xlu0
      %v1431 = vpop.trf.xlu0
      %v1432 = vpop.trf.xlu0
      %v1433 = vpop.trf.xlu0
      %v1434 = vpop.trf.xlu0
      %v1435 = vpop.trf.xlu0
      %v1436 = vpop.trf.xlu0
      %v1438 = vsel %vm1070, %v1421, 0
      %v1441 = vsel %vm1070, %v1422, 0
      %1443 = vmatpush.msra.mxu0 0.0
      %1444 = vmatpush.msra.mxu0 0.0
      %1445 = vmatpush.msra.mxu0 0.0
      %1446 = vmatpush.msra.mxu0 0.0
      %1447 = vmatpush.msra.mxu0 0.0
      %1448 = vmatpush.msra.mxu0 0.0
      %1449 = vmatpush.msra.mxu0 0.0
      %1450 = vmatpush.msra.mxu0 0.0
      %1451 = vmatpush.msra.mxu0 0.0
      %1452 = vmatpush.msra.mxu0 0.0
      %1453 = vmatpush.msra.mxu0 0.0
      %1454 = vmatpush.msra.mxu0 0.0
      %1455 = vmatpush.msra.mxu0 0.0
      %1456 = vmatpush.msra.mxu0 0.0
      %1457 = vmatpush.msra.mxu0 0.0
      %1458 = vmatpush.msra.mxu0 %v1006
      %1459 = vmatmul.f32.gmra.mxu0 %v1438
      %v1460 = vpop.f32.mrf.mxu0
      %v1461 = vadd.f32 0.0, %v1460
      %1462 = vmatmul.f32.gmra.mxu0 %v1441
      %v1463 = vpop.f32.mrf.mxu0
      %v1464 = vadd.f32 0.0, %v1463
      %1465 = vdwg.mxu0
      %1466 = vxpose.xlu0.b32.start [1/16] %v1037, 128
      %1467 = vxpose.xlu0.b32.cont [2/16] 0.0, 128
      %1468 = vxpose.xlu0.b32.cont [3/16] 0.0, 128
      %1469 = vxpose.xlu0.b32.cont [4/16] 0.0, 128
      %1470 = vxpose.xlu0.b32.cont [5/16] 0.0, 128
      %1471 = vxpose.xlu0.b32.cont [6/16] 0.0, 128
      %1472 = vxpose.xlu0.b32.cont [7/16] 0.0, 128
      %1473 = vxpose.xlu0.b32.cont [8/16] 0.0, 128
      %1474 = vxpose.xlu0.b32.cont [9/16] 0.0, 128
      %1475 = vxpose.xlu0.b32.cont [10/16] 0.0, 128
      %1476 = vxpose.xlu0.b32.cont [11/16] 0.0, 128
      %1477 = vxpose.xlu0.b32.cont [12/16] 0.0, 128
      %1478 = vxpose.xlu0.b32.cont [13/16] 0.0, 128
      %1479 = vxpose.xlu0.b32.cont [14/16] 0.0, 128
      %1480 = vxpose.xlu0.b32.cont [15/16] 0.0, 128
      %1481 = vxpose.xlu0.b32.end [16/16] 0.0, 128
      %v1482 = vpop.trf.xlu0
      %v1483 = vpop.trf.xlu0
      %v1484 = vpop.trf.xlu0
      %v1485 = vpop.trf.xlu0
      %v1486 = vpop.trf.xlu0
      %v1487 = vpop.trf.xlu0
      %v1488 = vpop.trf.xlu0
      %v1489 = vpop.trf.xlu0
      %v1490 = vpop.trf.xlu0
      %v1491 = vpop.trf.xlu0
      %v1492 = vpop.trf.xlu0
      %v1493 = vpop.trf.xlu0
      %v1494 = vpop.trf.xlu0
      %v1495 = vpop.trf.xlu0
      %v1496 = vpop.trf.xlu0
      %v1497 = vpop.trf.xlu0
      %v1499 = vsel %vm1070, %v1482, 0
      %v1502 = vsel %vm1070, %v1483, 0
      %1504 = vmatpush.msra.mxu0 0.0
      %1505 = vmatpush.msra.mxu0 0.0
      %1506 = vmatpush.msra.mxu0 0.0
      %1507 = vmatpush.msra.mxu0 0.0
      %1508 = vmatpush.msra.mxu0 0.0
      %1509 = vmatpush.msra.mxu0 0.0
      %1510 = vmatpush.msra.mxu0 0.0
      %1511 = vmatpush.msra.mxu0 0.0
      %1512 = vmatpush.msra.mxu0 0.0
      %1513 = vmatpush.msra.mxu0 0.0
      %1514 = vmatpush.msra.mxu0 0.0
      %1515 = vmatpush.msra.mxu0 0.0
      %1516 = vmatpush.msra.mxu0 0.0
      %1517 = vmatpush.msra.mxu0 0.0
      %1518 = vmatpush.msra.mxu0 0.0
      %1519 = vmatpush.msra.mxu0 %v1008
      %1520 = vmatmul.f32.gmra.mxu0 %v1499
      %v1521 = vpop.f32.mrf.mxu0
      %v1522 = vadd.f32 0.0, %v1521
      %1523 = vmatmul.f32.gmra.mxu0 %v1502
      %v1524 = vpop.f32.mrf.mxu0
      %v1525 = vadd.f32 0.0, %v1524
      %1526 = vdwg.mxu0
      %v1527 = vsel %vm477, %v1095, -inf
      %1528 = vmax.xlane.f32.xlu0 %v1527
      %v1529 = vpop.xlane.xlu0 %1528
      %v1530 = vsel %vm477, %v1098, -inf
      %1531 = vmax.xlane.f32.xlu0 %v1530
      %v1532 = vpop.xlane.xlu0 %1531
      %v1533 = vsel %vm477, %v1156, -inf
      %1534 = vmax.xlane.f32.xlu0 %v1533
      %v1535 = vpop.xlane.xlu0 %1534
      %v1536 = vsel %vm477, %v1159, -inf
      %1537 = vmax.xlane.f32.xlu0 %v1536
      %v1538 = vpop.xlane.xlu0 %1537
      %v1539 = vsel %vm477, %v1217, -inf
      %1540 = vmax.xlane.f32.xlu0 %v1539
      %v1541 = vpop.xlane.xlu0 %1540
      %v1542 = vsel %vm477, %v1220, -inf
      %1543 = vmax.xlane.f32.xlu0 %v1542
      %v1544 = vpop.xlane.xlu0 %1543
      %v1545 = vsel %vm477, %v1278, -inf
      %1546 = vmax.xlane.f32.xlu0 %v1545
      %v1547 = vpop.xlane.xlu0 %1546
      %v1548 = vsel %vm477, %v1281, -inf
      %1549 = vmax.xlane.f32.xlu0 %v1548
      %v1550 = vpop.xlane.xlu0 %1549
      %v1551 = vsel %vm477, %v1339, -inf
      %1552 = vmax.xlane.f32.xlu0 %v1551
      %v1553 = vpop.xlane.xlu0 %1552
      %v1554 = vsel %vm477, %v1342, -inf
      %1555 = vmax.xlane.f32.xlu0 %v1554
      %v1556 = vpop.xlane.xlu0 %1555
      %v1557 = vsel %vm477, %v1400, -inf
      %1558 = vmax.xlane.f32.xlu0 %v1557
      %v1559 = vpop.xlane.xlu0 %1558
      %v1560 = vsel %vm477, %v1403, -inf
      %1561 = vmax.xlane.f32.xlu0 %v1560
      %v1562 = vpop.xlane.xlu0 %1561
      %v1563 = vsel %vm477, %v1461, -inf
      %1564 = vmax.xlane.f32.xlu0 %v1563
      %v1565 = vpop.xlane.xlu0 %1564
      %v1566 = vsel %vm477, %v1464, -inf
      %1567 = vmax.xlane.f32.xlu0 %v1566
      %v1568 = vpop.xlane.xlu0 %1567
      %v1569 = vsel %vm477, %v1522, -inf
      %1570 = vmax.xlane.f32.xlu0 %v1569
      %v1571 = vpop.xlane.xlu0 %1570
      %v1572 = vsel %vm477, %v1525, -inf
      %1573 = vmax.xlane.f32.xlu0 %v1572
      %v1574 = vpop.xlane.xlu0 %1573
      %v1575 = vsub.f32 %v1095, %v1529
      %v1576 = vsub.f32 %v1098, %v1532
      %v1577 = vsub.f32 %v1156, %v1535
      %v1578 = vsub.f32 %v1159, %v1538
      %v1579 = vsub.f32 %v1217, %v1541
      %v1580 = vsub.f32 %v1220, %v1544
      %v1581 = vsub.f32 %v1278, %v1547
      %v1582 = vsub.f32 %v1281, %v1550
      %v1583 = vsub.f32 %v1339, %v1553
      %v1584 = vsub.f32 %v1342, %v1556
      %v1585 = vsub.f32 %v1400, %v1559
      %v1586 = vsub.f32 %v1403, %v1562
      %v1587 = vsub.f32 %v1461, %v1565
      %v1588 = vsub.f32 %v1464, %v1568
      %v1589 = vsub.f32 %v1522, %v1571
      %v1590 = vsub.f32 %v1525, %v1574
      %v1591 = vmul.f32 %v1575, 1.442695
      %v1592 = vpow.pop %v1591
      %v1593 = vmul.f32 %v1576, 1.442695
      %v1594 = vpow.pop %v1593
      %v1595 = vmul.f32 %v1577, 1.442695
      %v1596 = vpow.pop %v1595
      %v1597 = vmul.f32 %v1578, 1.442695
      %v1598 = vpow.pop %v1597
      %v1599 = vmul.f32 %v1579, 1.442695
      %v1600 = vpow.pop %v1599
      %v1601 = vmul.f32 %v1580, 1.442695
      %v1602 = vpow.pop %v1601
      %v1603 = vmul.f32 %v1581, 1.442695
      %v1604 = vpow.pop %v1603
      %v1605 = vmul.f32 %v1582, 1.442695
      %v1606 = vpow.pop %v1605
      %v1607 = vmul.f32 %v1583, 1.442695
      %v1608 = vpow.pop %v1607
      %v1609 = vmul.f32 %v1584, 1.442695
      %v1610 = vpow.pop %v1609
      %v1611 = vmul.f32 %v1585, 1.442695
      %v1612 = vpow.pop %v1611
      %v1613 = vmul.f32 %v1586, 1.442695
      %v1614 = vpow.pop %v1613
      %v1615 = vmul.f32 %v1587, 1.442695
      %v1616 = vpow.pop %v1615
      %v1617 = vmul.f32 %v1588, 1.442695
      %v1618 = vpow.pop %v1617
      %v1619 = vmul.f32 %v1589, 1.442695
      %v1620 = vpow.pop %v1619
      %v1621 = vmul.f32 %v1590, 1.442695
      %v1622 = vpow.pop %v1621
      %v1623 = vsel %vm477, %v1592, 0.0
      %1624 = vadd.xlane.f32.xlu0 %v1623
      %v1625 = vpop.xlane.xlu0 %1624
      %v1626 = vsel %vm477, %v1594, 0.0
      %1627 = vadd.xlane.f32.xlu0 %v1626
      %v1628 = vpop.xlane.xlu0 %1627
      %v1629 = vsel %vm477, %v1596, 0.0
      %1630 = vadd.xlane.f32.xlu0 %v1629
      %v1631 = vpop.xlane.xlu0 %1630
      %v1632 = vsel %vm477, %v1598, 0.0
      %1633 = vadd.xlane.f32.xlu0 %v1632
      %v1634 = vpop.xlane.xlu0 %1633
      %v1635 = vsel %vm477, %v1600, 0.0
      %1636 = vadd.xlane.f32.xlu0 %v1635
      %v1637 = vpop.xlane.xlu0 %1636
      %v1638 = vsel %vm477, %v1602, 0.0
      %1639 = vadd.xlane.f32.xlu0 %v1638
      %v1640 = vpop.xlane.xlu0 %1639
      %v1641 = vsel %vm477, %v1604, 0.0
      %1642 = vadd.xlane.f32.xlu0 %v1641
      %v1643 = vpop.xlane.xlu0 %1642
      %v1644 = vsel %vm477, %v1606, 0.0
      %1645 = vadd.xlane.f32.xlu0 %v1644
      %v1646 = vpop.xlane.xlu0 %1645
      %v1647 = vsel %vm477, %v1608, 0.0
      %1648 = vadd.xlane.f32.xlu0 %v1647
      %v1649 = vpop.xlane.xlu0 %1648
      %v1650 = vsel %vm477, %v1610, 0.0
      %1651 = vadd.xlane.f32.xlu0 %v1650
      %v1652 = vpop.xlane.xlu0 %1651
      %v1653 = vsel %vm477, %v1612, 0.0
      %1654 = vadd.xlane.f32.xlu0 %v1653
      %v1655 = vpop.xlane.xlu0 %1654
      %v1656 = vsel %vm477, %v1614, 0.0
      %1657 = vadd.xlane.f32.xlu0 %v1656
      %v1658 = vpop.xlane.xlu0 %1657
      %v1659 = vsel %vm477, %v1616, 0.0
      %1660 = vadd.xlane.f32.xlu0 %v1659
      %v1661 = vpop.xlane.xlu0 %1660
      %v1662 = vsel %vm477, %v1618, 0.0
      %1663 = vadd.xlane.f32.xlu0 %v1662
      %v1664 = vpop.xlane.xlu0 %1663
      %v1665 = vsel %vm477, %v1620, 0.0
      %1666 = vadd.xlane.f32.xlu0 %v1665
      %v1667 = vpop.xlane.xlu0 %1666
      %v1668 = vsel %vm477, %v1622, 0.0
      %1669 = vadd.xlane.f32.xlu0 %v1668
      %v1670 = vpop.xlane.xlu0 %1669
      %v1671 = vrcp.pop %v1625
      %v1672 = vrcp.pop %v1628
      %v1673 = vrcp.pop %v1631
      %v1674 = vrcp.pop %v1634
      %v1675 = vrcp.pop %v1637
      %v1676 = vrcp.pop %v1640
      %v1677 = vrcp.pop %v1643
      %v1678 = vrcp.pop %v1646
      %v1679 = vrcp.pop %v1649
      %v1680 = vrcp.pop %v1652
      %v1681 = vrcp.pop %v1655
      %v1682 = vrcp.pop %v1658
      %v1683 = vrcp.pop %v1661
      %v1684 = vrcp.pop %v1664
      %v1685 = vrcp.pop %v1667
      %v1686 = vrcp.pop %v1670
      %v1687 = vmul.f32 %v1592, %v1671
      %v1688 = vmul.f32 %v1594, %v1672
      %v1689 = vmul.f32 %v1596, %v1673
      %v1690 = vmul.f32 %v1598, %v1674
      %v1691 = vmul.f32 %v1600, %v1675
      %v1692 = vmul.f32 %v1602, %v1676
      %v1693 = vmul.f32 %v1604, %v1677
      %v1694 = vmul.f32 %v1606, %v1678
      %v1695 = vmul.f32 %v1608, %v1679
      %v1696 = vmul.f32 %v1610, %v1680
      %v1697 = vmul.f32 %v1612, %v1681
      %v1698 = vmul.f32 %v1614, %v1682
      %v1699 = vmul.f32 %v1616, %v1683
      %v1700 = vmul.f32 %v1618, %v1684
      %v1701 = vmul.f32 %v1620, %v1685
      %v1702 = vmul.f32 %v1622, %v1686
      %v1704 = vsel %vm477, %v1011, 0
      %v1707 = vsel %vm477, %v1687, 0
      %v1710 = vsel %vm477, %v1688, 0
      %1712 = vmatpush.xpose.msra.mxu0 0.0
      %1713 = vmatpush.xpose.msra.mxu0 0.0
      %1714 = vmatpush.xpose.msra.mxu0 0.0
      %1715 = vmatpush.xpose.msra.mxu0 0.0
      %1716 = vmatpush.xpose.msra.mxu0 0.0
      %1717 = vmatpush.xpose.msra.mxu0 0.0
      %1718 = vmatpush.xpose.msra.mxu0 0.0
      %1719 = vmatpush.xpose.msra.mxu0 0.0
      %1720 = vmatpush.xpose.msra.mxu0 0.0
      %1721 = vmatpush.xpose.msra.mxu0 0.0
      %1722 = vmatpush.xpose.msra.mxu0 0.0
      %1723 = vmatpush.xpose.msra.mxu0 0.0
      %1724 = vmatpush.xpose.msra.mxu0 0.0
      %1725 = vmatpush.xpose.msra.mxu0 0.0
      %1726 = vmatpush.xpose.msra.mxu0 %v1710
      %1727 = vmatpush.xpose.msra.mxu0 %v1707
      %1728 = vmatmul.f32.gmra.mxu0 %v1704
      %v1729 = vpop.f32.mrf.mxu0
      %v1730 = vadd.f32 0.0, %v1729
      %1731 = vdwg.mxu0
      %v1733 = vsel %vm477, %v1013, 0
      %v1736 = vsel %vm477, %v1689, 0
      %v1739 = vsel %vm477, %v1690, 0
      %1741 = vmatpush.xpose.msra.mxu0 0.0
      %1742 = vmatpush.xpose.msra.mxu0 0.0
      %1743 = vmatpush.xpose.msra.mxu0 0.0
      %1744 = vmatpush.xpose.msra.mxu0 0.0
      %1745 = vmatpush.xpose.msra.mxu0 0.0
      %1746 = vmatpush.xpose.msra.mxu0 0.0
      %1747 = vmatpush.xpose.msra.mxu0 0.0
      %1748 = vmatpush.xpose.msra.mxu0 0.0
      %1749 = vmatpush.xpose.msra.mxu0 0.0
      %1750 = vmatpush.xpose.msra.mxu0 0.0
      %1751 = vmatpush.xpose.msra.mxu0 0.0
      %1752 = vmatpush.xpose.msra.mxu0 0.0
      %1753 = vmatpush.xpose.msra.mxu0 0.0
      %1754 = vmatpush.xpose.msra.mxu0 0.0
      %1755 = vmatpush.xpose.msra.mxu0 %v1739
      %1756 = vmatpush.xpose.msra.mxu0 %v1736
      %1757 = vmatmul.f32.gmra.mxu0 %v1733
      %v1758 = vpop.f32.mrf.mxu0
      %v1759 = vadd.f32 0.0, %v1758
      %1760 = vdwg.mxu0
      %v1762 = vsel %vm477, %v1016, 0
      %v1765 = vsel %vm477, %v1691, 0
      %v1768 = vsel %vm477, %v1692, 0
      %1770 = vmatpush.xpose.msra.mxu0 0.0
      %1771 = vmatpush.xpose.msra.mxu0 0.0
      %1772 = vmatpush.xpose.msra.mxu0 0.0
      %1773 = vmatpush.xpose.msra.mxu0 0.0
      %1774 = vmatpush.xpose.msra.mxu0 0.0
      %1775 = vmatpush.xpose.msra.mxu0 0.0
      %1776 = vmatpush.xpose.msra.mxu0 0.0
      %1777 = vmatpush.xpose.msra.mxu0 0.0
      %1778 = vmatpush.xpose.msra.mxu0 0.0
      %1779 = vmatpush.xpose.msra.mxu0 0.0
      %1780 = vmatpush.xpose.msra.mxu0 0.0
      %1781 = vmatpush.xpose.msra.mxu0 0.0
      %1782 = vmatpush.xpose.msra.mxu0 0.0
      %1783 = vmatpush.xpose.msra.mxu0 0.0
      %1784 = vmatpush.xpose.msra.mxu0 %v1768
      %1785 = vmatpush.xpose.msra.mxu0 %v1765
      %1786 = vmatmul.f32.gmra.mxu0 %v1762
      %v1787 = vpop.f32.mrf.mxu0
      %v1788 = vadd.f32 0.0, %v1787
      %1789 = vdwg.mxu0
      %v1791 = vsel %vm477, %v1018, 0
      %v1794 = vsel %vm477, %v1693, 0
      %v1797 = vsel %vm477, %v1694, 0
      %1799 = vmatpush.xpose.msra.mxu0 0.0
      %1800 = vmatpush.xpose.msra.mxu0 0.0
      %1801 = vmatpush.xpose.msra.mxu0 0.0
      %1802 = vmatpush.xpose.msra.mxu0 0.0
      %1803 = vmatpush.xpose.msra.mxu0 0.0
      %1804 = vmatpush.xpose.msra.mxu0 0.0
      %1805 = vmatpush.xpose.msra.mxu0 0.0
      %1806 = vmatpush.xpose.msra.mxu0 0.0
      %1807 = vmatpush.xpose.msra.mxu0 0.0
      %1808 = vmatpush.xpose.msra.mxu0 0.0
      %1809 = vmatpush.xpose.msra.mxu0 0.0
      %1810 = vmatpush.xpose.msra.mxu0 0.0
      %1811 = vmatpush.xpose.msra.mxu0 0.0
      %1812 = vmatpush.xpose.msra.mxu0 0.0
      %1813 = vmatpush.xpose.msra.mxu0 %v1797
      %1814 = vmatpush.xpose.msra.mxu0 %v1794
      %1815 = vmatmul.f32.gmra.mxu0 %v1791
      %v1816 = vpop.f32.mrf.mxu0
      %v1817 = vadd.f32 0.0, %v1816
      %1818 = vdwg.mxu0
      %v1820 = vsel %vm477, %v1021, 0
      %v1823 = vsel %vm477, %v1695, 0
      %v1826 = vsel %vm477, %v1696, 0
      %1828 = vmatpush.xpose.msra.mxu0 0.0
      %1829 = vmatpush.xpose.msra.mxu0 0.0
      %1830 = vmatpush.xpose.msra.mxu0 0.0
      %1831 = vmatpush.xpose.msra.mxu0 0.0
      %1832 = vmatpush.xpose.msra.mxu0 0.0
      %1833 = vmatpush.xpose.msra.mxu0 0.0
      %1834 = vmatpush.xpose.msra.mxu0 0.0
      %1835 = vmatpush.xpose.msra.mxu0 0.0
      %1836 = vmatpush.xpose.msra.mxu0 0.0
      %1837 = vmatpush.xpose.msra.mxu0 0.0
      %1838 = vmatpush.xpose.msra.mxu0 0.0
      %1839 = vmatpush.xpose.msra.mxu0 0.0
      %1840 = vmatpush.xpose.msra.mxu0 0.0
      %1841 = vmatpush.xpose.msra.mxu0 0.0
      %1842 = vmatpush.xpose.msra.mxu0 %v1826
      %1843 = vmatpush.xpose.msra.mxu0 %v1823
      %1844 = vmatmul.f32.gmra.mxu0 %v1820
      %v1845 = vpop.f32.mrf.mxu0
      %v1846 = vadd.f32 0.0, %v1845
      %1847 = vdwg.mxu0
      %v1849 = vsel %vm477, %v1023, 0
      %v1852 = vsel %vm477, %v1697, 0
      %v1855 = vsel %vm477, %v1698, 0
      %1857 = vmatpush.xpose.msra.mxu0 0.0
      %1858 = vmatpush.xpose.msra.mxu0 0.0
      %1859 = vmatpush.xpose.msra.mxu0 0.0
      %1860 = vmatpush.xpose.msra.mxu0 0.0
      %1861 = vmatpush.xpose.msra.mxu0 0.0
      %1862 = vmatpush.xpose.msra.mxu0 0.0
      %1863 = vmatpush.xpose.msra.mxu0 0.0
      %1864 = vmatpush.xpose.msra.mxu0 0.0
      %1865 = vmatpush.xpose.msra.mxu0 0.0
      %1866 = vmatpush.xpose.msra.mxu0 0.0
      %1867 = vmatpush.xpose.msra.mxu0 0.0
      %1868 = vmatpush.xpose.msra.mxu0 0.0
      %1869 = vmatpush.xpose.msra.mxu0 0.0
      %1870 = vmatpush.xpose.msra.mxu0 0.0
      %1871 = vmatpush.xpose.msra.mxu0 %v1855
      %1872 = vmatpush.xpose.msra.mxu0 %v1852
      %1873 = vmatmul.f32.gmra.mxu0 %v1849
      %v1874 = vpop.f32.mrf.mxu0
      %v1875 = vadd.f32 0.0, %v1874
      %1876 = vdwg.mxu0
      %v1878 = vsel %vm477, %v1026, 0
      %v1881 = vsel %vm477, %v1699, 0
      %v1884 = vsel %vm477, %v1700, 0
      %1886 = vmatpush.xpose.msra.mxu0 0.0
      %1887 = vmatpush.xpose.msra.mxu0 0.0
      %1888 = vmatpush.xpose.msra.mxu0 0.0
      %1889 = vmatpush.xpose.msra.mxu0 0.0
      %1890 = vmatpush.xpose.msra.mxu0 0.0
      %1891 = vmatpush.xpose.msra.mxu0 0.0
      %1892 = vmatpush.xpose.msra.mxu0 0.0
      %1893 = vmatpush.xpose.msra.mxu0 0.0
      %1894 = vmatpush.xpose.msra.mxu0 0.0
      %1895 = vmatpush.xpose.msra.mxu0 0.0
      %1896 = vmatpush.xpose.msra.mxu0 0.0
      %1897 = vmatpush.xpose.msra.mxu0 0.0
      %1898 = vmatpush.xpose.msra.mxu0 0.0
      %1899 = vmatpush.xpose.msra.mxu0 0.0
      %1900 = vmatpush.xpose.msra.mxu0 %v1884
      %1901 = vmatpush.xpose.msra.mxu0 %v1881
      %1902 = vmatmul.f32.gmra.mxu0 %v1878
      %v1903 = vpop.f32.mrf.mxu0
      %v1904 = vadd.f32 0.0, %v1903
      %1905 = vdwg.mxu0
      %v1907 = vsel %vm477, %v1028, 0
      %v1910 = vsel %vm477, %v1701, 0
      %v1913 = vsel %vm477, %v1702, 0
      %1915 = vmatpush.xpose.msra.mxu0 0.0
      %1916 = vmatpush.xpose.msra.mxu0 0.0
      %1917 = vmatpush.xpose.msra.mxu0 0.0
      %1918 = vmatpush.xpose.msra.mxu0 0.0
      %1919 = vmatpush.xpose.msra.mxu0 0.0
      %1920 = vmatpush.xpose.msra.mxu0 0.0
      %1921 = vmatpush.xpose.msra.mxu0 0.0
      %1922 = vmatpush.xpose.msra.mxu0 0.0
      %1923 = vmatpush.xpose.msra.mxu0 0.0
      %1924 = vmatpush.xpose.msra.mxu0 0.0
      %1925 = vmatpush.xpose.msra.mxu0 0.0
      %1926 = vmatpush.xpose.msra.mxu0 0.0
      %1927 = vmatpush.xpose.msra.mxu0 0.0
      %1928 = vmatpush.xpose.msra.mxu0 0.0
      %1929 = vmatpush.xpose.msra.mxu0 %v1913
      %1930 = vmatpush.xpose.msra.mxu0 %v1910
      %1931 = vmatmul.f32.gmra.mxu0 %v1907
      %v1932 = vpop.f32.mrf.mxu0
      %v1933 = vadd.f32 0.0, %v1932
      %1934 = vdwg.mxu0
      %v1935 = vld [vmem:[%s6] sm:$0xf]
      %v1936 = vld [vmem:[%s6 + $0x4] sm:$0xf]
      %v1937 = vld [vmem:[%s6 + $0x8] sm:$0xf]
      %v1938 = vld [vmem:[%s6 + $0xc] sm:$0xf]
      %v1939 = vld [vmem:[%s6 + $0x10] sm:$0xf]
      %v1940 = vld [vmem:[%s6 + $0x14] sm:$0xf]
      %v1941 = vld [vmem:[%s6 + $0x18] sm:$0xf]
      %v1942 = vld [vmem:[%s6 + $0x1c] sm:$0xf]
      %v1943 = vpack.c.bf16 %v1759, %v1730
      %v1944 = vpack.c.bf16 %v1817, %v1788
      %v1945 = vpack.c.bf16 %v1875, %v1846
      %v1946 = vpack.c.bf16 %v1933, %v1904
      %v1947 = vld [vmem:[%s7] sm:$0xff]
      %v1948 = vld [vmem:[%s7 + $0x8] sm:$0xff]
      %v1949 = vld [vmem:[%s7 + $0x10] sm:$0xff]
      %v1950 = vld [vmem:[%s7 + $0x18] sm:$0xff]
      %v1951 = vld [vmem:[%s7 + $0x20] sm:$0xff]
      %v1952 = vld [vmem:[%s7 + $0x28] sm:$0xff]
      %v1953 = vld [vmem:[%s7 + $0x30] sm:$0xff]
      %v1954 = vld [vmem:[%s7 + $0x38] sm:$0xff]
      %1956 = vset.pattern.permute.xlu0 0
      %1957 = vperm.xlu0 %1956, %v1947
      %v1958 = vpop.permute.xlu0 %1957
      %1961 = vset.pattern.permute.xlu0 0
      %1962 = vperm.xlu0 %1961, %v1948
      %v1963 = vpop.permute.xlu0 %1962
      %1966 = vset.pattern.permute.xlu0 0
      %1967 = vperm.xlu0 %1966, %v1949
      %v1968 = vpop.permute.xlu0 %1967
      %1971 = vset.pattern.permute.xlu0 0
      %1972 = vperm.xlu0 %1971, %v1950
      %v1973 = vpop.permute.xlu0 %1972
      %1976 = vset.pattern.permute.xlu0 0
      %1977 = vperm.xlu0 %1976, %v1951
      %v1978 = vpop.permute.xlu0 %1977
      %1981 = vset.pattern.permute.xlu0 0
      %1982 = vperm.xlu0 %1981, %v1952
      %v1983 = vpop.permute.xlu0 %1982
      %1986 = vset.pattern.permute.xlu0 0
      %1987 = vperm.xlu0 %1986, %v1953
      %v1988 = vpop.permute.xlu0 %1987
      %1991 = vset.pattern.permute.xlu0 0
      %1992 = vperm.xlu0 %1991, %v1954
      %v1993 = vpop.permute.xlu0 %1992
      %v2003 = vunpack.c.l.b16 %v1935
      %v2004 = vunpack.c.l.b16 %v1936
      %v2005 = vunpack.c.l.b16 %v1937
      %v2006 = vunpack.c.l.b16 %v1938
      %v2007 = vunpack.c.l.b16 %v1939
      %v2008 = vunpack.c.l.b16 %v1940
      %v2009 = vunpack.c.l.b16 %v1941
      %v2010 = vunpack.c.l.b16 %v1942
      %v2011 = vpack.c.b16 %v2004, %v2003
      %v2012 = vpack.c.b16 %v2006, %v2005
      %v2013 = vpack.c.b16 %v2008, %v2007
      %v2014 = vpack.c.b16 %v2010, %v2009
      %v2016 = vsel %vm924, %v2011, 0
      %v2019 = vsel %vm924, %v2012, 0
      %v2022 = vsel %vm924, %v2013, 0
      %v2025 = vsel %vm924, %v2014, 0
      %2027 = vmatpush.bf16.msra.mxu0 0
      %2028 = vmatpush.bf16.msra.mxu0 0
      %2029 = vmatpush.bf16.msra.mxu0 0
      %2030 = vmatpush.bf16.msra.mxu0 0
      %2031 = vmatpush.bf16.msra.mxu0 %v1946
      %2032 = vmatpush.bf16.msra.mxu0 %v1945
      %2033 = vmatpush.bf16.msra.mxu0 %v1944
      %2034 = vmatpush.bf16.msra.mxu0 %v1943
      %2035 = vmatmul.bf16.gmra.mxu0 %v2016
      %v2036 = vpop.f32.mrf.mxu0
      %v2037 = vadd.f32 %v1958, %v2036
      %v2038 = vpop.f32.mrf.mxu0
      %v2039 = vadd.f32 %v1963, %v2038
      %2040 = vmatmul.bf16.gmra.mxu0 %v2019
      %v2041 = vpop.f32.mrf.mxu0
      %v2042 = vadd.f32 %v1968, %v2041
      %v2043 = vpop.f32.mrf.mxu0
      %v2044 = vadd.f32 %v1973, %v2043
      %2045 = vmatmul.bf16.gmra.mxu0 %v2022
      %v2046 = vpop.f32.mrf.mxu0
      %v2047 = vadd.f32 %v1978, %v2046
      %v2048 = vpop.f32.mrf.mxu0
      %v2049 = vadd.f32 %v1983, %v2048
      %2050 = vmatmul.bf16.gmra.mxu0 %v2025
      %v2051 = vpop.f32.mrf.mxu0
      %v2052 = vadd.f32 %v1988, %v2051
      %v2053 = vpop.f32.mrf.mxu0
      %v2054 = vadd.f32 %v1993, %v2053
      %2055 = vdwg.mxu0
      %v2056 = vadd.f32 %v2037, %v684
      %v2057 = vadd.f32 %v2039, %v685
      %v2058 = vadd.f32 %v2042, %v686
      %v2059 = vadd.f32 %v2044, %v687
      %v2060 = vadd.f32 %v2047, %v688
      %v2061 = vadd.f32 %v2049, %v689
      %v2062 = vadd.f32 %v2052, %v690
      %v2063 = vadd.f32 %v2054, %v691
      %v2064 = vsel %vm477, %v2056, 0.0
      %v2065 = vsel %vm477, %v2057, 0.0
      %v2066 = vadd.f32 %v2064, %v2065
      %v2067 = vsel %vm477, %v2058, 0.0
      %v2068 = vadd.f32 %v2066, %v2067
      %v2069 = vsel %vm477, %v2059, 0.0
      %v2070 = vadd.f32 %v2068, %v2069
      %v2071 = vsel %vm477, %v2060, 0.0
      %v2072 = vadd.f32 %v2070, %v2071
      %v2073 = vsel %vm477, %v2061, 0.0
      %v2074 = vadd.f32 %v2072, %v2073
      %v2075 = vsel %vm477, %v2062, 0.0
      %v2076 = vadd.f32 %v2074, %v2075
      %v2077 = vsel %vm477, %v2063, 0.0
      %v2078 = vadd.f32 %v2076, %v2077
      %v2079 = vrot.slane %v2078, 4
      %v2080 = vadd.f32 %v2078, %v2079
      %v2081 = vrot.slane %v2080, 2
      %v2082 = vadd.f32 %v2080, %v2081
      %v2083 = vrot.slane %v2082, 1
      %v2084 = vadd.f32 %v2082, %v2083
      %v2085 = vmul.f32 %v2084, %v505
      %v2086 = vsub.f32 %v2056, %v2085
      %v2087 = vsub.f32 %v2057, %v2085
      %v2088 = vsub.f32 %v2058, %v2085
      %v2089 = vsub.f32 %v2059, %v2085
      %v2090 = vsub.f32 %v2060, %v2085
      %v2091 = vsub.f32 %v2061, %v2085
      %v2092 = vsub.f32 %v2062, %v2085
      %v2093 = vsub.f32 %v2063, %v2085
      %v2094 = vmul.f32 %v2086, %v2086
      %v2095 = vmul.f32 %v2087, %v2087
      %v2096 = vmul.f32 %v2088, %v2088
      %v2097 = vmul.f32 %v2089, %v2089
      %v2098 = vmul.f32 %v2090, %v2090
      %v2099 = vmul.f32 %v2091, %v2091
      %v2100 = vmul.f32 %v2092, %v2092
      %v2101 = vmul.f32 %v2093, %v2093
      %v2102 = vsel %vm477, %v2094, 0.0
      %v2103 = vsel %vm477, %v2095, 0.0
      %v2104 = vadd.f32 %v2102, %v2103
      %v2105 = vsel %vm477, %v2096, 0.0
      %v2106 = vadd.f32 %v2104, %v2105
      %v2107 = vsel %vm477, %v2097, 0.0
      %v2108 = vadd.f32 %v2106, %v2107
      %v2109 = vsel %vm477, %v2098, 0.0
      %v2110 = vadd.f32 %v2108, %v2109
      %v2111 = vsel %vm477, %v2099, 0.0
      %v2112 = vadd.f32 %v2110, %v2111
      %v2113 = vsel %vm477, %v2100, 0.0
      %v2114 = vadd.f32 %v2112, %v2113
      %v2115 = vsel %vm477, %v2101, 0.0
      %v2116 = vadd.f32 %v2114, %v2115
      %v2117 = vrot.slane %v2116, 4
      %v2118 = vadd.f32 %v2116, %v2117
      %v2119 = vrot.slane %v2118, 2
      %v2120 = vadd.f32 %v2118, %v2119
      %v2121 = vrot.slane %v2120, 1
      %v2122 = vadd.f32 %v2120, %v2121
      %v2123 = vmul.f32 %v2122, %v505
      %v2124 = vadd.f32 %v2123, 1e-05
      %v2125 = vrsqrt.pop %v2124
      %v2126 = vmul.f32 %v2125, %v2124
      %v2127 = vmul.f32 %v2126, %v2125
      %v2128 = vmul.f32 0.5, %v2127
      %v2129 = vsub.f32 1.5, %v2128
      %v2130 = vmul.f32 %v2125, %v2129
      %vm2131 = vweird.f32 %v2124
      %vm2132 = vweird.f32 %v2125
      %vm2133 = vmor %vm2131, %vm2132
      %v2134 = vsel %vm2133, %v2125, %v2130
      %v2135 = vmul.f32 %v2086, %v2134
      %v2136 = vmul.f32 %v2087, %v2134
      %v2137 = vmul.f32 %v2088, %v2134
      %v2138 = vmul.f32 %v2089, %v2134
      %v2139 = vmul.f32 %v2090, %v2134
      %v2140 = vmul.f32 %v2091, %v2134
      %v2141 = vmul.f32 %v2092, %v2134
      %v2142 = vmul.f32 %v2093, %v2134
      %v2143 = vld [vmem:[%s8] sm:$0xff]
      %v2144 = vld [vmem:[%s8 + $0x8] sm:$0xff]
      %v2145 = vld [vmem:[%s8 + $0x10] sm:$0xff]
      %v2146 = vld [vmem:[%s8 + $0x18] sm:$0xff]
      %v2147 = vld [vmem:[%s8 + $0x20] sm:$0xff]
      %v2148 = vld [vmem:[%s8 + $0x28] sm:$0xff]
      %v2149 = vld [vmem:[%s8 + $0x30] sm:$0xff]
      %v2150 = vld [vmem:[%s8 + $0x38] sm:$0xff]
      %2152 = vset.pattern.permute.xlu0 0
      %2153 = vperm.xlu0 %2152, %v2143
      %v2154 = vpop.permute.xlu0 %2153
      %2157 = vset.pattern.permute.xlu0 0
      %2158 = vperm.xlu0 %2157, %v2144
      %v2159 = vpop.permute.xlu0 %2158
      %2162 = vset.pattern.permute.xlu0 0
      %2163 = vperm.xlu0 %2162, %v2145
      %v2164 = vpop.permute.xlu0 %2163
      %2167 = vset.pattern.permute.xlu0 0
      %2168 = vperm.xlu0 %2167, %v2146
      %v2169 = vpop.permute.xlu0 %2168
      %2172 = vset.pattern.permute.xlu0 0
      %2173 = vperm.xlu0 %2172, %v2147
      %v2174 = vpop.permute.xlu0 %2173
      %2177 = vset.pattern.permute.xlu0 0
      %2178 = vperm.xlu0 %2177, %v2148
      %v2179 = vpop.permute.xlu0 %2178
      %2182 = vset.pattern.permute.xlu0 0
      %2183 = vperm.xlu0 %2182, %v2149
      %v2184 = vpop.permute.xlu0 %2183
      %2187 = vset.pattern.permute.xlu0 0
      %2188 = vperm.xlu0 %2187, %v2150
      %v2189 = vpop.permute.xlu0 %2188
      %v2191 = vmul.f32 %v2135, %v2154
      %v2192 = vmul.f32 %v2136, %v2159
      %v2193 = vmul.f32 %v2137, %v2164
      %v2194 = vmul.f32 %v2138, %v2169
      %v2195 = vmul.f32 %v2139, %v2174
      %v2196 = vmul.f32 %v2140, %v2179
      %v2197 = vmul.f32 %v2141, %v2184
      %v2198 = vmul.f32 %v2142, %v2189
      %v2199 = vld [vmem:[%s9] sm:$0xff]
      %v2200 = vld [vmem:[%s9 + $0x8] sm:$0xff]
      %v2201 = vld [vmem:[%s9 + $0x10] sm:$0xff]
      %v2202 = vld [vmem:[%s9 + $0x18] sm:$0xff]
      %v2203 = vld [vmem:[%s9 + $0x20] sm:$0xff]
      %v2204 = vld [vmem:[%s9 + $0x28] sm:$0xff]
      %v2205 = vld [vmem:[%s9 + $0x30] sm:$0xff]
      %v2206 = vld [vmem:[%s9 + $0x38] sm:$0xff]
      %2208 = vset.pattern.permute.xlu0 0
      %2209 = vperm.xlu0 %2208, %v2199
      %v2210 = vpop.permute.xlu0 %2209
      %2213 = vset.pattern.permute.xlu0 0
      %2214 = vperm.xlu0 %2213, %v2200
      %v2215 = vpop.permute.xlu0 %2214
      %2218 = vset.pattern.permute.xlu0 0
      %2219 = vperm.xlu0 %2218, %v2201
      %v2220 = vpop.permute.xlu0 %2219
      %2223 = vset.pattern.permute.xlu0 0
      %2224 = vperm.xlu0 %2223, %v2202
      %v2225 = vpop.permute.xlu0 %2224
      %2228 = vset.pattern.permute.xlu0 0
      %2229 = vperm.xlu0 %2228, %v2203
      %v2230 = vpop.permute.xlu0 %2229
      %2233 = vset.pattern.permute.xlu0 0
      %2234 = vperm.xlu0 %2233, %v2204
      %v2235 = vpop.permute.xlu0 %2234
      %2238 = vset.pattern.permute.xlu0 0
      %2239 = vperm.xlu0 %2238, %v2205
      %v2240 = vpop.permute.xlu0 %2239
      %2243 = vset.pattern.permute.xlu0 0
      %2244 = vperm.xlu0 %2243, %v2206
      %v2245 = vpop.permute.xlu0 %2244
      %v2247 = vadd.f32 %v2191, %v2210
      %v2248 = vadd.f32 %v2192, %v2215
      %v2249 = vadd.f32 %v2193, %v2220
      %v2250 = vadd.f32 %v2194, %v2225
      %v2251 = vadd.f32 %v2195, %v2230
      %v2252 = vadd.f32 %v2196, %v2235
      %v2253 = vadd.f32 %v2197, %v2240
      %v2254 = vadd.f32 %v2198, %v2245
      %v2255 = vadd.f32 %v2247, %v469
      %v2256 = vadd.f32 %v2248, %v470
      %v2257 = vadd.f32 %v2249, %v471
      %v2258 = vadd.f32 %v2250, %v472
      %v2259 = vadd.f32 %v2251, %v473
      %v2260 = vadd.f32 %v2252, %v474
      %v2261 = vadd.f32 %v2253, %v475
      %v2262 = vadd.f32 %v2254, %v476
      %v2263 = vld [vmem:[%s10] sm:$0xf]
      %v2264 = vld [vmem:[%s10 + $0x4] sm:$0xf]
      %v2265 = vld [vmem:[%s10 + $0x8] sm:$0xf]
      %v2266 = vld [vmem:[%s10 + $0xc] sm:$0xf]
      %v2267 = vld [vmem:[%s10 + $0x10] sm:$0xf]
      %v2268 = vld [vmem:[%s10 + $0x14] sm:$0xf]
      %v2269 = vld [vmem:[%s10 + $0x18] sm:$0xf]
      %v2270 = vld [vmem:[%s10 + $0x1c] sm:$0xf]
      %v2271 = vld [vmem:[%s10 + $0x20] sm:$0xf]
      %v2272 = vld [vmem:[%s10 + $0x24] sm:$0xf]
      %v2273 = vld [vmem:[%s10 + $0x28] sm:$0xf]
      %v2274 = vld [vmem:[%s10 + $0x2c] sm:$0xf]
      %v2275 = vld [vmem:[%s10 + $0x30] sm:$0xf]
      %v2276 = vld [vmem:[%s10 + $0x34] sm:$0xf]
      %v2277 = vld [vmem:[%s10 + $0x38] sm:$0xf]
      %v2278 = vld [vmem:[%s10 + $0x3c] sm:$0xf]
      %v2279 = vpack.c.bf16 %v2256, %v2255
      %v2280 = vpack.c.bf16 %v2258, %v2257
      %v2281 = vpack.c.bf16 %v2260, %v2259
      %v2282 = vpack.c.bf16 %v2262, %v2261
      %v2299 = vunpack.c.l.b16 %v2263
      %v2300 = vunpack.c.l.b16 %v2264
      %v2301 = vunpack.c.l.b16 %v2265
      %v2302 = vunpack.c.l.b16 %v2266
      %v2303 = vunpack.c.l.b16 %v2267
      %v2304 = vunpack.c.l.b16 %v2268
      %v2305 = vunpack.c.l.b16 %v2269
      %v2306 = vunpack.c.l.b16 %v2270
      %v2307 = vunpack.c.l.b16 %v2271
      %v2308 = vunpack.c.l.b16 %v2272
      %v2309 = vunpack.c.l.b16 %v2273
      %v2310 = vunpack.c.l.b16 %v2274
      %v2311 = vunpack.c.l.b16 %v2275
      %v2312 = vunpack.c.l.b16 %v2276
      %v2313 = vunpack.c.l.b16 %v2277
      %v2314 = vunpack.c.l.b16 %v2278
      %v2315 = vpack.c.b16 %v2300, %v2299
      %v2316 = vpack.c.b16 %v2302, %v2301
      %v2317 = vpack.c.b16 %v2304, %v2303
      %v2318 = vpack.c.b16 %v2306, %v2305
      %v2319 = vpack.c.b16 %v2308, %v2307
      %v2320 = vpack.c.b16 %v2310, %v2309
      %v2321 = vpack.c.b16 %v2312, %v2311
      %v2322 = vpack.c.b16 %v2314, %v2313
      %v2324 = vsel %vm924, %v2315, 0
      %v2327 = vsel %vm924, %v2316, 0
      %v2330 = vsel %vm924, %v2317, 0
      %v2333 = vsel %vm924, %v2318, 0
      %v2336 = vsel %vm924, %v2319, 0
      %v2339 = vsel %vm924, %v2320, 0
      %v2342 = vsel %vm924, %v2321, 0
      %v2345 = vsel %vm924, %v2322, 0
      %2347 = vmatpush.bf16.msra.mxu0 0
      %2348 = vmatpush.bf16.msra.mxu0 0
      %2349 = vmatpush.bf16.msra.mxu0 0
      %2350 = vmatpush.bf16.msra.mxu0 0
      %2351 = vmatpush.bf16.msra.mxu0 %v2282
      %2352 = vmatpush.bf16.msra.mxu0 %v2281
      %2353 = vmatpush.bf16.msra.mxu0 %v2280
      %2354 = vmatpush.bf16.msra.mxu0 %v2279
      %2355 = vmatmul.bf16.gmra.mxu0 %v2324
      %v2356 = vpop.f32.mrf.mxu0
      %v2357 = vadd.f32 0.0, %v2356
      %v2358 = vpop.f32.mrf.mxu0
      %v2359 = vadd.f32 0.0, %v2358
      %2360 = vmatmul.bf16.gmra.mxu0 %v2327
      %v2361 = vpop.f32.mrf.mxu0
      %v2362 = vadd.f32 0.0, %v2361
      %v2363 = vpop.f32.mrf.mxu0
      %v2364 = vadd.f32 0.0, %v2363
      %2365 = vmatmul.bf16.gmra.mxu0 %v2330
      %v2366 = vpop.f32.mrf.mxu0
      %v2367 = vadd.f32 0.0, %v2366
      %v2368 = vpop.f32.mrf.mxu0
      %v2369 = vadd.f32 0.0, %v2368
      %2370 = vmatmul.bf16.gmra.mxu0 %v2333
      %v2371 = vpop.f32.mrf.mxu0
      %v2372 = vadd.f32 0.0, %v2371
      %v2373 = vpop.f32.mrf.mxu0
      %v2374 = vadd.f32 0.0, %v2373
      %2375 = vmatmul.bf16.gmra.mxu0 %v2336
      %v2376 = vpop.f32.mrf.mxu0
      %v2377 = vadd.f32 0.0, %v2376
      %v2378 = vpop.f32.mrf.mxu0
      %v2379 = vadd.f32 0.0, %v2378
      %2380 = vmatmul.bf16.gmra.mxu0 %v2339
      %v2381 = vpop.f32.mrf.mxu0
      %v2382 = vadd.f32 0.0, %v2381
      %v2383 = vpop.f32.mrf.mxu0
      %v2384 = vadd.f32 0.0, %v2383
      %2385 = vmatmul.bf16.gmra.mxu0 %v2342
      %v2386 = vpop.f32.mrf.mxu0
      %v2387 = vadd.f32 0.0, %v2386
      %v2388 = vpop.f32.mrf.mxu0
      %v2389 = vadd.f32 0.0, %v2388
      %2390 = vmatmul.bf16.gmra.mxu0 %v2345
      %v2391 = vpop.f32.mrf.mxu0
      %v2392 = vadd.f32 0.0, %v2391
      %v2393 = vpop.f32.mrf.mxu0
      %v2394 = vadd.f32 0.0, %v2393
      %2395 = vdwg.mxu0
      %v2396 = vmax.f32 %v2357, 0.0
      %v2397 = vmax.f32 %v2359, 0.0
      %v2398 = vmax.f32 %v2362, 0.0
      %v2399 = vmax.f32 %v2364, 0.0
      %v2400 = vmax.f32 %v2367, 0.0
      %v2401 = vmax.f32 %v2369, 0.0
      %v2402 = vmax.f32 %v2372, 0.0
      %v2403 = vmax.f32 %v2374, 0.0
      %v2404 = vmax.f32 %v2377, 0.0
      %v2405 = vmax.f32 %v2379, 0.0
      %v2406 = vmax.f32 %v2382, 0.0
      %v2407 = vmax.f32 %v2384, 0.0
      %v2408 = vmax.f32 %v2387, 0.0
      %v2409 = vmax.f32 %v2389, 0.0
      %v2410 = vmax.f32 %v2392, 0.0
      %v2411 = vmax.f32 %v2394, 0.0
      %v2412 = vlaneseq
      %v2413 = vshrl.u32 %v2412, 7
      %v2414 = vadd.s32 %v2413, 8
      %v2415 = vlaneseq
      %v2416 = vand.u32 %v2415, 127
      %v2417 = vsub.s32 %v2413, %v2416
      %v2418 = vsub.s32 %v2414, %v2416
      %vm2419 = vcmp.eq.s32.totalorder %v2417, 4294967294
      %vm2420 = vcmp.eq.s32.totalorder %v2418, 4294967294
      %v2421 = vsel %vm2419, 1, 0
      %v2422 = vsel %vm2420, 1, 0
      %v2423 = vcvt.s32.f32 %v2421
      %v2424 = vcvt.s32.f32 %v2422
      %v2426 = vsel %vm477, %v2396, 0
      %v2429 = vsel %vm477, %v2397, 0
      %v2432 = vsel %vm477, %v2398, 0
      %v2435 = vsel %vm477, %v2399, 0
      %v2438 = vsel %vm477, %v2400, 0
      %v2441 = vsel %vm477, %v2401, 0
      %v2444 = vsel %vm477, %v2402, 0
      %v2447 = vsel %vm477, %v2403, 0
      %v2450 = vsel %vm477, %v2404, 0
      %v2453 = vsel %vm477, %v2405, 0
      %v2456 = vsel %vm477, %v2406, 0
      %v2459 = vsel %vm477, %v2407, 0
      %v2462 = vsel %vm477, %v2408, 0
      %v2465 = vsel %vm477, %v2409, 0
      %v2468 = vsel %vm477, %v2410, 0
      %v2471 = vsel %vm477, %v2411, 0
      %2473 = vmatpush.msra.mxu0 0.0
      %2474 = vmatpush.msra.mxu0 0.0
      %2475 = vmatpush.msra.mxu0 0.0
      %2476 = vmatpush.msra.mxu0 0.0
      %2477 = vmatpush.msra.mxu0 0.0
      %2478 = vmatpush.msra.mxu0 0.0
      %2479 = vmatpush.msra.mxu0 0.0
      %2480 = vmatpush.msra.mxu0 0.0
      %2481 = vmatpush.msra.mxu0 0.0
      %2482 = vmatpush.msra.mxu0 0.0
      %2483 = vmatpush.msra.mxu0 0.0
      %2484 = vmatpush.msra.mxu0 0.0
      %2485 = vmatpush.msra.mxu0 0.0
      %2486 = vmatpush.msra.mxu0 0.0
      %2487 = vmatpush.msra.mxu0 %v2424
      %2488 = vmatpush.msra.mxu0 %v2423
      %2489 = vmatmul.f32.gmra.mxu0 %v2426
      %v2490 = vpop.f32.mrf.mxu0
      %v2491 = vadd.f32 0.0, %v2490
      %2492 = vmatmul.f32.gmra.mxu0 %v2429
      %v2493 = vpop.f32.mrf.mxu0
      %v2494 = vadd.f32 0.0, %v2493
      %2495 = vmatmul.f32.gmra.mxu0 %v2432
      %v2496 = vpop.f32.mrf.mxu0
      %v2497 = vadd.f32 0.0, %v2496
      %2498 = vmatmul.f32.gmra.mxu0 %v2435
      %v2499 = vpop.f32.mrf.mxu0
      %v2500 = vadd.f32 0.0, %v2499
      %2501 = vmatmul.f32.gmra.mxu0 %v2438
      %v2502 = vpop.f32.mrf.mxu0
      %v2503 = vadd.f32 0.0, %v2502
      %2504 = vmatmul.f32.gmra.mxu0 %v2441
      %v2505 = vpop.f32.mrf.mxu0
      %v2506 = vadd.f32 0.0, %v2505
      %2507 = vmatmul.f32.gmra.mxu0 %v2444
      %v2508 = vpop.f32.mrf.mxu0
      %v2509 = vadd.f32 0.0, %v2508
      %2510 = vmatmul.f32.gmra.mxu0 %v2447
      %v2511 = vpop.f32.mrf.mxu0
      %v2512 = vadd.f32 0.0, %v2511
      %2513 = vmatmul.f32.gmra.mxu0 %v2450
      %v2514 = vpop.f32.mrf.mxu0
      %v2515 = vadd.f32 0.0, %v2514
      %2516 = vmatmul.f32.gmra.mxu0 %v2453
      %v2517 = vpop.f32.mrf.mxu0
      %v2518 = vadd.f32 0.0, %v2517
      %2519 = vmatmul.f32.gmra.mxu0 %v2456
      %v2520 = vpop.f32.mrf.mxu0
      %v2521 = vadd.f32 0.0, %v2520
      %2522 = vmatmul.f32.gmra.mxu0 %v2459
      %v2523 = vpop.f32.mrf.mxu0
      %v2524 = vadd.f32 0.0, %v2523
      %2525 = vmatmul.f32.gmra.mxu0 %v2462
      %v2526 = vpop.f32.mrf.mxu0
      %v2527 = vadd.f32 0.0, %v2526
      %2528 = vmatmul.f32.gmra.mxu0 %v2465
      %v2529 = vpop.f32.mrf.mxu0
      %v2530 = vadd.f32 0.0, %v2529
      %2531 = vmatmul.f32.gmra.mxu0 %v2468
      %v2532 = vpop.f32.mrf.mxu0
      %v2533 = vadd.f32 0.0, %v2532
      %2534 = vmatmul.f32.gmra.mxu0 %v2471
      %v2535 = vpop.f32.mrf.mxu0
      %v2536 = vadd.f32 0.0, %v2535
      %2537 = vdwg.mxu0
      %v2538 = vld [vmem:[%s11] sm:$0xff]
      %v2539 = vld [vmem:[%s11 + $0x8] sm:$0xff]
      %v2540 = vld [vmem:[%s11 + $0x10] sm:$0xff]
      %v2541 = vld [vmem:[%s11 + $0x18] sm:$0xff]
      %v2542 = vld [vmem:[%s11 + $0x20] sm:$0xff]
      %v2543 = vld [vmem:[%s11 + $0x28] sm:$0xff]
      %v2544 = vld [vmem:[%s11 + $0x30] sm:$0xff]
      %v2545 = vld [vmem:[%s11 + $0x38] sm:$0xff]
      %v2546 = vld [vmem:[%s11 + $0x40] sm:$0xff]
      %v2547 = vld [vmem:[%s11 + $0x48] sm:$0xff]
      %v2548 = vld [vmem:[%s11 + $0x50] sm:$0xff]
      %v2549 = vld [vmem:[%s11 + $0x58] sm:$0xff]
      %v2550 = vld [vmem:[%s11 + $0x60] sm:$0xff]
      %v2551 = vld [vmem:[%s11 + $0x68] sm:$0xff]
      %v2552 = vld [vmem:[%s11 + $0x70] sm:$0xff]
      %v2553 = vld [vmem:[%s11 + $0x78] sm:$0xff]
      %2555 = vset.pattern.permute.xlu0 0
      %2556 = vperm.xlu0 %2555, %v2538
      %v2557 = vpop.permute.xlu0 %2556
      %2560 = vset.pattern.permute.xlu0 0
      %2561 = vperm.xlu0 %2560, %v2539
      %v2562 = vpop.permute.xlu0 %2561
      %2565 = vset.pattern.permute.xlu0 0
      %2566 = vperm.xlu0 %2565, %v2540
      %v2567 = vpop.permute.xlu0 %2566
      %2570 = vset.pattern.permute.xlu0 0
      %2571 = vperm.xlu0 %2570, %v2541
      %v2572 = vpop.permute.xlu0 %2571
      %2575 = vset.pattern.permute.xlu0 0
      %2576 = vperm.xlu0 %2575, %v2542
      %v2577 = vpop.permute.xlu0 %2576
      %2580 = vset.pattern.permute.xlu0 0
      %2581 = vperm.xlu0 %2580, %v2543
      %v2582 = vpop.permute.xlu0 %2581
      %2585 = vset.pattern.permute.xlu0 0
      %2586 = vperm.xlu0 %2585, %v2544
      %v2587 = vpop.permute.xlu0 %2586
      %2590 = vset.pattern.permute.xlu0 0
      %2591 = vperm.xlu0 %2590, %v2545
      %v2592 = vpop.permute.xlu0 %2591
      %2595 = vset.pattern.permute.xlu0 0
      %2596 = vperm.xlu0 %2595, %v2546
      %v2597 = vpop.permute.xlu0 %2596
      %2600 = vset.pattern.permute.xlu0 0
      %2601 = vperm.xlu0 %2600, %v2547
      %v2602 = vpop.permute.xlu0 %2601
      %2605 = vset.pattern.permute.xlu0 0
      %2606 = vperm.xlu0 %2605, %v2548
      %v2607 = vpop.permute.xlu0 %2606
      %2610 = vset.pattern.permute.xlu0 0
      %2611 = vperm.xlu0 %2610, %v2549
      %v2612 = vpop.permute.xlu0 %2611
      %2615 = vset.pattern.permute.xlu0 0
      %2616 = vperm.xlu0 %2615, %v2550
      %v2617 = vpop.permute.xlu0 %2616
      %2620 = vset.pattern.permute.xlu0 0
      %2621 = vperm.xlu0 %2620, %v2551
      %v2622 = vpop.permute.xlu0 %2621
      %2625 = vset.pattern.permute.xlu0 0
      %2626 = vperm.xlu0 %2625, %v2552
      %v2627 = vpop.permute.xlu0 %2626
      %2630 = vset.pattern.permute.xlu0 0
      %2631 = vperm.xlu0 %2630, %v2553
      %v2632 = vpop.permute.xlu0 %2631
      %v2634 = vmul.f32 %v2491, %v2557
      %v2635 = vmul.f32 %v2494, %v2562
      %v2636 = vmul.f32 %v2497, %v2567
      %v2637 = vmul.f32 %v2500, %v2572
      %v2638 = vmul.f32 %v2503, %v2577
      %v2639 = vmul.f32 %v2506, %v2582
      %v2640 = vmul.f32 %v2509, %v2587
      %v2641 = vmul.f32 %v2512, %v2592
      %v2642 = vmul.f32 %v2515, %v2597
      %v2643 = vmul.f32 %v2518, %v2602
      %v2644 = vmul.f32 %v2521, %v2607
      %v2645 = vmul.f32 %v2524, %v2612
      %v2646 = vmul.f32 %v2527, %v2617
      %v2647 = vmul.f32 %v2530, %v2622
      %v2648 = vmul.f32 %v2533, %v2627
      %v2649 = vmul.f32 %v2536, %v2632
      %v2650 = vadd.f32 %v2634, 0.0
      %v2651 = vadd.f32 %v2635, 0.0
      %v2652 = vadd.f32 %v2636, 0.0
      %v2653 = vadd.f32 %v2637, 0.0
      %v2654 = vadd.f32 %v2638, 0.0
      %v2655 = vadd.f32 %v2639, 0.0
      %v2656 = vadd.f32 %v2640, 0.0
      %v2657 = vadd.f32 %v2641, 0.0
      %v2658 = vadd.f32 %v2642, 0.0
      %v2659 = vadd.f32 %v2643, 0.0
      %v2660 = vadd.f32 %v2644, 0.0
      %v2661 = vadd.f32 %v2645, 0.0
      %v2662 = vadd.f32 %v2646, 0.0
      %v2663 = vadd.f32 %v2647, 0.0
      %v2664 = vadd.f32 %v2648, 0.0
      %v2665 = vadd.f32 %v2649, 0.0
      %vm2666 = vcmp.eq.s32.totalorder %v2417, 4294967295
      %vm2667 = vcmp.eq.s32.totalorder %v2418, 4294967295
      %v2668 = vsel %vm2666, 1, 0
      %v2669 = vsel %vm2667, 1, 0
      %v2670 = vcvt.s32.f32 %v2668
      %v2671 = vcvt.s32.f32 %v2669
      %2672 = vmatpush.msra.mxu0 0.0
      %2673 = vmatpush.msra.mxu0 0.0
      %2674 = vmatpush.msra.mxu0 0.0
      %2675 = vmatpush.msra.mxu0 0.0
      %2676 = vmatpush.msra.mxu0 0.0
      %2677 = vmatpush.msra.mxu0 0.0
      %2678 = vmatpush.msra.mxu0 0.0
      %2679 = vmatpush.msra.mxu0 0.0
      %2680 = vmatpush.msra.mxu0 0.0
      %2681 = vmatpush.msra.mxu0 0.0
      %2682 = vmatpush.msra.mxu0 0.0
      %2683 = vmatpush.msra.mxu0 0.0
      %2684 = vmatpush.msra.mxu0 0.0
      %2685 = vmatpush.msra.mxu0 0.0
      %2686 = vmatpush.msra.mxu0 %v2671
      %2687 = vmatpush.msra.mxu0 %v2670
      %2688 = vmatmul.f32.gmra.mxu0 %v2426
      %v2689 = vpop.f32.mrf.mxu0
      %v2690 = vadd.f32 0.0, %v2689
      %2691 = vmatmul.f32.gmra.mxu0 %v2429
      %v2692 = vpop.f32.mrf.mxu0
      %v2693 = vadd.f32 0.0, %v2692
      %2694 = vmatmul.f32.gmra.mxu0 %v2432
      %v2695 = vpop.f32.mrf.mxu0
      %v2696 = vadd.f32 0.0, %v2695
      %2697 = vmatmul.f32.gmra.mxu0 %v2435
      %v2698 = vpop.f32.mrf.mxu0
      %v2699 = vadd.f32 0.0, %v2698
      %2700 = vmatmul.f32.gmra.mxu0 %v2438
      %v2701 = vpop.f32.mrf.mxu0
      %v2702 = vadd.f32 0.0, %v2701
      %2703 = vmatmul.f32.gmra.mxu0 %v2441
      %v2704 = vpop.f32.mrf.mxu0
      %v2705 = vadd.f32 0.0, %v2704
      %2706 = vmatmul.f32.gmra.mxu0 %v2444
      %v2707 = vpop.f32.mrf.mxu0
      %v2708 = vadd.f32 0.0, %v2707
      %2709 = vmatmul.f32.gmra.mxu0 %v2447
      %v2710 = vpop.f32.mrf.mxu0
      %v2711 = vadd.f32 0.0, %v2710
      %2712 = vmatmul.f32.gmra.mxu0 %v2450
      %v2713 = vpop.f32.mrf.mxu0
      %v2714 = vadd.f32 0.0, %v2713
      %2715 = vmatmul.f32.gmra.mxu0 %v2453
      %v2716 = vpop.f32.mrf.mxu0
      %v2717 = vadd.f32 0.0, %v2716
      %2718 = vmatmul.f32.gmra.mxu0 %v2456
      %v2719 = vpop.f32.mrf.mxu0
      %v2720 = vadd.f32 0.0, %v2719
      %2721 = vmatmul.f32.gmra.mxu0 %v2459
      %v2722 = vpop.f32.mrf.mxu0
      %v2723 = vadd.f32 0.0, %v2722
      %2724 = vmatmul.f32.gmra.mxu0 %v2462
      %v2725 = vpop.f32.mrf.mxu0
      %v2726 = vadd.f32 0.0, %v2725
      %2727 = vmatmul.f32.gmra.mxu0 %v2465
      %v2728 = vpop.f32.mrf.mxu0
      %v2729 = vadd.f32 0.0, %v2728
      %2730 = vmatmul.f32.gmra.mxu0 %v2468
      %v2731 = vpop.f32.mrf.mxu0
      %v2732 = vadd.f32 0.0, %v2731
      %2733 = vmatmul.f32.gmra.mxu0 %v2471
      %v2734 = vpop.f32.mrf.mxu0
      %v2735 = vadd.f32 0.0, %v2734
      %2736 = vdwg.mxu0
      %2737 = vset.pattern.permute.xlu0 1
      %2738 = vperm.xlu0 %2737, %v2538
      %v2739 = vpop.permute.xlu0 %2738
      %2741 = vset.pattern.permute.xlu0 1
      %2742 = vperm.xlu0 %2741, %v2539
      %v2743 = vpop.permute.xlu0 %2742
      %2745 = vset.pattern.permute.xlu0 1
      %2746 = vperm.xlu0 %2745, %v2540
      %v2747 = vpop.permute.xlu0 %2746
      %2749 = vset.pattern.permute.xlu0 1
      %2750 = vperm.xlu0 %2749, %v2541
      %v2751 = vpop.permute.xlu0 %2750
      %2753 = vset.pattern.permute.xlu0 1
      %2754 = vperm.xlu0 %2753, %v2542
      %v2755 = vpop.permute.xlu0 %2754
      %2757 = vset.pattern.permute.xlu0 1
      %2758 = vperm.xlu0 %2757, %v2543
      %v2759 = vpop.permute.xlu0 %2758
      %2761 = vset.pattern.permute.xlu0 1
      %2762 = vperm.xlu0 %2761, %v2544
      %v2763 = vpop.permute.xlu0 %2762
      %2765 = vset.pattern.permute.xlu0 1
      %2766 = vperm.xlu0 %2765, %v2545
      %v2767 = vpop.permute.xlu0 %2766
      %2769 = vset.pattern.permute.xlu0 1
      %2770 = vperm.xlu0 %2769, %v2546
      %v2771 = vpop.permute.xlu0 %2770
      %2773 = vset.pattern.permute.xlu0 1
      %2774 = vperm.xlu0 %2773, %v2547
      %v2775 = vpop.permute.xlu0 %2774
      %2777 = vset.pattern.permute.xlu0 1
      %2778 = vperm.xlu0 %2777, %v2548
      %v2779 = vpop.permute.xlu0 %2778
      %2781 = vset.pattern.permute.xlu0 1
      %2782 = vperm.xlu0 %2781, %v2549
      %v2783 = vpop.permute.xlu0 %2782
      %2785 = vset.pattern.permute.xlu0 1
      %2786 = vperm.xlu0 %2785, %v2550
      %v2787 = vpop.permute.xlu0 %2786
      %2789 = vset.pattern.permute.xlu0 1
      %2790 = vperm.xlu0 %2789, %v2551
      %v2791 = vpop.permute.xlu0 %2790
      %2793 = vset.pattern.permute.xlu0 1
      %2794 = vperm.xlu0 %2793, %v2552
      %v2795 = vpop.permute.xlu0 %2794
      %2797 = vset.pattern.permute.xlu0 1
      %2798 = vperm.xlu0 %2797, %v2553
      %v2799 = vpop.permute.xlu0 %2798
      %v2801 = vmul.f32 %v2690, %v2739
      %v2802 = vmul.f32 %v2693, %v2743
      %v2803 = vmul.f32 %v2696, %v2747
      %v2804 = vmul.f32 %v2699, %v2751
      %v2805 = vmul.f32 %v2702, %v2755
      %v2806 = vmul.f32 %v2705, %v2759
      %v2807 = vmul.f32 %v2708, %v2763
      %v2808 = vmul.f32 %v2711, %v2767
      %v2809 = vmul.f32 %v2714, %v2771
      %v2810 = vmul.f32 %v2717, %v2775
      %v2811 = vmul.f32 %v2720, %v2779
      %v2812 = vmul.f32 %v2723, %v2783
      %v2813 = vmul.f32 %v2726, %v2787
      %v2814 = vmul.f32 %v2729, %v2791
      %v2815 = vmul.f32 %v2732, %v2795
      %v2816 = vmul.f32 %v2735, %v2799
      %v2817 = vadd.f32 %v2650, %v2801
      %v2818 = vadd.f32 %v2651, %v2802
      %v2819 = vadd.f32 %v2652, %v2803
      %v2820 = vadd.f32 %v2653, %v2804
      %v2821 = vadd.f32 %v2654, %v2805
      %v2822 = vadd.f32 %v2655, %v2806
      %v2823 = vadd.f32 %v2656, %v2807
      %v2824 = vadd.f32 %v2657, %v2808
      %v2825 = vadd.f32 %v2658, %v2809
      %v2826 = vadd.f32 %v2659, %v2810
      %v2827 = vadd.f32 %v2660, %v2811
      %v2828 = vadd.f32 %v2661, %v2812
      %v2829 = vadd.f32 %v2662, %v2813
      %v2830 = vadd.f32 %v2663, %v2814
      %v2831 = vadd.f32 %v2664, %v2815
      %v2832 = vadd.f32 %v2665, %v2816
      %vm2833 = vcmp.eq.s32.totalorder %v2417, 0
      %vm2834 = vcmp.eq.s32.totalorder %v2418, 0
      %v2835 = vsel %vm2833, 1, 0
      %v2836 = vsel %vm2834, 1, 0
      %v2837 = vcvt.s32.f32 %v2835
      %v2838 = vcvt.s32.f32 %v2836
      %2839 = vmatpush.msra.mxu0 0.0
      %2840 = vmatpush.msra.mxu0 0.0
      %2841 = vmatpush.msra.mxu0 0.0
      %2842 = vmatpush.msra.mxu0 0.0
      %2843 = vmatpush.msra.mxu0 0.0
      %2844 = vmatpush.msra.mxu0 0.0
      %2845 = vmatpush.msra.mxu0 0.0
      %2846 = vmatpush.msra.mxu0 0.0
      %2847 = vmatpush.msra.mxu0 0.0
      %2848 = vmatpush.msra.mxu0 0.0
      %2849 = vmatpush.msra.mxu0 0.0
      %2850 = vmatpush.msra.mxu0 0.0
      %2851 = vmatpush.msra.mxu0 0.0
      %2852 = vmatpush.msra.mxu0 0.0
      %2853 = vmatpush.msra.mxu0 %v2838
      %2854 = vmatpush.msra.mxu0 %v2837
      %2855 = vmatmul.f32.gmra.mxu0 %v2426
      %v2856 = vpop.f32.mrf.mxu0
      %v2857 = vadd.f32 0.0, %v2856
      %2858 = vmatmul.f32.gmra.mxu0 %v2429
      %v2859 = vpop.f32.mrf.mxu0
      %v2860 = vadd.f32 0.0, %v2859
      %2861 = vmatmul.f32.gmra.mxu0 %v2432
      %v2862 = vpop.f32.mrf.mxu0
      %v2863 = vadd.f32 0.0, %v2862
      %2864 = vmatmul.f32.gmra.mxu0 %v2435
      %v2865 = vpop.f32.mrf.mxu0
      %v2866 = vadd.f32 0.0, %v2865
      %2867 = vmatmul.f32.gmra.mxu0 %v2438
      %v2868 = vpop.f32.mrf.mxu0
      %v2869 = vadd.f32 0.0, %v2868
      %2870 = vmatmul.f32.gmra.mxu0 %v2441
      %v2871 = vpop.f32.mrf.mxu0
      %v2872 = vadd.f32 0.0, %v2871
      %2873 = vmatmul.f32.gmra.mxu0 %v2444
      %v2874 = vpop.f32.mrf.mxu0
      %v2875 = vadd.f32 0.0, %v2874
      %2876 = vmatmul.f32.gmra.mxu0 %v2447
      %v2877 = vpop.f32.mrf.mxu0
      %v2878 = vadd.f32 0.0, %v2877
      %2879 = vmatmul.f32.gmra.mxu0 %v2450
      %v2880 = vpop.f32.mrf.mxu0
      %v2881 = vadd.f32 0.0, %v2880
      %2882 = vmatmul.f32.gmra.mxu0 %v2453
      %v2883 = vpop.f32.mrf.mxu0
      %v2884 = vadd.f32 0.0, %v2883
      %2885 = vmatmul.f32.gmra.mxu0 %v2456
      %v2886 = vpop.f32.mrf.mxu0
      %v2887 = vadd.f32 0.0, %v2886
      %2888 = vmatmul.f32.gmra.mxu0 %v2459
      %v2889 = vpop.f32.mrf.mxu0
      %v2890 = vadd.f32 0.0, %v2889
      %2891 = vmatmul.f32.gmra.mxu0 %v2462
      %v2892 = vpop.f32.mrf.mxu0
      %v2893 = vadd.f32 0.0, %v2892
      %2894 = vmatmul.f32.gmra.mxu0 %v2465
      %v2895 = vpop.f32.mrf.mxu0
      %v2896 = vadd.f32 0.0, %v2895
      %2897 = vmatmul.f32.gmra.mxu0 %v2468
      %v2898 = vpop.f32.mrf.mxu0
      %v2899 = vadd.f32 0.0, %v2898
      %2900 = vmatmul.f32.gmra.mxu0 %v2471
      %v2901 = vpop.f32.mrf.mxu0
      %v2902 = vadd.f32 0.0, %v2901
      %2903 = vdwg.mxu0
      %2904 = vset.pattern.permute.xlu0 2
      %2905 = vperm.xlu0 %2904, %v2538
      %v2906 = vpop.permute.xlu0 %2905
      %2908 = vset.pattern.permute.xlu0 2
      %2909 = vperm.xlu0 %2908, %v2539
      %v2910 = vpop.permute.xlu0 %2909
      %2912 = vset.pattern.permute.xlu0 2
      %2913 = vperm.xlu0 %2912, %v2540
      %v2914 = vpop.permute.xlu0 %2913
      %2916 = vset.pattern.permute.xlu0 2
      %2917 = vperm.xlu0 %2916, %v2541
      %v2918 = vpop.permute.xlu0 %2917
      %2920 = vset.pattern.permute.xlu0 2
      %2921 = vperm.xlu0 %2920, %v2542
      %v2922 = vpop.permute.xlu0 %2921
      %2924 = vset.pattern.permute.xlu0 2
      %2925 = vperm.xlu0 %2924, %v2543
      %v2926 = vpop.permute.xlu0 %2925
      %2928 = vset.pattern.permute.xlu0 2
      %2929 = vperm.xlu0 %2928, %v2544
      %v2930 = vpop.permute.xlu0 %2929
      %2932 = vset.pattern.permute.xlu0 2
      %2933 = vperm.xlu0 %2932, %v2545
      %v2934 = vpop.permute.xlu0 %2933
      %2936 = vset.pattern.permute.xlu0 2
      %2937 = vperm.xlu0 %2936, %v2546
      %v2938 = vpop.permute.xlu0 %2937
      %2940 = vset.pattern.permute.xlu0 2
      %2941 = vperm.xlu0 %2940, %v2547
      %v2942 = vpop.permute.xlu0 %2941
      %2944 = vset.pattern.permute.xlu0 2
      %2945 = vperm.xlu0 %2944, %v2548
      %v2946 = vpop.permute.xlu0 %2945
      %2948 = vset.pattern.permute.xlu0 2
      %2949 = vperm.xlu0 %2948, %v2549
      %v2950 = vpop.permute.xlu0 %2949
      %2952 = vset.pattern.permute.xlu0 2
      %2953 = vperm.xlu0 %2952, %v2550
      %v2954 = vpop.permute.xlu0 %2953
      %2956 = vset.pattern.permute.xlu0 2
      %2957 = vperm.xlu0 %2956, %v2551
      %v2958 = vpop.permute.xlu0 %2957
      %2960 = vset.pattern.permute.xlu0 2
      %2961 = vperm.xlu0 %2960, %v2552
      %v2962 = vpop.permute.xlu0 %2961
      %2964 = vset.pattern.permute.xlu0 2
      %2965 = vperm.xlu0 %2964, %v2553
      %v2966 = vpop.permute.xlu0 %2965
      %v2968 = vmul.f32 %v2857, %v2906
      %v2969 = vmul.f32 %v2860, %v2910
      %v2970 = vmul.f32 %v2863, %v2914
      %v2971 = vmul.f32 %v2866, %v2918
      %v2972 = vmul.f32 %v2869, %v2922
      %v2973 = vmul.f32 %v2872, %v2926
      %v2974 = vmul.f32 %v2875, %v2930
      %v2975 = vmul.f32 %v2878, %v2934
      %v2976 = vmul.f32 %v2881, %v2938
      %v2977 = vmul.f32 %v2884, %v2942
      %v2978 = vmul.f32 %v2887, %v2946
      %v2979 = vmul.f32 %v2890, %v2950
      %v2980 = vmul.f32 %v2893, %v2954
      %v2981 = vmul.f32 %v2896, %v2958
      %v2982 = vmul.f32 %v2899, %v2962
      %v2983 = vmul.f32 %v2902, %v2966
      %v2984 = vadd.f32 %v2817, %v2968
      %v2985 = vadd.f32 %v2818, %v2969
      %v2986 = vadd.f32 %v2819, %v2970
      %v2987 = vadd.f32 %v2820, %v2971
      %v2988 = vadd.f32 %v2821, %v2972
      %v2989 = vadd.f32 %v2822, %v2973
      %v2990 = vadd.f32 %v2823, %v2974
      %v2991 = vadd.f32 %v2824, %v2975
      %v2992 = vadd.f32 %v2825, %v2976
      %v2993 = vadd.f32 %v2826, %v2977
      %v2994 = vadd.f32 %v2827, %v2978
      %v2995 = vadd.f32 %v2828, %v2979
      %v2996 = vadd.f32 %v2829, %v2980
      %v2997 = vadd.f32 %v2830, %v2981
      %v2998 = vadd.f32 %v2831, %v2982
      %v2999 = vadd.f32 %v2832, %v2983
      %vm3000 = vcmp.eq.s32.totalorder %v2417, 1
      %vm3001 = vcmp.eq.s32.totalorder %v2418, 1
      %v3002 = vsel %vm3000, 1, 0
      %v3003 = vsel %vm3001, 1, 0
      %v3004 = vcvt.s32.f32 %v3002
      %v3005 = vcvt.s32.f32 %v3003
      %3006 = vmatpush.msra.mxu0 0.0
      %3007 = vmatpush.msra.mxu0 0.0
      %3008 = vmatpush.msra.mxu0 0.0
      %3009 = vmatpush.msra.mxu0 0.0
      %3010 = vmatpush.msra.mxu0 0.0
      %3011 = vmatpush.msra.mxu0 0.0
      %3012 = vmatpush.msra.mxu0 0.0
      %3013 = vmatpush.msra.mxu0 0.0
      %3014 = vmatpush.msra.mxu0 0.0
      %3015 = vmatpush.msra.mxu0 0.0
      %3016 = vmatpush.msra.mxu0 0.0
      %3017 = vmatpush.msra.mxu0 0.0
      %3018 = vmatpush.msra.mxu0 0.0
      %3019 = vmatpush.msra.mxu0 0.0
      %3020 = vmatpush.msra.mxu0 %v3005
      %3021 = vmatpush.msra.mxu0 %v3004
      %3022 = vmatmul.f32.gmra.mxu0 %v2426
      %v3023 = vpop.f32.mrf.mxu0
      %v3024 = vadd.f32 0.0, %v3023
      %3025 = vmatmul.f32.gmra.mxu0 %v2429
      %v3026 = vpop.f32.mrf.mxu0
      %v3027 = vadd.f32 0.0, %v3026
      %3028 = vmatmul.f32.gmra.mxu0 %v2432
      %v3029 = vpop.f32.mrf.mxu0
      %v3030 = vadd.f32 0.0, %v3029
      %3031 = vmatmul.f32.gmra.mxu0 %v2435
      %v3032 = vpop.f32.mrf.mxu0
      %v3033 = vadd.f32 0.0, %v3032
      %3034 = vmatmul.f32.gmra.mxu0 %v2438
      %v3035 = vpop.f32.mrf.mxu0
      %v3036 = vadd.f32 0.0, %v3035
      %3037 = vmatmul.f32.gmra.mxu0 %v2441
      %v3038 = vpop.f32.mrf.mxu0
      %v3039 = vadd.f32 0.0, %v3038
      %3040 = vmatmul.f32.gmra.mxu0 %v2444
      %v3041 = vpop.f32.mrf.mxu0
      %v3042 = vadd.f32 0.0, %v3041
      %3043 = vmatmul.f32.gmra.mxu0 %v2447
      %v3044 = vpop.f32.mrf.mxu0
      %v3045 = vadd.f32 0.0, %v3044
      %3046 = vmatmul.f32.gmra.mxu0 %v2450
      %v3047 = vpop.f32.mrf.mxu0
      %v3048 = vadd.f32 0.0, %v3047
      %3049 = vmatmul.f32.gmra.mxu0 %v2453
      %v3050 = vpop.f32.mrf.mxu0
      %v3051 = vadd.f32 0.0, %v3050
      %3052 = vmatmul.f32.gmra.mxu0 %v2456
      %v3053 = vpop.f32.mrf.mxu0
      %v3054 = vadd.f32 0.0, %v3053
      %3055 = vmatmul.f32.gmra.mxu0 %v2459
      %v3056 = vpop.f32.mrf.mxu0
      %v3057 = vadd.f32 0.0, %v3056
      %3058 = vmatmul.f32.gmra.mxu0 %v2462
      %v3059 = vpop.f32.mrf.mxu0
      %v3060 = vadd.f32 0.0, %v3059
      %3061 = vmatmul.f32.gmra.mxu0 %v2465
      %v3062 = vpop.f32.mrf.mxu0
      %v3063 = vadd.f32 0.0, %v3062
      %3064 = vmatmul.f32.gmra.mxu0 %v2468
      %v3065 = vpop.f32.mrf.mxu0
      %v3066 = vadd.f32 0.0, %v3065
      %3067 = vmatmul.f32.gmra.mxu0 %v2471
      %v3068 = vpop.f32.mrf.mxu0
      %v3069 = vadd.f32 0.0, %v3068
      %3070 = vdwg.mxu0
      %3071 = vset.pattern.permute.xlu0 3
      %3072 = vperm.xlu0 %3071, %v2538
      %v3073 = vpop.permute.xlu0 %3072
      %3075 = vset.pattern.permute.xlu0 3
      %3076 = vperm.xlu0 %3075, %v2539
      %v3077 = vpop.permute.xlu0 %3076
      %3079 = vset.pattern.permute.xlu0 3
      %3080 = vperm.xlu0 %3079, %v2540
      %v3081 = vpop.permute.xlu0 %3080
      %3083 = vset.pattern.permute.xlu0 3
      %3084 = vperm.xlu0 %3083, %v2541
      %v3085 = vpop.permute.xlu0 %3084
      %3087 = vset.pattern.permute.xlu0 3
      %3088 = vperm.xlu0 %3087, %v2542
      %v3089 = vpop.permute.xlu0 %3088
      %3091 = vset.pattern.permute.xlu0 3
      %3092 = vperm.xlu0 %3091, %v2543
      %v3093 = vpop.permute.xlu0 %3092
      %3095 = vset.pattern.permute.xlu0 3
      %3096 = vperm.xlu0 %3095, %v2544
      %v3097 = vpop.permute.xlu0 %3096
      %3099 = vset.pattern.permute.xlu0 3
      %3100 = vperm.xlu0 %3099, %v2545
      %v3101 = vpop.permute.xlu0 %3100
      %3103 = vset.pattern.permute.xlu0 3
      %3104 = vperm.xlu0 %3103, %v2546
      %v3105 = vpop.permute.xlu0 %3104
      %3107 = vset.pattern.permute.xlu0 3
      %3108 = vperm.xlu0 %3107, %v2547
      %v3109 = vpop.permute.xlu0 %3108
      %3111 = vset.pattern.permute.xlu0 3
      %3112 = vperm.xlu0 %3111, %v2548
      %v3113 = vpop.permute.xlu0 %3112
      %3115 = vset.pattern.permute.xlu0 3
      %3116 = vperm.xlu0 %3115, %v2549
      %v3117 = vpop.permute.xlu0 %3116
      %3119 = vset.pattern.permute.xlu0 3
      %3120 = vperm.xlu0 %3119, %v2550
      %v3121 = vpop.permute.xlu0 %3120
      %3123 = vset.pattern.permute.xlu0 3
      %3124 = vperm.xlu0 %3123, %v2551
      %v3125 = vpop.permute.xlu0 %3124
      %3127 = vset.pattern.permute.xlu0 3
      %3128 = vperm.xlu0 %3127, %v2552
      %v3129 = vpop.permute.xlu0 %3128
      %3131 = vset.pattern.permute.xlu0 3
      %3132 = vperm.xlu0 %3131, %v2553
      %v3133 = vpop.permute.xlu0 %3132
      %v3135 = vmul.f32 %v3024, %v3073
      %v3136 = vmul.f32 %v3027, %v3077
      %v3137 = vmul.f32 %v3030, %v3081
      %v3138 = vmul.f32 %v3033, %v3085
      %v3139 = vmul.f32 %v3036, %v3089
      %v3140 = vmul.f32 %v3039, %v3093
      %v3141 = vmul.f32 %v3042, %v3097
      %v3142 = vmul.f32 %v3045, %v3101
      %v3143 = vmul.f32 %v3048, %v3105
      %v3144 = vmul.f32 %v3051, %v3109
      %v3145 = vmul.f32 %v3054, %v3113
      %v3146 = vmul.f32 %v3057, %v3117
      %v3147 = vmul.f32 %v3060, %v3121
      %v3148 = vmul.f32 %v3063, %v3125
      %v3149 = vmul.f32 %v3066, %v3129
      %v3150 = vmul.f32 %v3069, %v3133
      %v3151 = vadd.f32 %v2984, %v3135
      %v3152 = vadd.f32 %v2985, %v3136
      %v3153 = vadd.f32 %v2986, %v3137
      %v3154 = vadd.f32 %v2987, %v3138
      %v3155 = vadd.f32 %v2988, %v3139
      %v3156 = vadd.f32 %v2989, %v3140
      %v3157 = vadd.f32 %v2990, %v3141
      %v3158 = vadd.f32 %v2991, %v3142
      %v3159 = vadd.f32 %v2992, %v3143
      %v3160 = vadd.f32 %v2993, %v3144
      %v3161 = vadd.f32 %v2994, %v3145
      %v3162 = vadd.f32 %v2995, %v3146
      %v3163 = vadd.f32 %v2996, %v3147
      %v3164 = vadd.f32 %v2997, %v3148
      %v3165 = vadd.f32 %v2998, %v3149
      %v3166 = vadd.f32 %v2999, %v3150
      %vm3167 = vcmp.eq.s32.totalorder %v2417, 2
      %vm3168 = vcmp.eq.s32.totalorder %v2418, 2
      %v3169 = vsel %vm3167, 1, 0
      %v3170 = vsel %vm3168, 1, 0
      %v3171 = vcvt.s32.f32 %v3169
      %v3172 = vcvt.s32.f32 %v3170
      %3173 = vmatpush.msra.mxu0 0.0
      %3174 = vmatpush.msra.mxu0 0.0
      %3175 = vmatpush.msra.mxu0 0.0
      %3176 = vmatpush.msra.mxu0 0.0
      %3177 = vmatpush.msra.mxu0 0.0
      %3178 = vmatpush.msra.mxu0 0.0
      %3179 = vmatpush.msra.mxu0 0.0
      %3180 = vmatpush.msra.mxu0 0.0
      %3181 = vmatpush.msra.mxu0 0.0
      %3182 = vmatpush.msra.mxu0 0.0
      %3183 = vmatpush.msra.mxu0 0.0
      %3184 = vmatpush.msra.mxu0 0.0
      %3185 = vmatpush.msra.mxu0 0.0
      %3186 = vmatpush.msra.mxu0 0.0
      %3187 = vmatpush.msra.mxu0 %v3172
      %3188 = vmatpush.msra.mxu0 %v3171
      %3189 = vmatmul.f32.gmra.mxu0 %v2426
      %v3190 = vpop.f32.mrf.mxu0
      %v3191 = vadd.f32 0.0, %v3190
      %3192 = vmatmul.f32.gmra.mxu0 %v2429
      %v3193 = vpop.f32.mrf.mxu0
      %v3194 = vadd.f32 0.0, %v3193
      %3195 = vmatmul.f32.gmra.mxu0 %v2432
      %v3196 = vpop.f32.mrf.mxu0
      %v3197 = vadd.f32 0.0, %v3196
      %3198 = vmatmul.f32.gmra.mxu0 %v2435
      %v3199 = vpop.f32.mrf.mxu0
      %v3200 = vadd.f32 0.0, %v3199
      %3201 = vmatmul.f32.gmra.mxu0 %v2438
      %v3202 = vpop.f32.mrf.mxu0
      %v3203 = vadd.f32 0.0, %v3202
      %3204 = vmatmul.f32.gmra.mxu0 %v2441
      %v3205 = vpop.f32.mrf.mxu0
      %v3206 = vadd.f32 0.0, %v3205
      %3207 = vmatmul.f32.gmra.mxu0 %v2444
      %v3208 = vpop.f32.mrf.mxu0
      %v3209 = vadd.f32 0.0, %v3208
      %3210 = vmatmul.f32.gmra.mxu0 %v2447
      %v3211 = vpop.f32.mrf.mxu0
      %v3212 = vadd.f32 0.0, %v3211
      %3213 = vmatmul.f32.gmra.mxu0 %v2450
      %v3214 = vpop.f32.mrf.mxu0
      %v3215 = vadd.f32 0.0, %v3214
      %3216 = vmatmul.f32.gmra.mxu0 %v2453
      %v3217 = vpop.f32.mrf.mxu0
      %v3218 = vadd.f32 0.0, %v3217
      %3219 = vmatmul.f32.gmra.mxu0 %v2456
      %v3220 = vpop.f32.mrf.mxu0
      %v3221 = vadd.f32 0.0, %v3220
      %3222 = vmatmul.f32.gmra.mxu0 %v2459
      %v3223 = vpop.f32.mrf.mxu0
      %v3224 = vadd.f32 0.0, %v3223
      %3225 = vmatmul.f32.gmra.mxu0 %v2462
      %v3226 = vpop.f32.mrf.mxu0
      %v3227 = vadd.f32 0.0, %v3226
      %3228 = vmatmul.f32.gmra.mxu0 %v2465
      %v3229 = vpop.f32.mrf.mxu0
      %v3230 = vadd.f32 0.0, %v3229
      %3231 = vmatmul.f32.gmra.mxu0 %v2468
      %v3232 = vpop.f32.mrf.mxu0
      %v3233 = vadd.f32 0.0, %v3232
      %3234 = vmatmul.f32.gmra.mxu0 %v2471
      %v3235 = vpop.f32.mrf.mxu0
      %v3236 = vadd.f32 0.0, %v3235
      %3237 = vdwg.mxu0
      %3238 = vset.pattern.permute.xlu0 4
      %3239 = vperm.xlu0 %3238, %v2538
      %v3240 = vpop.permute.xlu0 %3239
      %3242 = vset.pattern.permute.xlu0 4
      %3243 = vperm.xlu0 %3242, %v2539
      %v3244 = vpop.permute.xlu0 %3243
      %3246 = vset.pattern.permute.xlu0 4
      %3247 = vperm.xlu0 %3246, %v2540
      %v3248 = vpop.permute.xlu0 %3247
      %3250 = vset.pattern.permute.xlu0 4
      %3251 = vperm.xlu0 %3250, %v2541
      %v3252 = vpop.permute.xlu0 %3251
      %3254 = vset.pattern.permute.xlu0 4
      %3255 = vperm.xlu0 %3254, %v2542
      %v3256 = vpop.permute.xlu0 %3255
      %3258 = vset.pattern.permute.xlu0 4
      %3259 = vperm.xlu0 %3258, %v2543
      %v3260 = vpop.permute.xlu0 %3259
      %3262 = vset.pattern.permute.xlu0 4
      %3263 = vperm.xlu0 %3262, %v2544
      %v3264 = vpop.permute.xlu0 %3263
      %3266 = vset.pattern.permute.xlu0 4
      %3267 = vperm.xlu0 %3266, %v2545
      %v3268 = vpop.permute.xlu0 %3267
      %3270 = vset.pattern.permute.xlu0 4
      %3271 = vperm.xlu0 %3270, %v2546
      %v3272 = vpop.permute.xlu0 %3271
      %3274 = vset.pattern.permute.xlu0 4
      %3275 = vperm.xlu0 %3274, %v2547
      %v3276 = vpop.permute.xlu0 %3275
      %3278 = vset.pattern.permute.xlu0 4
      %3279 = vperm.xlu0 %3278, %v2548
      %v3280 = vpop.permute.xlu0 %3279
      %3282 = vset.pattern.permute.xlu0 4
      %3283 = vperm.xlu0 %3282, %v2549
      %v3284 = vpop.permute.xlu0 %3283
      %3286 = vset.pattern.permute.xlu0 4
      %3287 = vperm.xlu0 %3286, %v2550
      %v3288 = vpop.permute.xlu0 %3287
      %3290 = vset.pattern.permute.xlu0 4
      %3291 = vperm.xlu0 %3290, %v2551
      %v3292 = vpop.permute.xlu0 %3291
      %3294 = vset.pattern.permute.xlu0 4
      %3295 = vperm.xlu0 %3294, %v2552
      %v3296 = vpop.permute.xlu0 %3295
      %3298 = vset.pattern.permute.xlu0 4
      %3299 = vperm.xlu0 %3298, %v2553
      %v3300 = vpop.permute.xlu0 %3299
      %v3302 = vmul.f32 %v3191, %v3240
      %v3303 = vmul.f32 %v3194, %v3244
      %v3304 = vmul.f32 %v3197, %v3248
      %v3305 = vmul.f32 %v3200, %v3252
      %v3306 = vmul.f32 %v3203, %v3256
      %v3307 = vmul.f32 %v3206, %v3260
      %v3308 = vmul.f32 %v3209, %v3264
      %v3309 = vmul.f32 %v3212, %v3268
      %v3310 = vmul.f32 %v3215, %v3272
      %v3311 = vmul.f32 %v3218, %v3276
      %v3312 = vmul.f32 %v3221, %v3280
      %v3313 = vmul.f32 %v3224, %v3284
      %v3314 = vmul.f32 %v3227, %v3288
      %v3315 = vmul.f32 %v3230, %v3292
      %v3316 = vmul.f32 %v3233, %v3296
      %v3317 = vmul.f32 %v3236, %v3300
      %v3318 = vadd.f32 %v3151, %v3302
      %v3319 = vadd.f32 %v3152, %v3303
      %v3320 = vadd.f32 %v3153, %v3304
      %v3321 = vadd.f32 %v3154, %v3305
      %v3322 = vadd.f32 %v3155, %v3306
      %v3323 = vadd.f32 %v3156, %v3307
      %v3324 = vadd.f32 %v3157, %v3308
      %v3325 = vadd.f32 %v3158, %v3309
      %v3326 = vadd.f32 %v3159, %v3310
      %v3327 = vadd.f32 %v3160, %v3311
      %v3328 = vadd.f32 %v3161, %v3312
      %v3329 = vadd.f32 %v3162, %v3313
      %v3330 = vadd.f32 %v3163, %v3314
      %v3331 = vadd.f32 %v3164, %v3315
      %v3332 = vadd.f32 %v3165, %v3316
      %v3333 = vadd.f32 %v3166, %v3317
      %v3334 = vld [vmem:[%s12] sm:$0xff]
      %v3335 = vld [vmem:[%s12 + $0x8] sm:$0xff]
      %v3336 = vld [vmem:[%s12 + $0x10] sm:$0xff]
      %v3337 = vld [vmem:[%s12 + $0x18] sm:$0xff]
      %v3338 = vld [vmem:[%s12 + $0x20] sm:$0xff]
      %v3339 = vld [vmem:[%s12 + $0x28] sm:$0xff]
      %v3340 = vld [vmem:[%s12 + $0x30] sm:$0xff]
      %v3341 = vld [vmem:[%s12 + $0x38] sm:$0xff]
      %v3342 = vld [vmem:[%s12 + $0x40] sm:$0xff]
      %v3343 = vld [vmem:[%s12 + $0x48] sm:$0xff]
      %v3344 = vld [vmem:[%s12 + $0x50] sm:$0xff]
      %v3345 = vld [vmem:[%s12 + $0x58] sm:$0xff]
      %v3346 = vld [vmem:[%s12 + $0x60] sm:$0xff]
      %v3347 = vld [vmem:[%s12 + $0x68] sm:$0xff]
      %v3348 = vld [vmem:[%s12 + $0x70] sm:$0xff]
      %v3349 = vld [vmem:[%s12 + $0x78] sm:$0xff]
      %3351 = vset.pattern.permute.xlu0 0
      %3352 = vperm.xlu0 %3351, %v3334
      %v3353 = vpop.permute.xlu0 %3352
      %3356 = vset.pattern.permute.xlu0 0
      %3357 = vperm.xlu0 %3356, %v3335
      %v3358 = vpop.permute.xlu0 %3357
      %3361 = vset.pattern.permute.xlu0 0
      %3362 = vperm.xlu0 %3361, %v3336
      %v3363 = vpop.permute.xlu0 %3362
      %3366 = vset.pattern.permute.xlu0 0
      %3367 = vperm.xlu0 %3366, %v3337
      %v3368 = vpop.permute.xlu0 %3367
      %3371 = vset.pattern.permute.xlu0 0
      %3372 = vperm.xlu0 %3371, %v3338
      %v3373 = vpop.permute.xlu0 %3372
      %3376 = vset.pattern.permute.xlu0 0
      %3377 = vperm.xlu0 %3376, %v3339
      %v3378 = vpop.permute.xlu0 %3377
      %3381 = vset.pattern.permute.xlu0 0
      %3382 = vperm.xlu0 %3381, %v3340
      %v3383 = vpop.permute.xlu0 %3382
      %3386 = vset.pattern.permute.xlu0 0
      %3387 = vperm.xlu0 %3386, %v3341
      %v3388 = vpop.permute.xlu0 %3387
      %3391 = vset.pattern.permute.xlu0 0
      %3392 = vperm.xlu0 %3391, %v3342
      %v3393 = vpop.permute.xlu0 %3392
      %3396 = vset.pattern.permute.xlu0 0
      %3397 = vperm.xlu0 %3396, %v3343
      %v3398 = vpop.permute.xlu0 %3397
      %3401 = vset.pattern.permute.xlu0 0
      %3402 = vperm.xlu0 %3401, %v3344
      %v3403 = vpop.permute.xlu0 %3402
      %3406 = vset.pattern.permute.xlu0 0
      %3407 = vperm.xlu0 %3406, %v3345
      %v3408 = vpop.permute.xlu0 %3407
      %3411 = vset.pattern.permute.xlu0 0
      %3412 = vperm.xlu0 %3411, %v3346
      %v3413 = vpop.permute.xlu0 %3412
      %3416 = vset.pattern.permute.xlu0 0
      %3417 = vperm.xlu0 %3416, %v3347
      %v3418 = vpop.permute.xlu0 %3417
      %3421 = vset.pattern.permute.xlu0 0
      %3422 = vperm.xlu0 %3421, %v3348
      %v3423 = vpop.permute.xlu0 %3422
      %3426 = vset.pattern.permute.xlu0 0
      %3427 = vperm.xlu0 %3426, %v3349
      %v3428 = vpop.permute.xlu0 %3427
      %v3430 = vadd.f32 %v3318, %v3353
      %v3431 = vadd.f32 %v3319, %v3358
      %v3432 = vadd.f32 %v3320, %v3363
      %v3433 = vadd.f32 %v3321, %v3368
      %v3434 = vadd.f32 %v3322, %v3373
      %v3435 = vadd.f32 %v3323, %v3378
      %v3436 = vadd.f32 %v3324, %v3383
      %v3437 = vadd.f32 %v3325, %v3388
      %v3438 = vadd.f32 %v3326, %v3393
      %v3439 = vadd.f32 %v3327, %v3398
      %v3440 = vadd.f32 %v3328, %v3403
      %v3441 = vadd.f32 %v3329, %v3408
      %v3442 = vadd.f32 %v3330, %v3413
      %v3443 = vadd.f32 %v3331, %v3418
      %v3444 = vadd.f32 %v3332, %v3423
      %v3445 = vadd.f32 %v3333, %v3428
      %v3446 = vmax.f32 %v3430, 0.0
      %v3447 = vmax.f32 %v3431, 0.0
      %v3448 = vmax.f32 %v3432, 0.0
      %v3449 = vmax.f32 %v3433, 0.0
      %v3450 = vmax.f32 %v3434, 0.0
      %v3451 = vmax.f32 %v3435, 0.0
      %v3452 = vmax.f32 %v3436, 0.0
      %v3453 = vmax.f32 %v3437, 0.0
      %v3454 = vmax.f32 %v3438, 0.0
      %v3455 = vmax.f32 %v3439, 0.0
      %v3456 = vmax.f32 %v3440, 0.0
      %v3457 = vmax.f32 %v3441, 0.0
      %v3458 = vmax.f32 %v3442, 0.0
      %v3459 = vmax.f32 %v3443, 0.0
      %v3460 = vmax.f32 %v3444, 0.0
      %v3461 = vmax.f32 %v3445, 0.0
      %v3462 = vld [vmem:[%s13] sm:$0xf]
      %v3463 = vld [vmem:[%s13 + $0x4] sm:$0xf]
      %v3464 = vld [vmem:[%s13 + $0x8] sm:$0xf]
      %v3465 = vld [vmem:[%s13 + $0xc] sm:$0xf]
      %v3466 = vld [vmem:[%s13 + $0x10] sm:$0xf]
      %v3467 = vld [vmem:[%s13 + $0x14] sm:$0xf]
      %v3468 = vld [vmem:[%s13 + $0x18] sm:$0xf]
      %v3469 = vld [vmem:[%s13 + $0x1c] sm:$0xf]
      %v3470 = vpack.c.bf16 %v3447, %v3446
      %v3471 = vpack.c.bf16 %v3449, %v3448
      %v3472 = vpack.c.bf16 %v3451, %v3450
      %v3473 = vpack.c.bf16 %v3453, %v3452
      %v3474 = vpack.c.bf16 %v3455, %v3454
      %v3475 = vpack.c.bf16 %v3457, %v3456
      %v3476 = vpack.c.bf16 %v3459, %v3458
      %v3477 = vpack.c.bf16 %v3461, %v3460
      %v3486 = vunpack.c.l.b16 %v3462
      %v3487 = vunpack.c.l.b16 %v3463
      %v3488 = vunpack.c.l.b16 %v3464
      %v3489 = vunpack.c.l.b16 %v3465
      %v3490 = vunpack.c.l.b16 %v3466
      %v3491 = vunpack.c.l.b16 %v3467
      %v3492 = vunpack.c.l.b16 %v3468
      %v3493 = vunpack.c.l.b16 %v3469
      %v3494 = vpack.c.b16 %v3487, %v3486
      %v3495 = vpack.c.b16 %v3489, %v3488
      %v3496 = vpack.c.b16 %v3491, %v3490
      %v3497 = vpack.c.b16 %v3493, %v3492
      %3502 = vmatpush.bf16.msra.mxu0 %v3477
      %3503 = vmatpush.bf16.msra.mxu0 %v3476
      %3504 = vmatpush.bf16.msra.mxu0 %v3475
      %3505 = vmatpush.bf16.msra.mxu0 %v3474
      %3506 = vmatpush.bf16.msra.mxu0 %v3473
      %3507 = vmatpush.bf16.msra.mxu0 %v3472
      %3508 = vmatpush.bf16.msra.mxu0 %v3471
      %3509 = vmatpush.bf16.msra.mxu0 %v3470
      %3510 = vmatmul.bf16.gmra.mxu0 %v3494
      %v3511 = vpop.f32.mrf.mxu0
      %v3512 = vadd.f32 %v2255, %v3511
      %v3513 = vpop.f32.mrf.mxu0
      %v3514 = vadd.f32 %v2256, %v3513
      %3515 = vmatmul.bf16.gmra.mxu0 %v3495
      %v3516 = vpop.f32.mrf.mxu0
      %v3517 = vadd.f32 %v2257, %v3516
      %v3518 = vpop.f32.mrf.mxu0
      %v3519 = vadd.f32 %v2258, %v3518
      %3520 = vmatmul.bf16.gmra.mxu0 %v3496
      %v3521 = vpop.f32.mrf.mxu0
      %v3522 = vadd.f32 %v2259, %v3521
      %v3523 = vpop.f32.mrf.mxu0
      %v3524 = vadd.f32 %v2260, %v3523
      %3525 = vmatmul.bf16.gmra.mxu0 %v3497
      %v3526 = vpop.f32.mrf.mxu0
      %v3527 = vadd.f32 %v2261, %v3526
      %v3528 = vpop.f32.mrf.mxu0
      %v3529 = vadd.f32 %v2262, %v3528
      %3530 = vdwg.mxu0
      %3531 = vst.msk [vmem:[%s467] sm:$0xff] %vm477, %v3512
      %3532 = vst.msk [vmem:[%s467 + $0x8] sm:$0xff] %vm477, %v3514
      %3533 = vst.msk [vmem:[%s467 + $0x10] sm:$0xff] %vm477, %v3517
      %3534 = vst.msk [vmem:[%s467 + $0x18] sm:$0xff] %vm477, %v3519
      %3535 = vst.msk [vmem:[%s467 + $0x20] sm:$0xff] %vm477, %v3522
      %3536 = vst.msk [vmem:[%s467 + $0x28] sm:$0xff] %vm477, %v3524
      %3537 = vst.msk [vmem:[%s467 + $0x30] sm:$0xff] %vm477, %v3527
      %3538 = vst.msk [vmem:[%s467 + $0x38] sm:$0xff] %vm477, %v3529
      %p3539 = scmp.lt.s32.totalorder %s25, 1
      %s3540 = scalar_select %p3539, %s25, 1
      %s3541 = smul.addr %s3540, 8
      %s3542 = smul.addr %s3541, 8
      %s3543 = scalar_lea.vmem %s14, %s3542
      // Predicated region
      $region77: #{tpu_custom_call.1} parent=75 // pred_check
        %p3544 = pneg %p342
      $region78: #{tpu_custom_call.1} parent=75 // pred_check_branch
        %3546 = sbr.rel (%p3544) target = $region80
      $region79: #{tpu_custom_call.1} parent=75 // pred_region
        _
      $region80: #{tpu_custom_call.1} parent=75 // pred_fallthru
        _
    $region76: #{tpu_custom_call.1} parent=5 // pred_fallthru
      _
    %p3547 = scmp.le.s32.totalorder 2, %s20
    // Predicated region
    $region81: #{tpu_custom_call.1} parent=5 // pred_check
      %p3548 = pneg %p3547
    $region82: #{tpu_custom_call.1} parent=5 // pred_check_branch
      %3550 = sbr.rel (%p3548) target = $region84
    $region83: #{tpu_custom_call.1} parent=5 // pred_region
      %s3551 = ssub.s32 %s20, 2
      // Predicated region
      $region85: #{tpu_custom_call.1} parent=83 // pred_check
        %p3552 = pneg %p348
      $region86: #{tpu_custom_call.1} parent=83 // pred_check_branch
        %3554 = sbr.rel (%p3552) target = $region88
      $region87: #{tpu_custom_call.1} parent=83 // pred_region
        %p3555 = scmp.lt.s32.totalorder %s26, 1
        %s3556 = scalar_select %p3555, %s26, 1
        %s3557 = smul.addr %s3556, 8
        %s3558 = smul.addr %s3557, 8
        %s3559 = scalar_lea.vmem %s14, %s3558
      $region88: #{tpu_custom_call.1} parent=83 // pred_fallthru
        _
    $region84: #{tpu_custom_call.1} parent=5 // pred_fallthru
      _
  $region6: #{tpu_custom_call.1} parent=0 // loop_footer
    %s24 = sadd.s32 1, %s20
  $region7: #{tpu_custom_call.1} parent=0 // loop_footer_branch
    %19 = sbr.rel target = $region3
  $region8: #{tpu_custom_call.1} parent=0 // loop_exit
    _

</llo_original>
